<compile_context>
chip_gen: v7x
topology: tpu7x:2x2x1
jax: 0.10.0
libtpu: 0.0.40
codegen_flags: <defaults>
</compile_context>

<pallas_src>
import functools

import jax
import jax.numpy as jnp
from jax.experimental import pallas as pl
from jax.experimental.pallas import tpu as pltpu


# ----------------------------------------------------------------------------
# Generation-aware VMEM budgeting
# ----------------------------------------------------------------------------
def _vmem_capacity_bytes():
    try:
        return int(pltpu.get_tpu_info().vmem_capacity_bytes)
    except Exception:
        return 64 << 20  # conservative fallback (v7x per-TensorCore VMEM)


_VMEM_CAP = _vmem_capacity_bytes()
# Scoped-VMEM limit requested for every kernel: raises v5e's 16 MiB default,
# matches the 32 MiB default on v6e/v7x, never above half of physical VMEM.
_VMEM_LIMIT = min(32 << 20, _VMEM_CAP // 2)
# Per-block budgets (single-buffered).  BlockSpec double-buffers, so these are
# kept well under _VMEM_LIMIT / 2.
_WEIGHT_TILE_BUDGET = max(2 << 20, min(4 << 20, _VMEM_CAP // 16))
_ATTN_BLOCK_BUDGET = max(2 << 20, min(6 << 20, _VMEM_CAP // 16))

_COMPILER_PARAMS_1D = pltpu.CompilerParams(
    dimension_semantics=("parallel",), vmem_limit_bytes=_VMEM_LIMIT)
_COMPILER_PARAMS_2D = pltpu.CompilerParams(
    dimension_semantics=("parallel", "parallel"), vmem_limit_bytes=_VMEM_LIMIT)


# ----------------------------------------------------------------------------
# In-kernel math helpers
# ----------------------------------------------------------------------------
def _gelu(x):
    # tanh-form GELU: tanh lowers to the EUP (free VLIW slot).
    # TODO(synk): torch.nn.GELU() default is the exact erf form; the tanh
    # approximation differs by up to ~1e-3 in absolute value.
    c = 0.7978845608028654  # sqrt(2/pi)
    return 0.5 * x * (1.0 + jnp.tanh(c * (x + 0.044715 * x * x * x)))


def _layernorm(x, gamma, beta, eps):
    mu = jnp.mean(x, axis=-1, keepdims=True)
    var = jnp.mean((x - mu) * (x - mu), axis=-1, keepdims=True)
    return (x - mu) * jax.lax.rsqrt(var + eps) * gamma + beta


# ----------------------------------------------------------------------------
# Tiling helpers
# ----------------------------------------------------------------------------
def _row_tile(M, max_rows=256):
    """Largest multiple-of-8 row tile that divides M, capped so the grid has
    at least 2 steps when M allows it (v7x has 2 TensorCores)."""
    if M % 8 != 0:
        return M  # full-extent block (legal because it equals the array dim)
    cap = min(M, max_rows)
    if M % 16 == 0:
        cap = min(cap, M // 2)
    cap -= cap % 8
    t = max(cap, 8)
    while M % t != 0:
        t -= 8
    return t


def _col_tile(K, Np, max_weight_bytes=_WEIGHT_TILE_BUDGET):
    """Largest multiple-of-128 column tile dividing Np whose bf16 (K, tn)
    weight block fits the budget; falls back to the smallest such divisor."""
    if Np % 128 != 0:
        return Np
    tn = Np
    fallback = Np
    while tn >= 128:
        if Np % tn == 0:
            fallback = tn
            if K * tn * 2 <= max_weight_bytes:
                return tn
        tn -= 128
    return fallback


def _batch_group(B, S, H, budget_bytes=_ATTN_BLOCK_BUDGET):
    """Batches per attention grid step: fits the f32 working set in budget and
    keeps >= 2 grid steps when B >= 2 (v7x megacore)."""
    per_batch = 4 * (4 * S * H + 4 * S * S)
    g = max(1, min(B, budget_bytes // max(per_batch, 1)))
    if B >= 2:
        g = min(g, max(B // 2, 1))
    while B % g:
        g -= 1
    return g


# ----------------------------------------------------------------------------
# Pallas kernels
# ----------------------------------------------------------------------------
def _linear_kernel(x_ref, w_ref, b_ref, o_ref, *, activation):
    y = jnp.dot(x_ref[...].astype(jnp.bfloat16), w_ref[...],
                preferred_element_type=jnp.float32)
    y = y + b_ref[...]
    if activation == "gelu":
        y = _gelu(y)
    o_ref[...] = y


def pallas_linear(x, w, b, activation=None, keep_pad=False):
    """y = act(x @ w + b).  x: [M, K] f32, w: [K, N] bf16, b: [N] f32.

    N is zero-padded to a multiple of 128 so stores are lane-dense; with
    keep_pad=True the padded slab is returned (consumer slices in-kernel)."""
    M, K = x.shape
    N = w.shape[1]
    n_pad = (-N) % 128
    if n_pad:
        w = jnp.pad(w, ((0, 0), (0, n_pad)))
        b = jnp.pad(b, ((0, n_pad),))
    Np = N + n_pad
    tm = _row_tile(M)
    tn = _col_tile(K, Np)
    out = pl.pallas_call(
        functools.partial(_linear_kernel, activation=activation),
        out_shape=jax.ShapeDtypeStruct((M, Np), jnp.float32),
        grid=(M // tm, Np // tn),
        in_specs=[
            pl.BlockSpec((tm, K), lambda i, j: (i, 0)),
            pl.BlockSpec((K, tn), lambda i, j: (0, j)),
            pl.BlockSpec((1, tn), lambda i, j: (0, j)),
        ],
        out_specs=pl.BlockSpec((tm, tn), lambda i, j: (i, j)),
        compiler_params=_COMPILER_PARAMS_2D,
    )(x, w, b.reshape(1, Np))
    if keep_pad or not n_pad:
        return out
    return out[:, :N]


def _linear_residual_ln_kernel(x_ref, w_ref, b_ref, res_ref, g_ref, beta_ref,
                               o_ref, *, eps):
    y = jnp.dot(x_ref[...].astype(jnp.bfloat16), w_ref[...],
                preferred_element_type=jnp.float32)
    y = y + b_ref[...] + res_ref[...]
    o_ref[...] = _layernorm(y, g_ref[...], beta_ref[...], eps)


def pallas_linear_residual_ln(x, w, b, res, gamma, beta, eps=1e-12):
    """LayerNorm((x @ w + b) + res).  N is kept whole (LN needs full rows)."""
    M, K = x.shape
    N = w.shape[1]
    tm = _row_tile(M)
    return pl.pallas_call(
        functools.partial(_linear_residual_ln_kernel, eps=eps),
        out_shape=jax.ShapeDtypeStruct((M, N), jnp.float32),
        grid=(M // tm,),
        in_specs=[
            pl.BlockSpec((tm, K), lambda i: (i, 0)),
            pl.BlockSpec((K, N), lambda i: (0, 0)),
            pl.BlockSpec((1, N), lambda i: (0, 0)),
            pl.BlockSpec((tm, N), lambda i: (i, 0)),
            pl.BlockSpec((1, N), lambda i: (0, 0)),
            pl.BlockSpec((1, N), lambda i: (0, 0)),
        ],
        out_specs=pl.BlockSpec((tm, N), lambda i: (i, 0)),
        compiler_params=_COMPILER_PARAMS_1D,
    )(x, w, b.reshape(1, N), res, gamma.reshape(1, N), beta.reshape(1, N))


def _layernorm_kernel(x_ref, g_ref, b_ref, o_ref, *, eps):
    o_ref[...] = _layernorm(x_ref[...], g_ref[...], b_ref[...], eps)


def pallas_layernorm(x, gamma, beta, eps=1e-12):
    """LayerNorm over the last axis (embedding LN)."""
    M, H = x.shape
    tm = _row_tile(M)
    return pl.pallas_call(
        functools.partial(_layernorm_kernel, eps=eps),
        out_shape=jax.ShapeDtypeStruct((M, H), jnp.float32),
        grid=(M // tm,),
        in_specs=[
            pl.BlockSpec((tm, H), lambda i: (i, 0)),
            pl.BlockSpec((1, H), lambda i: (0, 0)),
            pl.BlockSpec((1, H), lambda i: (0, 0)),
        ],
        out_specs=pl.BlockSpec((tm, H), lambda i: (i, 0)),
        compiler_params=_COMPILER_PARAMS_1D,
    )(x, gamma.reshape(1, H), beta.reshape(1, H))


def _attention_kernel(qkv_ref, o_ref, *, heads, dh, scale):
    # qkv_ref: (Bg, S, 3Hp) fused Q|K|V slab (possibly lane-padded past 3H).
    qkv = qkv_ref[...]
    H = heads * dh
    outs = []
    for h in range(heads):  # static unroll over heads; stays on-chip
        q = (qkv[:, :, h * dh:(h + 1) * dh] * scale).astype(jnp.bfloat16)
        k = qkv[:, :, H + h * dh:H + (h + 1) * dh].astype(jnp.bfloat16)
        v = qkv[:, :, 2 * H + h * dh:2 * H + (h + 1) * dh].astype(jnp.bfloat16)
        s = jnp.einsum("bqd,bkd->bqk", q, k,
                       preferred_element_type=jnp.float32)
        s = s - jnp.max(s, axis=-1, keepdims=True)
        p = jnp.exp(s)
        p = p * pl.reciprocal(jnp.sum(p, axis=-1, keepdims=True), approx=True)
        outs.append(jnp.einsum("bqk,bkd->bqd", p.astype(jnp.bfloat16), v,
                               preferred_element_type=jnp.float32))
    o_ref[...] = jnp.concatenate(outs, axis=-1)  # lane-dense (Bg, S, H) store


def pallas_attention(qkv_pad, B, S, hidden, heads):
    """Multi-head self-attention from the fused QKV slab.
    qkv_pad: [B*S, 3Hp] (padded allowed) -> context [B*S, hidden].
    Head split/merge happens inside the kernel (no XLA transposes)."""
    # TODO(synk): no attention mask is applied (reference call passes only x).
    threeHp = qkv_pad.shape[1]
    dh = hidden // heads
    scale = 1.0 / (dh ** 0.5)
    qkv3 = qkv_pad.reshape(B, S, threeHp)
    g = _batch_group(B, S, hidden)
    ctx = pl.pallas_call(
        functools.partial(_attention_kernel, heads=heads, dh=dh, scale=scale),
        out_shape=jax.ShapeDtypeStruct((B, S, hidden), jnp.float32),
        grid=(B // g,),
        in_specs=[pl.BlockSpec((g, S, threeHp), lambda i: (i, 0, 0))],
        out_specs=pl.BlockSpec((g, S, hidden), lambda i: (i, 0, 0)),
        compiler_params=_COMPILER_PARAMS_1D,
    )(qkv3)
    return ctx.reshape(B * S, hidden)


def _gelu_ln_linear_kernel(x_ref, g_ref, beta_ref, w_ref, b_ref, o_ref, *, eps):
    x = _gelu(x_ref[...])
    x = _layernorm(x, g_ref[...], beta_ref[...], eps)
    y = jnp.dot(x.astype(jnp.bfloat16), w_ref[...],
                preferred_element_type=jnp.float32)
    o_ref[...] = y + b_ref[...]


def pallas_cls_head(x, gamma, beta, w, b, eps=1e-12):
    """Classification head: GELU -> LayerNorm -> Linear, fused in one kernel.
    (Dropout is identity at inference.)"""
    M, H = x.shape
    N = w.shape[1]
    n_pad = (-N) % 128
    if n_pad:
        w = jnp.pad(w, ((0, 0), (0, n_pad)))
        b = jnp.pad(b, ((0, n_pad),))
    Np = N + n_pad
    tm = _row_tile(M)
    out = pl.pallas_call(
        functools.partial(_gelu_ln_linear_kernel, eps=eps),
        out_shape=jax.ShapeDtypeStruct((M, Np), jnp.float32),
        grid=(M // tm,),
        in_specs=[
            pl.BlockSpec((tm, H), lambda i: (i, 0)),
            pl.BlockSpec((1, H), lambda i: (0, 0)),
            pl.BlockSpec((1, H), lambda i: (0, 0)),
            pl.BlockSpec((H, Np), lambda i: (0, 0)),
            pl.BlockSpec((1, Np), lambda i: (0, 0)),
        ],
        out_specs=pl.BlockSpec((tm, Np), lambda i: (i, 0)),
        compiler_params=_COMPILER_PARAMS_1D,
    )(x, gamma.reshape(1, H), beta.reshape(1, H), w, b.reshape(1, Np))
    return out[:, :N] if n_pad else out


# ----------------------------------------------------------------------------
# Parameter construction (deterministic synthetic init, BERT-style N(0, 0.02)).
# Dense matmul weights are stored in bf16 (f32 accumulation in-kernel);
# biases / LayerNorm / embeddings stay f32.
# ----------------------------------------------------------------------------
def init_params(key, vocab, hidden, num_layers, max_pos):
    std = 0.02
    keys = iter(jax.random.split(key, 128))

    def dense(fan_in, fan_out):
        w = (jax.random.normal(next(keys), (fan_in, fan_out), jnp.float32)
             * std).astype(jnp.bfloat16)
        b = jnp.zeros((fan_out,), jnp.float32)
        return (w, b)

    def ln(h):
        return (jnp.ones((h,), jnp.float32), jnp.zeros((h,), jnp.float32))

    params = {
        "word_emb": jax.random.normal(next(keys), (vocab, hidden), jnp.float32) * std,
        "pos_emb": jax.random.normal(next(keys), (max_pos, hidden), jnp.float32) * std,
        "type_emb": jax.random.normal(next(keys), (2, hidden), jnp.float32) * std,
        "emb_ln": ln(hidden),
        "layers": [],
        "cls_ln": ln(hidden),
        "cls_dense": dense(hidden, vocab),
    }
    for _ in range(num_layers):
        params["layers"].append({
            "qkv": dense(hidden, 3 * hidden),      # fused Q|K|V projection
            "attn_out": dense(hidden, hidden),
            "attn_ln": ln(hidden),
            "inter": dense(hidden, 4 * hidden),
            "out": dense(4 * hidden, hidden),
            "out_ln": ln(hidden),
        })
    return params


# ----------------------------------------------------------------------------
# Forward pass (BertModel encoder + ClassificationHead)
# ----------------------------------------------------------------------------
def gene_classification_forward(params, x, *, hidden, heads):
    B, S = x.shape

    # --- BertEmbeddings: gathers are XLA glue, LayerNorm is a Pallas kernel --
    # TODO(synk): token_type ids hard-coded to 0 and positions to 0..S-1,
    # matching the reference call signature forward(x).
    emb = (params["word_emb"][x]
           + params["pos_emb"][:S][None, :, :]
           + params["type_emb"][0][None, None, :])
    h = emb.reshape(B * S, hidden).astype(jnp.float32)
    h = pallas_layernorm(h, *params["emb_ln"])            # dropout = identity

    # --- BertEncoder layers ---------------------------------------------------
    for lyr in params["layers"]:
        # fused [M, 3H] QKV projection; padded slab consumed directly below
        qkv = pallas_linear(h, *lyr["qkv"], keep_pad=True)
        # multi-head attention, head split/merge inside the kernel
        ctx = pallas_attention(qkv, B, S, hidden, heads)
        # attn-out projection + residual + LayerNorm, fused
        h_attn = pallas_linear_residual_ln(ctx, *lyr["attn_out"], h,
                                           *lyr["attn_ln"])
        # intermediate projection + GELU, fused
        inter = pallas_linear(h_attn, *lyr["inter"], activation="gelu")
        # FFN-out projection + residual + LayerNorm, fused
        h = pallas_linear_residual_ln(inter, *lyr["out"], h_attn,
                                      *lyr["out_ln"])

    # --- ClassificationHead: GELU -> LN -> Dropout(identity) -> Linear, fused -
    logits = pallas_cls_head(h, *params["cls_ln"], *params["cls_dense"])
    return jnp.squeeze(logits.reshape(B, S, -1))           # matches .squeeze()


# ----------------------------------------------------------------------------
if __name__ == "__main__":
    # Small, forward-consistent configuration.
    mask_id = 20                  # -> vocab / num classes = mask_id + 1 = 21
    model_hidden_size = 32
    model_hidden_layers = 2
    model_attention_heads = 4
    num_genes = 16                # max_position_embeddings >= seq len
    B, S = 2, 8

    key = jax.random.PRNGKey(0)
    kp, kx = jax.random.split(key)
    params = init_params(kp, mask_id + 1, model_hidden_size,
                         model_hidden_layers, num_genes)
    x = jax.random.randint(kx, (B, S), 0, mask_id + 1, dtype=jnp.int32)

    fwd = jax.jit(functools.partial(gene_classification_forward,
                                    hidden=model_hidden_size,
                                    heads=model_attention_heads))
    out = fwd(params, x)
    jax.block_until_ready(out)
    assert out.shape == (B, S, mask_id + 1)
    print("KERNEL_OK")
</pallas_src>

<mosaic_0001>
module attributes {stable_mosaic.version = 11 : i64} {
  func.func @_layernorm_kernel(%arg0: i32, %arg1: memref<8x32xf32, #tpu.memory_space<vmem>>, %arg2: memref<1x32xf32, #tpu.memory_space<vmem>>, %arg3: memref<1x32xf32, #tpu.memory_space<vmem>>, %arg4: memref<8x32xf32, #tpu.memory_space<vmem>>) attributes {dimension_semantics = [#tpu.dimension_semantics<parallel>], iteration_bounds = array<i64: 2>, scalar_prefetch = 0 : i64, scratch_operands = 0 : i64, tpu.core_type = #tpu.core_type<tc>, window_params = [{transform_indices = @transform_0, window_bounds = array<i64: 8, 32>}, {pipeline_mode = #tpu.pipeline_mode<synchronous>, transform_indices = @transform_1, window_bounds = array<i64: 1, 32>}, {pipeline_mode = #tpu.pipeline_mode<synchronous>, transform_indices = @transform_2, window_bounds = array<i64: 1, 32>}, {transform_indices = @transform_3, window_bounds = array<i64: 8, 32>}]} {
    %c0 = arith.constant 0 : index
    %c0_0 = arith.constant 0 : index
    %0 = vector.load %arg1[%c0, %c0_0] : memref<8x32xf32, #tpu.memory_space<vmem>>, vector<8x32xf32>
    %c0_1 = arith.constant 0 : index
    %c0_2 = arith.constant 0 : index
    %1 = vector.load %arg2[%c0_1, %c0_2] : memref<1x32xf32, #tpu.memory_space<vmem>>, vector<1x32xf32>
    %c0_3 = arith.constant 0 : index
    %c0_4 = arith.constant 0 : index
    %2 = vector.load %arg3[%c0_3, %c0_4] : memref<1x32xf32, #tpu.memory_space<vmem>>, vector<1x32xf32>
    %cst = arith.constant dense<0.000000e+00> : vector<8xf32>
    %3 = vector.multi_reduction <add>, %0, %cst [1] : vector<8x32xf32> to vector<8xf32>
    %4 = vector.shape_cast %3 : vector<8xf32> to vector<8x1xf32>
    %cst_5 = arith.constant 3.200000e+01 : f32
    %5 = vector.broadcast %cst_5 : f32 to vector<8x1xf32>
    %6 = arith.divf %4, %5 : vector<8x1xf32>
    %7 = vector.broadcast %6 : vector<8x1xf32> to vector<8x32xf32>
    %8 = arith.subf %0, %7 : vector<8x32xf32>
    %9 = vector.broadcast %6 : vector<8x1xf32> to vector<8x32xf32>
    %10 = arith.subf %0, %9 : vector<8x32xf32>
    %11 = arith.mulf %8, %10 : vector<8x32xf32>
    %cst_6 = arith.constant dense<0.000000e+00> : vector<8xf32>
    %12 = vector.multi_reduction <add>, %11, %cst_6 [1] : vector<8x32xf32> to vector<8xf32>
    %13 = vector.shape_cast %12 : vector<8xf32> to vector<8x1xf32>
    %cst_7 = arith.constant 3.200000e+01 : f32
    %14 = vector.broadcast %cst_7 : f32 to vector<8x1xf32>
    %15 = arith.divf %13, %14 : vector<8x1xf32>
    %16 = vector.broadcast %6 : vector<8x1xf32> to vector<8x32xf32>
    %17 = arith.subf %0, %16 : vector<8x32xf32>
    %cst_8 = arith.constant 9.99999996E-13 : f32
    %18 = vector.broadcast %cst_8 : f32 to vector<8x1xf32>
    %19 = arith.addf %15, %18 : vector<8x1xf32>
    %20 = math.rsqrt %19 : vector<8x1xf32>
    %21 = vector.broadcast %20 : vector<8x1xf32> to vector<8x32xf32>
    %22 = arith.mulf %17, %21 : vector<8x32xf32>
    %23 = vector.broadcast %1 : vector<1x32xf32> to vector<8x32xf32>
    %24 = arith.mulf %22, %23 : vector<8x32xf32>
    %25 = vector.broadcast %2 : vector<1x32xf32> to vector<8x32xf32>
    %26 = arith.addf %24, %25 : vector<8x32xf32>
    %c0_9 = arith.constant 0 : index
    %c0_10 = arith.constant 0 : index
    %27 = vector.load %arg4[%c0_9, %c0_10] : memref<8x32xf32, #tpu.memory_space<vmem>>, vector<8x32xf32>
    tpu.vector_store %arg4[%c0_9, %c0_10], %26 {strides = array<i32>} : memref<8x32xf32, #tpu.memory_space<vmem>>, vector<8x32xf32>,
    return
  }
  func.func @transform_0(%arg0: i32) -> (i32, i32) {
    %c0_i32 = arith.constant 0 : i32
    %c0_i32_0 = arith.constant 0 : i32
    return %arg0, %c0_i32 : i32, i32
  }
  func.func @transform_1(%arg0: i32) -> (i32, i32) {
    %c0_i32 = arith.constant 0 : i32
    %c0_i32_0 = arith.constant 0 : i32
    %c0_i32_1 = arith.constant 0 : i32
    return %c0_i32, %c0_i32_0 : i32, i32
  }
  func.func @transform_2(%arg0: i32) -> (i32, i32) {
    %c0_i32 = arith.constant 0 : i32
    %c0_i32_0 = arith.constant 0 : i32
    %c0_i32_1 = arith.constant 0 : i32
    return %c0_i32, %c0_i32_0 : i32, i32
  }
  func.func @transform_3(%arg0: i32) -> (i32, i32) {
    %c0_i32 = arith.constant 0 : i32
    %c0_i32_0 = arith.constant 0 : i32
    return %arg0, %c0_i32 : i32, i32
  }
}

module attributes {stable_mosaic.version = 11 : i64} {
  func.func @_attention_kernel(%arg0: i32, %arg1: memref<1x8x128xf32, #tpu.memory_space<vmem>>, %arg2: memref<1x8x32xf32, #tpu.memory_space<vmem>>) attributes {dimension_semantics = [#tpu.dimension_semantics<parallel>], iteration_bounds = array<i64: 2>, scalar_prefetch = 0 : i64, scratch_operands = 0 : i64, tpu.core_type = #tpu.core_type<tc>, window_params = [{transform_indices = @transform_0, window_bounds = array<i64: 1, 8, 128>}, {transform_indices = @transform_1, window_bounds = array<i64: 1, 8, 32>}]} {
    %c0 = arith.constant 0 : index
    %c0_0 = arith.constant 0 : index
    %c0_1 = arith.constant 0 : index
    %0 = vector.load %arg1[%c0, %c0_0, %c0_1] : memref<1x8x128xf32, #tpu.memory_space<vmem>>, vector<1x8x128xf32>
    %1 = vector.extract_strided_slice %0 {offsets = [0, 0, 0], sizes = [1, 8, 8], strides = [1, 1, 1]} : vector<1x8x128xf32> to vector<1x8x8xf32>
    %cst = arith.constant 0.353553385 : f32
    %2 = vector.broadcast %cst : f32 to vector<1x8x8xf32>
    %3 = arith.mulf %1, %2 : vector<1x8x8xf32>
    %4 = arith.truncf %3 : vector<1x8x8xf32> to vector<1x8x8xbf16>
    %5 = vector.extract_strided_slice %0 {offsets = [0, 0, 32], sizes = [1, 8, 8], strides = [1, 1, 1]} : vector<1x8x128xf32> to vector<1x8x8xf32>
    %6 = arith.truncf %5 : vector<1x8x8xf32> to vector<1x8x8xbf16>
    %7 = vector.extract_strided_slice %0 {offsets = [0, 0, 64], sizes = [1, 8, 8], strides = [1, 1, 1]} : vector<1x8x128xf32> to vector<1x8x8xf32>
    %8 = arith.truncf %7 : vector<1x8x8xf32> to vector<1x8x8xbf16>
    "tpu.trace_start"() <{level = 10 : i32, message = "bqd,bkd->bqk"}> : () -> ()
    %cst_2 = arith.constant dense<0.000000e+00> : vector<1x8x8xf32>
    %9 = tpu.matmul %4, %6, %cst_2 {dimension_numbers = #tpu.dot_dimension_numbers<[2], [2], [1], [1], [0, 0, 0, 1, 1, 1], [0], [0]>} : vector<1x8x8xbf16>, vector<1x8x8xbf16>, vector<1x8x8xf32> -> vector<1x8x8xf32>
    "tpu.trace_stop"() : () -> ()
    %cst_3 = arith.constant dense<0xFF800000> : vector<1x8xf32>
    %10 = vector.multi_reduction <maximumf>, %9, %cst_3 [2] : vector<1x8x8xf32> to vector<1x8xf32>
    %11 = vector.shape_cast %10 : vector<1x8xf32> to vector<1x8x1xf32>
    %12 = vector.broadcast %11 : vector<1x8x1xf32> to vector<1x8x8xf32>
    %13 = arith.subf %9, %12 : vector<1x8x8xf32>
    %14 = math.exp %13 : vector<1x8x8xf32>
    %cst_4 = arith.constant dense<0.000000e+00> : vector<1x8xf32>
    %15 = vector.multi_reduction <add>, %14, %cst_4 [2] : vector<1x8x8xf32> to vector<1x8xf32>
    %16 = vector.shape_cast %15 : vector<1x8xf32> to vector<1x8x1xf32>
    %17 = tpu.reciprocal %16 {approx = true} : vector<1x8x1xf32> -> vector<1x8x1xf32>
    %18 = vector.broadcast %17 : vector<1x8x1xf32> to vector<1x8x8xf32>
    %19 = arith.mulf %14, %18 : vector<1x8x8xf32>
    %20 = arith.truncf %19 : vector<1x8x8xf32> to vector<1x8x8xbf16>
    "tpu.trace_start"() <{level = 10 : i32, message = "bqk,bkd->bqd"}> : () -> ()
    %cst_5 = arith.constant dense<0.000000e+00> : vector<1x8x8xf32>
    %21 = tpu.matmul %20, %8, %cst_5 {dimension_numbers = #tpu.dot_dimension_numbers<[2], [1], [1], [2], [0, 0, 0, 1, 1, 2], [0], [0]>} : vector<1x8x8xbf16>, vector<1x8x8xbf16>, vector<1x8x8xf32> -> vector<1x8x8xf32>
    "tpu.trace_stop"() : () -> ()
    %22 = vector.extract_strided_slice %0 {offsets = [0, 0, 8], sizes = [1, 8, 8], strides = [1, 1, 1]} : vector<1x8x128xf32> to vector<1x8x8xf32>
    %cst_6 = arith.constant 0.353553385 : f32
    %23 = vector.broadcast %cst_6 : f32 to vector<1x8x8xf32>
    %24 = arith.mulf %22, %23 : vector<1x8x8xf32>
    %25 = arith.truncf %24 : vector<1x8x8xf32> to vector<1x8x8xbf16>
    %26 = vector.extract_strided_slice %0 {offsets = [0, 0, 40], sizes = [1, 8, 8], strides = [1, 1, 1]} : vector<1x8x128xf32> to vector<1x8x8xf32>
    %27 = arith.truncf %26 : vector<1x8x8xf32> to vector<1x8x8xbf16>
    %28 = vector.extract_strided_slice %0 {offsets = [0, 0, 72], sizes = [1, 8, 8], strides = [1, 1, 1]} : vector<1x8x128xf32> to vector<1x8x8xf32>
    %29 = arith.truncf %28 : vector<1x8x8xf32> to vector<1x8x8xbf16>
    "tpu.trace_start"() <{level = 10 : i32, message = "bqd,bkd->bqk"}> : () -> ()
    %cst_7 = arith.constant dense<0.000000e+00> : vector<1x8x8xf32>
    %30 = tpu.matmul %25, %27, %cst_7 {dimension_numbers = #tpu.dot_dimension_numbers<[2], [2], [1], [1], [0, 0, 0, 1, 1, 1], [0], [0]>} : vector<1x8x8xbf16>, vector<1x8x8xbf16>, vector<1x8x8xf32> -> vector<1x8x8xf32>
    "tpu.trace_stop"() : () -> ()
    %cst_8 = arith.constant dense<0xFF800000> : vector<1x8xf32>
    %31 = vector.multi_reduction <maximumf>, %30, %cst_8 [2] : vector<1x8x8xf32> to vector<1x8xf32>
    %32 = vector.shape_cast %31 : vector<1x8xf32> to vector<1x8x1xf32>
    %33 = vector.broadcast %32 : vector<1x8x1xf32> to vector<1x8x8xf32>
    %34 = arith.subf %30, %33 : vector<1x8x8xf32>
    %35 = math.exp %34 : vector<1x8x8xf32>
    %cst_9 = arith.constant dense<0.000000e+00> : vector<1x8xf32>
    %36 = vector.multi_reduction <add>, %35, %cst_9 [2] : vector<1x8x8xf32> to vector<1x8xf32>
    %37 = vector.shape_cast %36 : vector<1x8xf32> to vector<1x8x1xf32>
    %38 = tpu.reciprocal %37 {approx = true} : vector<1x8x1xf32> -> vector<1x8x1xf32>
    %39 = vector.broadcast %38 : vector<1x8x1xf32> to vector<1x8x8xf32>
    %40 = arith.mulf %35, %39 : vector<1x8x8xf32>
    %41 = arith.truncf %40 : vector<1x8x8xf32> to vector<1x8x8xbf16>
    "tpu.trace_start"() <{level = 10 : i32, message = "bqk,bkd->bqd"}> : () -> ()
    %cst_10 = arith.constant dense<0.000000e+00> : vector<1x8x8xf32>
    %42 = tpu.matmul %41, %29, %cst_10 {dimension_numbers = #tpu.dot_dimension_numbers<[2], [1], [1], [2], [0, 0, 0, 1, 1, 2], [0], [0]>} : vector<1x8x8xbf16>, vector<1x8x8xbf16>, vector<1x8x8xf32> -> vector<1x8x8xf32>
    "tpu.trace_stop"() : () -> ()
    %43 = vector.extract_strided_slice %0 {offsets = [0, 0, 16], sizes = [1, 8, 8], strides = [1, 1, 1]} : vector<1x8x128xf32> to vector<1x8x8xf32>
    %cst_11 = arith.constant 0.353553385 : f32
    %44 = vector.broadcast %cst_11 : f32 to vector<1x8x8xf32>
    %45 = arith.mulf %43, %44 : vector<1x8x8xf32>
    %46 = arith.truncf %45 : vector<1x8x8xf32> to vector<1x8x8xbf16>
    %47 = vector.extract_strided_slice %0 {offsets = [0, 0, 48], sizes = [1, 8, 8], strides = [1, 1, 1]} : vector<1x8x128xf32> to vector<1x8x8xf32>
    %48 = arith.truncf %47 : vector<1x8x8xf32> to vector<1x8x8xbf16>
    %49 = vector.extract_strided_slice %0 {offsets = [0, 0, 80], sizes = [1, 8, 8], strides = [1, 1, 1]} : vector<1x8x128xf32> to vector<1x8x8xf32>
    %50 = arith.truncf %49 : vector<1x8x8xf32> to vector<1x8x8xbf16>
    "tpu.trace_start"() <{level = 10 : i32, message = "bqd,bkd->bqk"}> : () -> ()
    %cst_12 = arith.constant dense<0.000000e+00> : vector<1x8x8xf32>
    %51 = tpu.matmul %46, %48, %cst_12 {dimension_numbers = #tpu.dot_dimension_numbers<[2], [2], [1], [1], [0, 0, 0, 1, 1, 1], [0], [0]>} : vector<1x8x8xbf16>, vector<1x8x8xbf16>, vector<1x8x8xf32> -> vector<1x8x8xf32>
    "tpu.trace_stop"() : () -> ()
    %cst_13 = arith.constant dense<0xFF800000> : vector<1x8xf32>
    %52 = vector.multi_reduction <maximumf>, %51, %cst_13 [2] : vector<1x8x8xf32> to vector<1x8xf32>
    %53 = vector.shape_cast %52 : vector<1x8xf32> to vector<1x8x1xf32>
    %54 = vector.broadcast %53 : vector<1x8x1xf32> to vector<1x8x8xf32>
    %55 = arith.subf %51, %54 : vector<1x8x8xf32>
    %56 = math.exp %55 : vector<1x8x8xf32>
    %cst_14 = arith.constant dense<0.000000e+00> : vector<1x8xf32>
    %57 = vector.multi_reduction <add>, %56, %cst_14 [2] : vector<1x8x8xf32> to vector<1x8xf32>
    %58 = vector.shape_cast %57 : vector<1x8xf32> to vector<1x8x1xf32>
    %59 = tpu.reciprocal %58 {approx = true} : vector<1x8x1xf32> -> vector<1x8x1xf32>
    %60 = vector.broadcast %59 : vector<1x8x1xf32> to vector<1x8x8xf32>
    %61 = arith.mulf %56, %60 : vector<1x8x8xf32>
    %62 = arith.truncf %61 : vector<1x8x8xf32> to vector<1x8x8xbf16>
    "tpu.trace_start"() <{level = 10 : i32, message = "bqk,bkd->bqd"}> : () -> ()
    %cst_15 = arith.constant dense<0.000000e+00> : vector<1x8x8xf32>
    %63 = tpu.matmul %62, %50, %cst_15 {dimension_numbers = #tpu.dot_dimension_numbers<[2], [1], [1], [2], [0, 0, 0, 1, 1, 2], [0], [0]>} : vector<1x8x8xbf16>, vector<1x8x8xbf16>, vector<1x8x8xf32> -> vector<1x8x8xf32>
    "tpu.trace_stop"() : () -> ()
    %64 = vector.extract_strided_slice %0 {offsets = [0, 0, 24], sizes = [1, 8, 8], strides = [1, 1, 1]} : vector<1x8x128xf32> to vector<1x8x8xf32>
    %cst_16 = arith.constant 0.353553385 : f32
    %65 = vector.broadcast %cst_16 : f32 to vector<1x8x8xf32>
    %66 = arith.mulf %64, %65 : vector<1x8x8xf32>
    %67 = arith.truncf %66 : vector<1x8x8xf32> to vector<1x8x8xbf16>
    %68 = vector.extract_strided_slice %0 {offsets = [0, 0, 56], sizes = [1, 8, 8], strides = [1, 1, 1]} : vector<1x8x128xf32> to vector<1x8x8xf32>
    %69 = arith.truncf %68 : vector<1x8x8xf32> to vector<1x8x8xbf16>
    %70 = vector.extract_strided_slice %0 {offsets = [0, 0, 88], sizes = [1, 8, 8], strides = [1, 1, 1]} : vector<1x8x128xf32> to vector<1x8x8xf32>
    %71 = arith.truncf %70 : vector<1x8x8xf32> to vector<1x8x8xbf16>
    "tpu.trace_start"() <{level = 10 : i32, message = "bqd,bkd->bqk"}> : () -> ()
    %cst_17 = arith.constant dense<0.000000e+00> : vector<1x8x8xf32>
    %72 = tpu.matmul %67, %69, %cst_17 {dimension_numbers = #tpu.dot_dimension_numbers<[2], [2], [1], [1], [0, 0, 0, 1, 1, 1], [0], [0]>} : vector<1x8x8xbf16>, vector<1x8x8xbf16>, vector<1x8x8xf32> -> vector<1x8x8xf32>
    "tpu.trace_stop"() : () -> ()
    %cst_18 = arith.constant dense<0xFF800000> : vector<1x8xf32>
    %73 = vector.multi_reduction <maximumf>, %72, %cst_18 [2] : vector<1x8x8xf32> to vector<1x8xf32>
    %74 = vector.shape_cast %73 : vector<1x8xf32> to vector<1x8x1xf32>
    %75 = vector.broadcast %74 : vector<1x8x1xf32> to vector<1x8x8xf32>
    %76 = arith.subf %72, %75 : vector<1x8x8xf32>
    %77 = math.exp %76 : vector<1x8x8xf32>
    %cst_19 = arith.constant dense<0.000000e+00> : vector<1x8xf32>
    %78 = vector.multi_reduction <add>, %77, %cst_19 [2] : vector<1x8x8xf32> to vector<1x8xf32>
    %79 = vector.shape_cast %78 : vector<1x8xf32> to vector<1x8x1xf32>
    %80 = tpu.reciprocal %79 {approx = true} : vector<1x8x1xf32> -> vector<1x8x1xf32>
    %81 = vector.broadcast %80 : vector<1x8x1xf32> to vector<1x8x8xf32>
    %82 = arith.mulf %77, %81 : vector<1x8x8xf32>
    %83 = arith.truncf %82 : vector<1x8x8xf32> to vector<1x8x8xbf16>
    "tpu.trace_start"() <{level = 10 : i32, message = "bqk,bkd->bqd"}> : () -> ()
    %cst_20 = arith.constant dense<0.000000e+00> : vector<1x8x8xf32>
    %84 = tpu.matmul %83, %71, %cst_20 {dimension_numbers = #tpu.dot_dimension_numbers<[2], [1], [1], [2], [0, 0, 0, 1, 1, 2], [0], [0]>} : vector<1x8x8xbf16>, vector<1x8x8xbf16>, vector<1x8x8xf32> -> vector<1x8x8xf32>
    "tpu.trace_stop"() : () -> ()
    %85 = tpu.concatenate %21, %42, %63, %84 in 2 : vector<1x8x8xf32>, vector<1x8x8xf32>, vector<1x8x8xf32>, vector<1x8x8xf32> -> vector<1x8x32xf32>
    %c0_21 = arith.constant 0 : index
    %c0_22 = arith.constant 0 : index
    %c0_23 = arith.constant 0 : index
    %86 = vector.load %arg2[%c0_21, %c0_22, %c0_23] : memref<1x8x32xf32, #tpu.memory_space<vmem>>, vector<1x8x32xf32>
    tpu.vector_store %arg2[%c0_21, %c0_22, %c0_23], %85 {strides = array<i32>} : memref<1x8x32xf32, #tpu.memory_space<vmem>>, vector<1x8x32xf32>,
    return
  }
  func.func @transform_0(%arg0: i32) -> (i32, i32, i32) {
    %c0_i32 = arith.constant 0 : i32
    %c0_i32_0 = arith.constant 0 : i32
    %c0_i32_1 = arith.constant 0 : i32
    return %arg0, %c0_i32, %c0_i32_0 : i32, i32, i32
  }
  func.func @transform_1(%arg0: i32) -> (i32, i32, i32) {
    %c0_i32 = arith.constant 0 : i32
    %c0_i32_0 = arith.constant 0 : i32
    %c0_i32_1 = arith.constant 0 : i32
    return %arg0, %c0_i32, %c0_i32_0 : i32, i32, i32
  }
}

module attributes {stable_mosaic.version = 11 : i64} {
  func.func @_linear_residual_ln_kernel(%arg0: i32, %arg1: memref<8x32xf32, #tpu.memory_space<vmem>>, %arg2: memref<32x32xbf16, #tpu.memory_space<vmem>>, %arg3: memref<1x32xf32, #tpu.memory_space<vmem>>, %arg4: memref<8x32xf32, #tpu.memory_space<vmem>>, %arg5: memref<1x32xf32, #tpu.memory_space<vmem>>, %arg6: memref<1x32xf32, #tpu.memory_space<vmem>>, %arg7: memref<8x32xf32, #tpu.memory_space<vmem>>) attributes {dimension_semantics = [#tpu.dimension_semantics<parallel>], iteration_bounds = array<i64: 2>, scalar_prefetch = 0 : i64, scratch_operands = 0 : i64, tpu.core_type = #tpu.core_type<tc>, window_params = [{transform_indices = @transform_0, window_bounds = array<i64: 8, 32>}, {pipeline_mode = #tpu.pipeline_mode<synchronous>, transform_indices = @transform_1, window_bounds = array<i64: 32, 32>}, {pipeline_mode = #tpu.pipeline_mode<synchronous>, transform_indices = @transform_2, window_bounds = array<i64: 1, 32>}, {transform_indices = @transform_3, window_bounds = array<i64: 8, 32>}, {pipeline_mode = #tpu.pipeline_mode<synchronous>, transform_indices = @transform_4, window_bounds = array<i64: 1, 32>}, {pipeline_mode = #tpu.pipeline_mode<synchronous>, transform_indices = @transform_5, window_bounds = array<i64: 1, 32>}, {transform_indices = @transform_6, window_bounds = array<i64: 8, 32>}]} {
    %c0 = arith.constant 0 : index
    %c0_0 = arith.constant 0 : index
    %0 = vector.load %arg1[%c0, %c0_0] : memref<8x32xf32, #tpu.memory_space<vmem>>, vector<8x32xf32>
    %1 = arith.truncf %0 : vector<8x32xf32> to vector<8x32xbf16>
    %c0_1 = arith.constant 0 : index
    %c0_2 = arith.constant 0 : index
    %2 = vector.load %arg2[%c0_1, %c0_2] : memref<32x32xbf16, #tpu.memory_space<vmem>>, vector<32x32xbf16>
    %cst = arith.constant dense<0.000000e+00> : vector<8x32xf32>
    %3 = tpu.matmul %1, %2, %cst {dimension_numbers = #tpu.dot_dimension_numbers<[1], [0], [0], [1], [0, 0, 1, 1], [], []>} : vector<8x32xbf16>, vector<32x32xbf16>, vector<8x32xf32> -> vector<8x32xf32>
    %c0_3 = arith.constant 0 : index
    %c0_4 = arith.constant 0 : index
    %4 = vector.load %arg3[%c0_3, %c0_4] : memref<1x32xf32, #tpu.memory_space<vmem>>, vector<1x32xf32>
    %5 = vector.broadcast %4 : vector<1x32xf32> to vector<8x32xf32>
    %6 = arith.addf %3, %5 : vector<8x32xf32>
    %c0_5 = arith.constant 0 : index
    %c0_6 = arith.constant 0 : index
    %7 = vector.load %arg4[%c0_5, %c0_6] : memref<8x32xf32, #tpu.memory_space<vmem>>, vector<8x32xf32>
    %8 = arith.addf %6, %7 : vector<8x32xf32>
    %c0_7 = arith.constant 0 : index
    %c0_8 = arith.constant 0 : index
    %9 = vector.load %arg5[%c0_7, %c0_8] : memref<1x32xf32, #tpu.memory_space<vmem>>, vector<1x32xf32>
    %c0_9 = arith.constant 0 : index
    %c0_10 = arith.constant 0 : index
    %10 = vector.load %arg6[%c0_9, %c0_10] : memref<1x32xf32, #tpu.memory_space<vmem>>, vector<1x32xf32>
    %cst_11 = arith.constant dense<0.000000e+00> : vector<8xf32>
    %11 = vector.multi_reduction <add>, %8, %cst_11 [1] : vector<8x32xf32> to vector<8xf32>
    %12 = vector.shape_cast %11 : vector<8xf32> to vector<8x1xf32>
    %cst_12 = arith.constant 3.200000e+01 : f32
    %13 = vector.broadcast %cst_12 : f32 to vector<8x1xf32>
    %14 = arith.divf %12, %13 : vector<8x1xf32>
    %15 = vector.broadcast %14 : vector<8x1xf32> to vector<8x32xf32>
    %16 = arith.subf %8, %15 : vector<8x32xf32>
    %17 = vector.broadcast %14 : vector<8x1xf32> to vector<8x32xf32>
    %18 = arith.subf %8, %17 : vector<8x32xf32>
    %19 = arith.mulf %16, %18 : vector<8x32xf32>
    %cst_13 = arith.constant dense<0.000000e+00> : vector<8xf32>
    %20 = vector.multi_reduction <add>, %19, %cst_13 [1] : vector<8x32xf32> to vector<8xf32>
    %21 = vector.shape_cast %20 : vector<8xf32> to vector<8x1xf32>
    %cst_14 = arith.constant 3.200000e+01 : f32
    %22 = vector.broadcast %cst_14 : f32 to vector<8x1xf32>
    %23 = arith.divf %21, %22 : vector<8x1xf32>
    %24 = vector.broadcast %14 : vector<8x1xf32> to vector<8x32xf32>
    %25 = arith.subf %8, %24 : vector<8x32xf32>
    %cst_15 = arith.constant 9.99999996E-13 : f32
    %26 = vector.broadcast %cst_15 : f32 to vector<8x1xf32>
    %27 = arith.addf %23, %26 : vector<8x1xf32>
    %28 = math.rsqrt %27 : vector<8x1xf32>
    %29 = vector.broadcast %28 : vector<8x1xf32> to vector<8x32xf32>
    %30 = arith.mulf %25, %29 : vector<8x32xf32>
    %31 = vector.broadcast %9 : vector<1x32xf32> to vector<8x32xf32>
    %32 = arith.mulf %30, %31 : vector<8x32xf32>
    %33 = vector.broadcast %10 : vector<1x32xf32> to vector<8x32xf32>
    %34 = arith.addf %32, %33 : vector<8x32xf32>
    %c0_16 = arith.constant 0 : index
    %c0_17 = arith.constant 0 : index
    %35 = vector.load %arg7[%c0_16, %c0_17] : memref<8x32xf32, #tpu.memory_space<vmem>>, vector<8x32xf32>
    tpu.vector_store %arg7[%c0_16, %c0_17], %34 {strides = array<i32>} : memref<8x32xf32, #tpu.memory_space<vmem>>, vector<8x32xf32>,
    return
  }
  func.func @transform_0(%arg0: i32) -> (i32, i32) {
    %c0_i32 = arith.constant 0 : i32
    %c0_i32_0 = arith.constant 0 : i32
    return %arg0, %c0_i32 : i32, i32
  }
  func.func @transform_1(%arg0: i32) -> (i32, i32) {
    %c0_i32 = arith.constant 0 : i32
    %c0_i32_0 = arith.constant 0 : i32
    %c0_i32_1 = arith.constant 0 : i32
    return %c0_i32, %c0_i32_0 : i32, i32
  }
  func.func @transform_2(%arg0: i32) -> (i32, i32) {
    %c0_i32 = arith.constant 0 : i32
    %c0_i32_0 = arith.constant 0 : i32
    %c0_i32_1 = arith.constant 0 : i32
    return %c0_i32, %c0_i32_0 : i32, i32
  }
  func.func @transform_3(%arg0: i32) -> (i32, i32) {
    %c0_i32 = arith.constant 0 : i32
    %c0_i32_0 = arith.constant 0 : i32
    return %arg0, %c0_i32 : i32, i32
  }
  func.func @transform_4(%arg0: i32) -> (i32, i32) {
    %c0_i32 = arith.constant 0 : i32
    %c0_i32_0 = arith.constant 0 : i32
    %c0_i32_1 = arith.constant 0 : i32
    return %c0_i32, %c0_i32_0 : i32, i32
  }
  func.func @transform_5(%arg0: i32) -> (i32, i32) {
    %c0_i32 = arith.constant 0 : i32
    %c0_i32_0 = arith.constant 0 : i32
    %c0_i32_1 = arith.constant 0 : i32
    return %c0_i32, %c0_i32_0 : i32, i32
  }
  func.func @transform_6(%arg0: i32) -> (i32, i32) {
    %c0_i32 = arith.constant 0 : i32
    %c0_i32_0 = arith.constant 0 : i32
    return %arg0, %c0_i32 : i32, i32
  }
}

module attributes {stable_mosaic.version = 11 : i64} {
  func.func @_linear_kernel(%arg0: i32, %arg1: i32, %arg2: memref<8x32xf32, #tpu.memory_space<vmem>>, %arg3: memref<32x128xbf16, #tpu.memory_space<vmem>>, %arg4: memref<1x128xf32, #tpu.memory_space<vmem>>, %arg5: memref<8x128xf32, #tpu.memory_space<vmem>>) attributes {dimension_semantics = [#tpu.dimension_semantics<parallel>, #tpu.dimension_semantics<parallel>], iteration_bounds = array<i64: 2, 1>, scalar_prefetch = 0 : i64, scratch_operands = 0 : i64, tpu.core_type = #tpu.core_type<tc>, window_params = [{transform_indices = @transform_0, window_bounds = array<i64: 8, 32>}, {transform_indices = @transform_1, window_bounds = array<i64: 32, 128>}, {transform_indices = @transform_2, window_bounds = array<i64: 1, 128>}, {transform_indices = @transform_3, window_bounds = array<i64: 8, 128>}]} {
    %c0 = arith.constant 0 : index
    %c0_0 = arith.constant 0 : index
    %0 = vector.load %arg2[%c0, %c0_0] : memref<8x32xf32, #tpu.memory_space<vmem>>, vector<8x32xf32>
    %1 = arith.truncf %0 : vector<8x32xf32> to vector<8x32xbf16>
    %c0_1 = arith.constant 0 : index
    %c0_2 = arith.constant 0 : index
    %2 = vector.load %arg3[%c0_1, %c0_2] : memref<32x128xbf16, #tpu.memory_space<vmem>>, vector<32x128xbf16>
    %cst = arith.constant dense<0.000000e+00> : vector<8x128xf32>
    %3 = tpu.matmul %1, %2, %cst {dimension_numbers = #tpu.dot_dimension_numbers<[1], [0], [0], [1], [0, 0, 1, 1], [], []>} : vector<8x32xbf16>, vector<32x128xbf16>, vector<8x128xf32> -> vector<8x128xf32>
    %c0_3 = arith.constant 0 : index
    %c0_4 = arith.constant 0 : index
    %4 = vector.load %arg4[%c0_3, %c0_4] : memref<1x128xf32, #tpu.memory_space<vmem>>, vector<1x128xf32>
    %5 = vector.broadcast %4 : vector<1x128xf32> to vector<8x128xf32>
    %6 = arith.addf %3, %5 : vector<8x128xf32>
    %c0_5 = arith.constant 0 : index
    %c0_6 = arith.constant 0 : index
    %7 = vector.load %arg5[%c0_5, %c0_6] : memref<8x128xf32, #tpu.memory_space<vmem>>, vector<8x128xf32>
    tpu.vector_store %arg5[%c0_5, %c0_6], %6 {strides = array<i32>} : memref<8x128xf32, #tpu.memory_space<vmem>>, vector<8x128xf32>,
    return
  }
  func.func @transform_0(%arg0: i32, %arg1: i32) -> (i32, i32) {
    %c0_i32 = arith.constant 0 : i32
    %c0_i32_0 = arith.constant 0 : i32
    return %arg0, %c0_i32 : i32, i32
  }
  func.func @transform_1(%arg0: i32, %arg1: i32) -> (i32, i32) {
    %c0_i32 = arith.constant 0 : i32
    %c0_i32_0 = arith.constant 0 : i32
    return %c0_i32, %arg1 : i32, i32
  }
  func.func @transform_2(%arg0: i32, %arg1: i32) -> (i32, i32) {
    %c0_i32 = arith.constant 0 : i32
    %c0_i32_0 = arith.constant 0 : i32
    return %c0_i32, %arg1 : i32, i32
  }
  func.func @transform_3(%arg0: i32, %arg1: i32) -> (i32, i32) {
    %c0_i32 = arith.constant 0 : i32
    return %arg0, %arg1 : i32, i32
  }
}

module attributes {stable_mosaic.version = 11 : i64} {
  func.func @_linear_kernel(%arg0: i32, %arg1: i32, %arg2: memref<8x32xf32, #tpu.memory_space<vmem>>, %arg3: memref<32x128xbf16, #tpu.memory_space<vmem>>, %arg4: memref<1x128xf32, #tpu.memory_space<vmem>>, %arg5: memref<8x128xf32, #tpu.memory_space<vmem>>) attributes {dimension_semantics = [#tpu.dimension_semantics<parallel>, #tpu.dimension_semantics<parallel>], iteration_bounds = array<i64: 2, 1>, scalar_prefetch = 0 : i64, scratch_operands = 0 : i64, tpu.core_type = #tpu.core_type<tc>, window_params = [{transform_indices = @transform_0, window_bounds = array<i64: 8, 32>}, {transform_indices = @transform_1, window_bounds = array<i64: 32, 128>}, {transform_indices = @transform_2, window_bounds = array<i64: 1, 128>}, {transform_indices = @transform_3, window_bounds = array<i64: 8, 128>}]} {
    %c0 = arith.constant 0 : index
    %c0_0 = arith.constant 0 : index
    %0 = vector.load %arg2[%c0, %c0_0] : memref<8x32xf32, #tpu.memory_space<vmem>>, vector<8x32xf32>
    %1 = arith.truncf %0 : vector<8x32xf32> to vector<8x32xbf16>
    %c0_1 = arith.constant 0 : index
    %c0_2 = arith.constant 0 : index
    %2 = vector.load %arg3[%c0_1, %c0_2] : memref<32x128xbf16, #tpu.memory_space<vmem>>, vector<32x128xbf16>
    %cst = arith.constant dense<0.000000e+00> : vector<8x128xf32>
    %3 = tpu.matmul %1, %2, %cst {dimension_numbers = #tpu.dot_dimension_numbers<[1], [0], [0], [1], [0, 0, 1, 1], [], []>} : vector<8x32xbf16>, vector<32x128xbf16>, vector<8x128xf32> -> vector<8x128xf32>
    %c0_3 = arith.constant 0 : index
    %c0_4 = arith.constant 0 : index
    %4 = vector.load %arg4[%c0_3, %c0_4] : memref<1x128xf32, #tpu.memory_space<vmem>>, vector<1x128xf32>
    %5 = vector.broadcast %4 : vector<1x128xf32> to vector<8x128xf32>
    %6 = arith.addf %3, %5 : vector<8x128xf32>
    %cst_5 = arith.constant 5.000000e-01 : f32
    %7 = vector.broadcast %cst_5 : f32 to vector<8x128xf32>
    %8 = arith.mulf %7, %6 : vector<8x128xf32>
    %cst_6 = arith.constant 4.471500e-02 : f32
    %9 = vector.broadcast %cst_6 : f32 to vector<8x128xf32>
    %10 = arith.mulf %9, %6 : vector<8x128xf32>
    %11 = arith.mulf %10, %6 : vector<8x128xf32>
    %12 = arith.mulf %11, %6 : vector<8x128xf32>
    %13 = arith.addf %6, %12 : vector<8x128xf32>
    %cst_7 = arith.constant 0.797884583 : f32
    %14 = vector.broadcast %cst_7 : f32 to vector<8x128xf32>
    %15 = arith.mulf %14, %13 : vector<8x128xf32>
    %16 = math.tanh %15 : vector<8x128xf32>
    %cst_8 = arith.constant 1.000000e+00 : f32
    %17 = vector.broadcast %cst_8 : f32 to vector<8x128xf32>
    %18 = arith.addf %17, %16 : vector<8x128xf32>
    %19 = arith.mulf %8, %18 : vector<8x128xf32>
    %c0_9 = arith.constant 0 : index
    %c0_10 = arith.constant 0 : index
    %20 = vector.load %arg5[%c0_9, %c0_10] : memref<8x128xf32, #tpu.memory_space<vmem>>, vector<8x128xf32>
    tpu.vector_store %arg5[%c0_9, %c0_10], %19 {strides = array<i32>} : memref<8x128xf32, #tpu.memory_space<vmem>>, vector<8x128xf32>,
    return
  }
  func.func @transform_0(%arg0: i32, %arg1: i32) -> (i32, i32) {
    %c0_i32 = arith.constant 0 : i32
    %c0_i32_0 = arith.constant 0 : i32
    return %arg0, %c0_i32 : i32, i32
  }
  func.func @transform_1(%arg0: i32, %arg1: i32) -> (i32, i32) {
    %c0_i32 = arith.constant 0 : i32
    %c0_i32_0 = arith.constant 0 : i32
    return %c0_i32, %arg1 : i32, i32
  }
  func.func @transform_2(%arg0: i32, %arg1: i32) -> (i32, i32) {
    %c0_i32 = arith.constant 0 : i32
    %c0_i32_0 = arith.constant 0 : i32
    return %c0_i32, %arg1 : i32, i32
  }
  func.func @transform_3(%arg0: i32, %arg1: i32) -> (i32, i32) {
    %c0_i32 = arith.constant 0 : i32
    return %arg0, %arg1 : i32, i32
  }
}

module attributes {stable_mosaic.version = 11 : i64} {
  func.func @_linear_residual_ln_kernel(%arg0: i32, %arg1: memref<8x128xf32, #tpu.memory_space<vmem>>, %arg2: memref<128x32xbf16, #tpu.memory_space<vmem>>, %arg3: memref<1x32xf32, #tpu.memory_space<vmem>>, %arg4: memref<8x32xf32, #tpu.memory_space<vmem>>, %arg5: memref<1x32xf32, #tpu.memory_space<vmem>>, %arg6: memref<1x32xf32, #tpu.memory_space<vmem>>, %arg7: memref<8x32xf32, #tpu.memory_space<vmem>>) attributes {dimension_semantics = [#tpu.dimension_semantics<parallel>], iteration_bounds = array<i64: 2>, scalar_prefetch = 0 : i64, scratch_operands = 0 : i64, tpu.core_type = #tpu.core_type<tc>, window_params = [{transform_indices = @transform_0, window_bounds = array<i64: 8, 128>}, {pipeline_mode = #tpu.pipeline_mode<synchronous>, transform_indices = @transform_1, window_bounds = array<i64: 128, 32>}, {pipeline_mode = #tpu.pipeline_mode<synchronous>, transform_indices = @transform_2, window_bounds = array<i64: 1, 32>}, {transform_indices = @transform_3, window_bounds = array<i64: 8, 32>}, {pipeline_mode = #tpu.pipeline_mode<synchronous>, transform_indices = @transform_4, window_bounds = array<i64: 1, 32>}, {pipeline_mode = #tpu.pipeline_mode<synchronous>, transform_indices = @transform_5, window_bounds = array<i64: 1, 32>}, {transform_indices = @transform_6, window_bounds = array<i64: 8, 32>}]} {
    %c0 = arith.constant 0 : index
    %c0_0 = arith.constant 0 : index
    %0 = vector.load %arg1[%c0, %c0_0] : memref<8x128xf32, #tpu.memory_space<vmem>>, vector<8x128xf32>
    %1 = arith.truncf %0 : vector<8x128xf32> to vector<8x128xbf16>
    %c0_1 = arith.constant 0 : index
    %c0_2 = arith.constant 0 : index
    %2 = vector.load %arg2[%c0_1, %c0_2] : memref<128x32xbf16, #tpu.memory_space<vmem>>, vector<128x32xbf16>
    %cst = arith.constant dense<0.000000e+00> : vector<8x32xf32>
    %3 = tpu.matmul %1, %2, %cst {dimension_numbers = #tpu.dot_dimension_numbers<[1], [0], [0], [1], [0, 0, 1, 1], [], []>} : vector<8x128xbf16>, vector<128x32xbf16>, vector<8x32xf32> -> vector<8x32xf32>
    %c0_3 = arith.constant 0 : index
    %c0_4 = arith.constant 0 : index
    %4 = vector.load %arg3[%c0_3, %c0_4] : memref<1x32xf32, #tpu.memory_space<vmem>>, vector<1x32xf32>
    %5 = vector.broadcast %4 : vector<1x32xf32> to vector<8x32xf32>
    %6 = arith.addf %3, %5 : vector<8x32xf32>
    %c0_5 = arith.constant 0 : index
    %c0_6 = arith.constant 0 : index
    %7 = vector.load %arg4[%c0_5, %c0_6] : memref<8x32xf32, #tpu.memory_space<vmem>>, vector<8x32xf32>
    %8 = arith.addf %6, %7 : vector<8x32xf32>
    %c0_7 = arith.constant 0 : index
    %c0_8 = arith.constant 0 : index
    %9 = vector.load %arg5[%c0_7, %c0_8] : memref<1x32xf32, #tpu.memory_space<vmem>>, vector<1x32xf32>
    %c0_9 = arith.constant 0 : index
    %c0_10 = arith.constant 0 : index
    %10 = vector.load %arg6[%c0_9, %c0_10] : memref<1x32xf32, #tpu.memory_space<vmem>>, vector<1x32xf32>
    %cst_11 = arith.constant dense<0.000000e+00> : vector<8xf32>
    %11 = vector.multi_reduction <add>, %8, %cst_11 [1] : vector<8x32xf32> to vector<8xf32>
    %12 = vector.shape_cast %11 : vector<8xf32> to vector<8x1xf32>
    %cst_12 = arith.constant 3.200000e+01 : f32
    %13 = vector.broadcast %cst_12 : f32 to vector<8x1xf32>
    %14 = arith.divf %12, %13 : vector<8x1xf32>
    %15 = vector.broadcast %14 : vector<8x1xf32> to vector<8x32xf32>
    %16 = arith.subf %8, %15 : vector<8x32xf32>
    %17 = vector.broadcast %14 : vector<8x1xf32> to vector<8x32xf32>
    %18 = arith.subf %8, %17 : vector<8x32xf32>
    %19 = arith.mulf %16, %18 : vector<8x32xf32>
    %cst_13 = arith.constant dense<0.000000e+00> : vector<8xf32>
    %20 = vector.multi_reduction <add>, %19, %cst_13 [1] : vector<8x32xf32> to vector<8xf32>
    %21 = vector.shape_cast %20 : vector<8xf32> to vector<8x1xf32>
    %cst_14 = arith.constant 3.200000e+01 : f32
    %22 = vector.broadcast %cst_14 : f32 to vector<8x1xf32>
    %23 = arith.divf %21, %22 : vector<8x1xf32>
    %24 = vector.broadcast %14 : vector<8x1xf32> to vector<8x32xf32>
    %25 = arith.subf %8, %24 : vector<8x32xf32>
    %cst_15 = arith.constant 9.99999996E-13 : f32
    %26 = vector.broadcast %cst_15 : f32 to vector<8x1xf32>
    %27 = arith.addf %23, %26 : vector<8x1xf32>
    %28 = math.rsqrt %27 : vector<8x1xf32>
    %29 = vector.broadcast %28 : vector<8x1xf32> to vector<8x32xf32>
    %30 = arith.mulf %25, %29 : vector<8x32xf32>
    %31 = vector.broadcast %9 : vector<1x32xf32> to vector<8x32xf32>
    %32 = arith.mulf %30, %31 : vector<8x32xf32>
    %33 = vector.broadcast %10 : vector<1x32xf32> to vector<8x32xf32>
    %34 = arith.addf %32, %33 : vector<8x32xf32>
    %c0_16 = arith.constant 0 : index
    %c0_17 = arith.constant 0 : index
    %35 = vector.load %arg7[%c0_16, %c0_17] : memref<8x32xf32, #tpu.memory_space<vmem>>, vector<8x32xf32>
    tpu.vector_store %arg7[%c0_16, %c0_17], %34 {strides = array<i32>} : memref<8x32xf32, #tpu.memory_space<vmem>>, vector<8x32xf32>,
    return
  }
  func.func @transform_0(%arg0: i32) -> (i32, i32) {
    %c0_i32 = arith.constant 0 : i32
    %c0_i32_0 = arith.constant 0 : i32
    return %arg0, %c0_i32 : i32, i32
  }
  func.func @transform_1(%arg0: i32) -> (i32, i32) {
    %c0_i32 = arith.constant 0 : i32
    %c0_i32_0 = arith.constant 0 : i32
    %c0_i32_1 = arith.constant 0 : i32
    return %c0_i32, %c0_i32_0 : i32, i32
  }
  func.func @transform_2(%arg0: i32) -> (i32, i32) {
    %c0_i32 = arith.constant 0 : i32
    %c0_i32_0 = arith.constant 0 : i32
    %c0_i32_1 = arith.constant 0 : i32
    return %c0_i32, %c0_i32_0 : i32, i32
  }
  func.func @transform_3(%arg0: i32) -> (i32, i32) {
    %c0_i32 = arith.constant 0 : i32
    %c0_i32_0 = arith.constant 0 : i32
    return %arg0, %c0_i32 : i32, i32
  }
  func.func @transform_4(%arg0: i32) -> (i32, i32) {
    %c0_i32 = arith.constant 0 : i32
    %c0_i32_0 = arith.constant 0 : i32
    %c0_i32_1 = arith.constant 0 : i32
    return %c0_i32, %c0_i32_0 : i32, i32
  }
  func.func @transform_5(%arg0: i32) -> (i32, i32) {
    %c0_i32 = arith.constant 0 : i32
    %c0_i32_0 = arith.constant 0 : i32
    %c0_i32_1 = arith.constant 0 : i32
    return %c0_i32, %c0_i32_0 : i32, i32
  }
  func.func @transform_6(%arg0: i32) -> (i32, i32) {
    %c0_i32 = arith.constant 0 : i32
    %c0_i32_0 = arith.constant 0 : i32
    return %arg0, %c0_i32 : i32, i32
  }
}

module attributes {stable_mosaic.version = 11 : i64} {
  func.func @_gelu_ln_linear_kernel(%arg0: i32, %arg1: memref<8x32xf32, #tpu.memory_space<vmem>>, %arg2: memref<1x32xf32, #tpu.memory_space<vmem>>, %arg3: memref<1x32xf32, #tpu.memory_space<vmem>>, %arg4: memref<32x128xbf16, #tpu.memory_space<vmem>>, %arg5: memref<1x128xf32, #tpu.memory_space<vmem>>, %arg6: memref<8x128xf32, #tpu.memory_space<vmem>>) attributes {dimension_semantics = [#tpu.dimension_semantics<parallel>], iteration_bounds = array<i64: 2>, scalar_prefetch = 0 : i64, scratch_operands = 0 : i64, tpu.core_type = #tpu.core_type<tc>, window_params = [{transform_indices = @transform_0, window_bounds = array<i64: 8, 32>}, {pipeline_mode = #tpu.pipeline_mode<synchronous>, transform_indices = @transform_1, window_bounds = array<i64: 1, 32>}, {pipeline_mode = #tpu.pipeline_mode<synchronous>, transform_indices = @transform_2, window_bounds = array<i64: 1, 32>}, {pipeline_mode = #tpu.pipeline_mode<synchronous>, transform_indices = @transform_3, window_bounds = array<i64: 32, 128>}, {pipeline_mode = #tpu.pipeline_mode<synchronous>, transform_indices = @transform_4, window_bounds = array<i64: 1, 128>}, {transform_indices = @transform_5, window_bounds = array<i64: 8, 128>}]} {
    %c0 = arith.constant 0 : index
    %c0_0 = arith.constant 0 : index
    %0 = vector.load %arg1[%c0, %c0_0] : memref<8x32xf32, #tpu.memory_space<vmem>>, vector<8x32xf32>
    %cst = arith.constant 5.000000e-01 : f32
    %1 = vector.broadcast %cst : f32 to vector<8x32xf32>
    %2 = arith.mulf %1, %0 : vector<8x32xf32>
    %cst_1 = arith.constant 4.471500e-02 : f32
    %3 = vector.broadcast %cst_1 : f32 to vector<8x32xf32>
    %4 = arith.mulf %3, %0 : vector<8x32xf32>
    %5 = arith.mulf %4, %0 : vector<8x32xf32>
    %6 = arith.mulf %5, %0 : vector<8x32xf32>
    %7 = arith.addf %0, %6 : vector<8x32xf32>
    %cst_2 = arith.constant 0.797884583 : f32
    %8 = vector.broadcast %cst_2 : f32 to vector<8x32xf32>
    %9 = arith.mulf %8, %7 : vector<8x32xf32>
    %10 = math.tanh %9 : vector<8x32xf32>
    %cst_3 = arith.constant 1.000000e+00 : f32
    %11 = vector.broadcast %cst_3 : f32 to vector<8x32xf32>
    %12 = arith.addf %11, %10 : vector<8x32xf32>
    %13 = arith.mulf %2, %12 : vector<8x32xf32>
    %c0_4 = arith.constant 0 : index
    %c0_5 = arith.constant 0 : index
    %14 = vector.load %arg2[%c0_4, %c0_5] : memref<1x32xf32, #tpu.memory_space<vmem>>, vector<1x32xf32>
    %c0_6 = arith.constant 0 : index
    %c0_7 = arith.constant 0 : index
    %15 = vector.load %arg3[%c0_6, %c0_7] : memref<1x32xf32, #tpu.memory_space<vmem>>, vector<1x32xf32>
    %cst_8 = arith.constant dense<0.000000e+00> : vector<8xf32>
    %16 = vector.multi_reduction <add>, %13, %cst_8 [1] : vector<8x32xf32> to vector<8xf32>
    %17 = vector.shape_cast %16 : vector<8xf32> to vector<8x1xf32>
    %cst_9 = arith.constant 3.200000e+01 : f32
    %18 = vector.broadcast %cst_9 : f32 to vector<8x1xf32>
    %19 = arith.divf %17, %18 : vector<8x1xf32>
    %20 = vector.broadcast %19 : vector<8x1xf32> to vector<8x32xf32>
    %21 = arith.subf %13, %20 : vector<8x32xf32>
    %22 = vector.broadcast %19 : vector<8x1xf32> to vector<8x32xf32>
    %23 = arith.subf %13, %22 : vector<8x32xf32>
    %24 = arith.mulf %21, %23 : vector<8x32xf32>
    %cst_10 = arith.constant dense<0.000000e+00> : vector<8xf32>
    %25 = vector.multi_reduction <add>, %24, %cst_10 [1] : vector<8x32xf32> to vector<8xf32>
    %26 = vector.shape_cast %25 : vector<8xf32> to vector<8x1xf32>
    %cst_11 = arith.constant 3.200000e+01 : f32
    %27 = vector.broadcast %cst_11 : f32 to vector<8x1xf32>
    %28 = arith.divf %26, %27 : vector<8x1xf32>
    %29 = vector.broadcast %19 : vector<8x1xf32> to vector<8x32xf32>
    %30 = arith.subf %13, %29 : vector<8x32xf32>
    %cst_12 = arith.constant 9.99999996E-13 : f32
    %31 = vector.broadcast %cst_12 : f32 to vector<8x1xf32>
    %32 = arith.addf %28, %31 : vector<8x1xf32>
    %33 = math.rsqrt %32 : vector<8x1xf32>
    %34 = vector.broadcast %33 : vector<8x1xf32> to vector<8x32xf32>
    %35 = arith.mulf %30, %34 : vector<8x32xf32>
    %36 = vector.broadcast %14 : vector<1x32xf32> to vector<8x32xf32>
    %37 = arith.mulf %35, %36 : vector<8x32xf32>
    %38 = vector.broadcast %15 : vector<1x32xf32> to vector<8x32xf32>
    %39 = arith.addf %37, %38 : vector<8x32xf32>
    %40 = arith.truncf %39 : vector<8x32xf32> to vector<8x32xbf16>
    %c0_13 = arith.constant 0 : index
    %c0_14 = arith.constant 0 : index
    %41 = vector.load %arg4[%c0_13, %c0_14] : memref<32x128xbf16, #tpu.memory_space<vmem>>, vector<32x128xbf16>
    %cst_15 = arith.constant dense<0.000000e+00> : vector<8x128xf32>
    %42 = tpu.matmul %40, %41, %cst_15 {dimension_numbers = #tpu.dot_dimension_numbers<[1], [0], [0], [1], [0, 0, 1, 1], [], []>} : vector<8x32xbf16>, vector<32x128xbf16>, vector<8x128xf32> -> vector<8x128xf32>
    %c0_16 = arith.constant 0 : index
    %c0_17 = arith.constant 0 : index
    %43 = vector.load %arg5[%c0_16, %c0_17] : memref<1x128xf32, #tpu.memory_space<vmem>>, vector<1x128xf32>
    %44 = vector.broadcast %43 : vector<1x128xf32> to vector<8x128xf32>
    %45 = arith.addf %42, %44 : vector<8x128xf32>
    %c0_18 = arith.constant 0 : index
    %c0_19 = arith.constant 0 : index
    %46 = vector.load %arg6[%c0_18, %c0_19] : memref<8x128xf32, #tpu.memory_space<vmem>>, vector<8x128xf32>
    tpu.vector_store %arg6[%c0_18, %c0_19], %45 {strides = array<i32>} : memref<8x128xf32, #tpu.memory_space<vmem>>, vector<8x128xf32>,
    return
  }
  func.func @transform_0(%arg0: i32) -> (i32, i32) {
    %c0_i32 = arith.constant 0 : i32
    %c0_i32_0 = arith.constant 0 : i32
    return %arg0, %c0_i32 : i32, i32
  }
  func.func @transform_1(%arg0: i32) -> (i32, i32) {
    %c0_i32 = arith.constant 0 : i32
    %c0_i32_0 = arith.constant 0 : i32
    %c0_i32_1 = arith.constant 0 : i32
    return %c0_i32, %c0_i32_0 : i32, i32
  }
  func.func @transform_2(%arg0: i32) -> (i32, i32) {
    %c0_i32 = arith.constant 0 : i32
    %c0_i32_0 = arith.constant 0 : i32
    %c0_i32_1 = arith.constant 0 : i32
    return %c0_i32, %c0_i32_0 : i32, i32
  }
  func.func @transform_3(%arg0: i32) -> (i32, i32) {
    %c0_i32 = arith.constant 0 : i32
    %c0_i32_0 = arith.constant 0 : i32
    %c0_i32_1 = arith.constant 0 : i32
    return %c0_i32, %c0_i32_0 : i32, i32
  }
  func.func @transform_4(%arg0: i32) -> (i32, i32) {
    %c0_i32 = arith.constant 0 : i32
    %c0_i32_0 = arith.constant 0 : i32
    %c0_i32_1 = arith.constant 0 : i32
    return %c0_i32, %c0_i32_0 : i32, i32
  }
  func.func @transform_5(%arg0: i32) -> (i32, i32) {
    %c0_i32 = arith.constant 0 : i32
    %c0_i32_0 = arith.constant 0 : i32
    return %arg0, %c0_i32 : i32, i32
  }
}

</mosaic_0001>

<llo_original>
// kernel: gene_classification_forward.12
$region0: #{gene_classification_forward.12}
  #allocation0 [shape = 'u32[]', space=smem, size = 0x4, offset = 0x4, fixed_abs, tag = 'smem constant byte address 0x4 - core index']
  #allocation1 [shape = 'u32[144,128]{1,0:T(1,128)}', space=vmem, size = 0x12000, scoped, tag = 'internal scratch']
  %s0 = inlined_call_operand.vmem [shape: f32[16,32], index: 0, kind: input, shape index: {}]
  %s1 = inlined_call_operand.vmem [shape: f32[1,32], index: 1, kind: input, shape index: {}]
  %s2 = inlined_call_operand.vmem [shape: f32[1,32], index: 2, kind: input, shape index: {}]
  %s3 = inlined_call_operand.vmem [shape: f32[16,32], index: 3, kind: output, shape index: {}]
  %s4 = sld [smem:[#allocation0]]
  $region45: #{gene_classification_forward.12} parent=0
    _
  %s6 = ssub.s32 1, %s4
  %s7 = scalar_select 0, %s6, %s4
  loop: start=0, step=1, limit=4
  $region2: #{gene_classification_forward.12} parent=0 // loop_pre_header
    _
  $region3: #{gene_classification_forward.12} parent=0 // loop_header
    %s9 = sphi 0, %s13
    %p10 = scmp.ge.s32.totalorder %s9, 4
    %s19 = sphi 0, %s21
    %s22 = sphi 0, %s19
    %s23 = sphi 0, %s22
    %s39 = sphi 0, %s23
    %s43 = sphi 0, %s43
    %s45 = sphi 0, %s43
    %s46 = sphi 0, %s45
    %s60 = sphi 0, %s46
    %s64 = sphi 0, %s64
    %s66 = sphi 0, %s64
    %s67 = sphi 0, %s66
    %s81 = sphi 0, %s67
    %s87 = sphi 0, %s89
    %s90 = sphi 0, %s87
    %s91 = sphi 0, %s90
    %s107 = sphi 0, %s91
  $region4: #{gene_classification_forward.12} parent=0 // loop_header_branch
    %12 = sbr.rel (%p10) target = $region8
  $region5: #{gene_classification_forward.12} parent=0 // loop_body
    %s14 = ssub.s32 %s9, 1
    %s15 = ssub.s32 %s9, 2
    %s16 = sadd.s32 %s9, 1
    %s17 = ssub.s32 %s9, %s16
    %p18 = scmp.eq.s32.totalorder %s17, 0
    %s20 = sadd.s32 %s19, 1
    %s21 = scalar_select %p18, %s19, %s20
    %p24 = pneg %p18
    %p25 = scmp.eq.s32.totalorder %s9, 1
    %p26 = por %p24, %p25
    %p27 = scmp.ne.s32.totalorder %s19, %s22
    %p28 = scmp.eq.s32.totalorder %s9, 0
    %p29 = por %p27, %p28
    %p30 = scmp.ne.s32.totalorder %s19, %s22
    %p31 = scmp.eq.s32.totalorder %s14, 1
    %p32 = por %p30, %p31
    %p33 = scmp.ne.s32.totalorder %s22, %s23
    %p34 = scmp.eq.s32.totalorder %s14, 0
    %p35 = por %p33, %p34
    %p36 = scmp.ne.s32.totalorder %s22, %s23
    %p37 = scmp.eq.s32.totalorder %s15, 1
    %p38 = por %p36, %p37
    %p40 = scmp.ne.s32.totalorder %s23, %s39
    %p41 = scmp.eq.s32.totalorder %s15, 0
    %p42 = por %p40, %p41
    %s44 = sadd.s32 %s43, 1
    %p47 = scmp.eq.s32.totalorder %s9, 1
    %p48 = scmp.ne.s32.totalorder %s43, %s45
    %p49 = scmp.eq.s32.totalorder %s9, 0
    %p50 = por %p48, %p49
    %p51 = scmp.ne.s32.totalorder %s43, %s45
    %p52 = scmp.eq.s32.totalorder %s14, 1
    %p53 = por %p51, %p52
    %p54 = scmp.ne.s32.totalorder %s45, %s46
    %p55 = scmp.eq.s32.totalorder %s14, 0
    %p56 = por %p54, %p55
    %p57 = scmp.ne.s32.totalorder %s45, %s46
    %p58 = scmp.eq.s32.totalorder %s15, 1
    %p59 = por %p57, %p58
    %p61 = scmp.ne.s32.totalorder %s46, %s60
    %p62 = scmp.eq.s32.totalorder %s15, 0
    %p63 = por %p61, %p62
    %s65 = sadd.s32 %s64, 1
    %p68 = scmp.eq.s32.totalorder %s9, 1
    %p69 = scmp.ne.s32.totalorder %s64, %s66
    %p70 = scmp.eq.s32.totalorder %s9, 0
    %p71 = por %p69, %p70
    %p72 = scmp.ne.s32.totalorder %s64, %s66
    %p73 = scmp.eq.s32.totalorder %s14, 1
    %p74 = por %p72, %p73
    %p75 = scmp.ne.s32.totalorder %s66, %s67
    %p76 = scmp.eq.s32.totalorder %s14, 0
    %p77 = por %p75, %p76
    %p78 = scmp.ne.s32.totalorder %s66, %s67
    %p79 = scmp.eq.s32.totalorder %s15, 1
    %p80 = por %p78, %p79
    %p82 = scmp.ne.s32.totalorder %s67, %s81
    %p83 = scmp.eq.s32.totalorder %s15, 0
    %p84 = por %p82, %p83
    %s85 = ssub.s32 %s9, %s16
    %p86 = scmp.eq.s32.totalorder %s85, 0
    %s88 = sadd.s32 %s87, 1
    %s89 = scalar_select %p86, %s87, %s88
    %p92 = pneg %p86
    %p93 = scmp.eq.s32.totalorder %s9, 1
    %p94 = por %p92, %p93
    %p95 = scmp.ne.s32.totalorder %s87, %s90
    %p96 = scmp.eq.s32.totalorder %s9, 0
    %p97 = por %p95, %p96
    %p98 = scmp.ne.s32.totalorder %s87, %s90
    %p99 = scmp.eq.s32.totalorder %s14, 1
    %p100 = por %p98, %p99
    %p101 = scmp.ne.s32.totalorder %s90, %s91
    %p102 = scmp.eq.s32.totalorder %s14, 0
    %p103 = por %p101, %p102
    %p104 = scmp.ne.s32.totalorder %s90, %s91
    %p105 = scmp.eq.s32.totalorder %s15, 1
    %p106 = por %p104, %p105
    %p108 = scmp.ne.s32.totalorder %s91, %s107
    %p109 = scmp.eq.s32.totalorder %s15, 0
    %p110 = por %p108, %p109
    %p111 = scmp.le.s32.totalorder 1, %s9
    %p112 = scmp.lt.s32.totalorder %s9, 3
    %p113 = pnand %p111, %p112
    %p114 = pneg %p113
    // Predicated region
    $region9: #{gene_classification_forward.12} parent=5 // pred_check
      _
    $region10: #{gene_classification_forward.12} parent=5 // pred_check_branch
      %116 = sbr.rel (%p113) target = $region12
    $region11: #{gene_classification_forward.12} parent=5 // pred_region
      %s117 = ssub.s32 %s9, 1
      // Predicated region
      $region13: #{gene_classification_forward.12} parent=11 // pred_check
        %p118 = pneg %p56
      $region14: #{gene_classification_forward.12} parent=11 // pred_check_branch
        %120 = sbr.rel (%p118) target = $region16
      $region15: #{gene_classification_forward.12} parent=11 // pred_region
        _
      $region16: #{gene_classification_forward.12} parent=11 // pred_fallthru
        _
      // Predicated region
      $region17: #{gene_classification_forward.12} parent=11 // pred_check
        %p121 = pneg %p77
      $region18: #{gene_classification_forward.12} parent=11 // pred_check_branch
        %123 = sbr.rel (%p121) target = $region20
      $region19: #{gene_classification_forward.12} parent=11 // pred_region
        _
      $region20: #{gene_classification_forward.12} parent=11 // pred_fallthru
        _
    $region12: #{gene_classification_forward.12} parent=5 // pred_fallthru
      _
    %p124 = scmp.lt.s32.totalorder %s9, 2
    // Predicated region
    $region21: #{gene_classification_forward.12} parent=5 // pred_check
      %p125 = pneg %p124
    $region22: #{gene_classification_forward.12} parent=5 // pred_check_branch
      %127 = sbr.rel (%p125) target = $region24
    $region23: #{gene_classification_forward.12} parent=5 // pred_region
      // Predicated region
      $region25: #{gene_classification_forward.12} parent=23 // pred_check
        %p128 = pneg %p29
      $region26: #{gene_classification_forward.12} parent=23 // pred_check_branch
        %130 = sbr.rel (%p128) target = $region28
      $region27: #{gene_classification_forward.12} parent=23 // pred_region
        %p131 = scmp.lt.s32.totalorder %s9, 1
        %s132 = scalar_select %p131, %s9, 1
        %s133 = smul.addr %s132, 8
        %s134 = scalar_lea.vmem %s0, %s133
      $region28: #{gene_classification_forward.12} parent=23 // pred_fallthru
        _
    $region24: #{gene_classification_forward.12} parent=5 // pred_fallthru
      _
    %p135 = scmp.le.s32.totalorder 1, %s9
    %p136 = scmp.lt.s32.totalorder %s9, 3
    %p137 = pnand %p135, %p136
    %p138 = pneg %p137
    // Predicated region
    $region29: #{gene_classification_forward.12} parent=5 // pred_check
      _
    $region30: #{gene_classification_forward.12} parent=5 // pred_check_branch
      %140 = sbr.rel (%p137) target = $region32
    $region31: #{gene_classification_forward.12} parent=5 // pred_region
      %s141 = ssub.s32 %s9, 1
      %p142 = scmp.lt.s32.totalorder %s14, 1
      %s143 = scalar_select %p142, %s14, 1
      %s144 = smul.addr %s143, 8
      %s145 = scalar_lea.vmem %s0, %s144
      %p146 = pneg %p35
      %p147 = pneg %p32
      %p148 = pneg %p56
      %p149 = pneg %p53
      %p150 = pneg %p77
      %p151 = pneg %p74
      %p152 = pneg %p103
      %p153 = pneg %p100
      %p154 = scmp.lt.s32.totalorder %s14, 1
      %s155 = scalar_select %p154, %s14, 1
      %s156 = smul.addr %s155, 8
      %s157 = scalar_lea.vmem %s3, %s156
      %p158 = scmp.lt.s32.totalorder %s14, 1
      %s159 = scalar_select %p158, %s14, 1
      %s160 = smul.addr %s159, 8
      %s161 = scalar_lea.vmem %s0, %s160
      %p162 = scmp.lt.s32.totalorder %s14, 1
      %s163 = scalar_select %p162, %s14, 1
      %s164 = smul.addr %s163, 8
      %s165 = scalar_lea.vmem %s3, %s164
      %v166 = vld [vmem:[%s161] sm:$0xff]
      %v167 = vld [vmem:[%s1] sm:$0x1]
      %v168 = vld [vmem:[%s2] sm:$0x1]
      %vm169 = vcmask 261120
      %v170 = vsel %vm169, %v166, 0.0
      %171 = vadd.xlane.f32.xlu0 %v170
      %v172 = vpop.xlane.xlu0 %171
      %v173 = vrcp.pop 32.0
      %v174 = vmul.f32 %v172, %v173
      %v175 = vsub.f32 %v166, %v174
      %v176 = vmul.f32 %v175, %v175
      %v177 = vsel %vm169, %v176, 0.0
      %178 = vadd.xlane.f32.xlu0 %v177
      %v179 = vpop.xlane.xlu0 %178
      %v180 = vmul.f32 %v179, %v173
      %v181 = vadd.f32 %v180, 1e-12
      %v182 = vrsqrt.pop %v181
      %v183 = vmul.f32 %v175, %v182
      %v185 = vlaneseq
      %v186 = vshrl.u32 %v185, 7
      %v187 = vsub.s32 0, %v186
      %v188 = vrot.slane %v167, %v187
      %v190 = vmul.f32 %v183, %v188
      %v192 = vlaneseq
      %v193 = vshrl.u32 %v192, 7
      %v194 = vsub.s32 0, %v193
      %v195 = vrot.slane %v168, %v194
      %v197 = vadd.f32 %v190, %v195
      %198 = vst.msk [vmem:[%s165] sm:$0xff] %vm169, %v197
      %p199 = scmp.lt.s32.totalorder %s14, 1
      %s200 = scalar_select %p199, %s14, 1
      %s201 = smul.addr %s200, 8
      %s202 = scalar_lea.vmem %s3, %s201
      // Predicated region
      $region33: #{gene_classification_forward.12} parent=31 // pred_check
        %p203 = pneg %p100
      $region34: #{gene_classification_forward.12} parent=31 // pred_check_branch
        %205 = sbr.rel (%p203) target = $region36
      $region35: #{gene_classification_forward.12} parent=31 // pred_region
        _
      $region36: #{gene_classification_forward.12} parent=31 // pred_fallthru
        _
    $region32: #{gene_classification_forward.12} parent=5 // pred_fallthru
      _
    %p206 = scmp.le.s32.totalorder 2, %s9
    // Predicated region
    $region37: #{gene_classification_forward.12} parent=5 // pred_check
      %p207 = pneg %p206
    $region38: #{gene_classification_forward.12} parent=5 // pred_check_branch
      %209 = sbr.rel (%p207) target = $region40
    $region39: #{gene_classification_forward.12} parent=5 // pred_region
      %s210 = ssub.s32 %s9, 2
      // Predicated region
      $region41: #{gene_classification_forward.12} parent=39 // pred_check
        %p211 = pneg %p106
      $region42: #{gene_classification_forward.12} parent=39 // pred_check_branch
        %213 = sbr.rel (%p211) target = $region44
      $region43: #{gene_classification_forward.12} parent=39 // pred_region
        %p214 = scmp.lt.s32.totalorder %s15, 1
        %s215 = scalar_select %p214, %s15, 1
        %s216 = smul.addr %s215, 8
        %s217 = scalar_lea.vmem %s3, %s216
      $region44: #{gene_classification_forward.12} parent=39 // pred_fallthru
        _
    $region40: #{gene_classification_forward.12} parent=5 // pred_fallthru
      _
  $region6: #{gene_classification_forward.12} parent=0 // loop_footer
    %s13 = sadd.s32 1, %s9
  $region7: #{gene_classification_forward.12} parent=0 // loop_footer_branch
    %8 = sbr.rel target = $region3
  $region8: #{gene_classification_forward.12} parent=0 // loop_exit
    _

// kernel: gene_classification_forward.15
$region0: #{gene_classification_forward.15}
  #allocation0 [shape = 'u32[]', space=smem, size = 0x4, offset = 0x4, fixed_abs, tag = 'smem constant byte address 0x4 - core index']
  #allocation1 [shape = 'u32[144,128]{1,0:T(1,128)}', space=vmem, size = 0x12000, scoped, tag = 'internal scratch']
  %s0 = inlined_call_operand.vmem [shape: f32[16,32], index: 0, kind: input, shape index: {}]
  %s1 = inlined_call_operand.vmem [shape: bf16[32,32], index: 1, kind: input, shape index: {}]
  %s2 = inlined_call_operand.vmem [shape: f32[1,32], index: 2, kind: input, shape index: {}]
  %s3 = inlined_call_operand.vmem [shape: f32[16,32], index: 3, kind: input, shape index: {}]
  %s4 = inlined_call_operand.vmem [shape: f32[1,32], index: 4, kind: input, shape index: {}]
  %s5 = inlined_call_operand.vmem [shape: f32[1,32], index: 5, kind: input, shape index: {}]
  %s6 = inlined_call_operand.vmem [shape: f32[16,32], index: 6, kind: output, shape index: {}]
  %s7 = sld [smem:[#allocation0]]
  $region57: #{gene_classification_forward.15} parent=0
    _
  %s9 = ssub.s32 1, %s7
  %s10 = scalar_select 0, %s9, %s7
  loop: start=0, step=1, limit=4
  $region2: #{gene_classification_forward.15} parent=0 // loop_pre_header
    _
  $region3: #{gene_classification_forward.15} parent=0 // loop_header
    %s12 = sphi 0, %s16
    %p13 = scmp.ge.s32.totalorder %s12, 4
    %s22 = sphi 0, %s24
    %s25 = sphi 0, %s22
    %s26 = sphi 0, %s25
    %s42 = sphi 0, %s26
    %s46 = sphi 0, %s46
    %s48 = sphi 0, %s46
    %s49 = sphi 0, %s48
    %s63 = sphi 0, %s49
    %s67 = sphi 0, %s67
    %s69 = sphi 0, %s67
    %s70 = sphi 0, %s69
    %s84 = sphi 0, %s70
    %s90 = sphi 0, %s92
    %s93 = sphi 0, %s90
    %s94 = sphi 0, %s93
    %s110 = sphi 0, %s94
    %s114 = sphi 0, %s114
    %s116 = sphi 0, %s114
    %s117 = sphi 0, %s116
    %s131 = sphi 0, %s117
    %s135 = sphi 0, %s135
    %s137 = sphi 0, %s135
    %s138 = sphi 0, %s137
    %s152 = sphi 0, %s138
    %s158 = sphi 0, %s160
    %s161 = sphi 0, %s158
    %s162 = sphi 0, %s161
    %s178 = sphi 0, %s162
  $region4: #{gene_classification_forward.15} parent=0 // loop_header_branch
    %15 = sbr.rel (%p13) target = $region8
  $region5: #{gene_classification_forward.15} parent=0 // loop_body
    %s17 = ssub.s32 %s12, 1
    %s18 = ssub.s32 %s12, 2
    %s19 = sadd.s32 %s12, 1
    %s20 = ssub.s32 %s12, %s19
    %p21 = scmp.eq.s32.totalorder %s20, 0
    %s23 = sadd.s32 %s22, 1
    %s24 = scalar_select %p21, %s22, %s23
    %p27 = pneg %p21
    %p28 = scmp.eq.s32.totalorder %s12, 1
    %p29 = por %p27, %p28
    %p30 = scmp.ne.s32.totalorder %s22, %s25
    %p31 = scmp.eq.s32.totalorder %s12, 0
    %p32 = por %p30, %p31
    %p33 = scmp.ne.s32.totalorder %s22, %s25
    %p34 = scmp.eq.s32.totalorder %s17, 1
    %p35 = por %p33, %p34
    %p36 = scmp.ne.s32.totalorder %s25, %s26
    %p37 = scmp.eq.s32.totalorder %s17, 0
    %p38 = por %p36, %p37
    %p39 = scmp.ne.s32.totalorder %s25, %s26
    %p40 = scmp.eq.s32.totalorder %s18, 1
    %p41 = por %p39, %p40
    %p43 = scmp.ne.s32.totalorder %s26, %s42
    %p44 = scmp.eq.s32.totalorder %s18, 0
    %p45 = por %p43, %p44
    %s47 = sadd.s32 %s46, 1
    %p50 = scmp.eq.s32.totalorder %s12, 1
    %p51 = scmp.ne.s32.totalorder %s46, %s48
    %p52 = scmp.eq.s32.totalorder %s12, 0
    %p53 = por %p51, %p52
    %p54 = scmp.ne.s32.totalorder %s46, %s48
    %p55 = scmp.eq.s32.totalorder %s17, 1
    %p56 = por %p54, %p55
    %p57 = scmp.ne.s32.totalorder %s48, %s49
    %p58 = scmp.eq.s32.totalorder %s17, 0
    %p59 = por %p57, %p58
    %p60 = scmp.ne.s32.totalorder %s48, %s49
    %p61 = scmp.eq.s32.totalorder %s18, 1
    %p62 = por %p60, %p61
    %p64 = scmp.ne.s32.totalorder %s49, %s63
    %p65 = scmp.eq.s32.totalorder %s18, 0
    %p66 = por %p64, %p65
    %s68 = sadd.s32 %s67, 1
    %p71 = scmp.eq.s32.totalorder %s12, 1
    %p72 = scmp.ne.s32.totalorder %s67, %s69
    %p73 = scmp.eq.s32.totalorder %s12, 0
    %p74 = por %p72, %p73
    %p75 = scmp.ne.s32.totalorder %s67, %s69
    %p76 = scmp.eq.s32.totalorder %s17, 1
    %p77 = por %p75, %p76
    %p78 = scmp.ne.s32.totalorder %s69, %s70
    %p79 = scmp.eq.s32.totalorder %s17, 0
    %p80 = por %p78, %p79
    %p81 = scmp.ne.s32.totalorder %s69, %s70
    %p82 = scmp.eq.s32.totalorder %s18, 1
    %p83 = por %p81, %p82
    %p85 = scmp.ne.s32.totalorder %s70, %s84
    %p86 = scmp.eq.s32.totalorder %s18, 0
    %p87 = por %p85, %p86
    %s88 = ssub.s32 %s12, %s19
    %p89 = scmp.eq.s32.totalorder %s88, 0
    %s91 = sadd.s32 %s90, 1
    %s92 = scalar_select %p89, %s90, %s91
    %p95 = pneg %p89
    %p96 = scmp.eq.s32.totalorder %s12, 1
    %p97 = por %p95, %p96
    %p98 = scmp.ne.s32.totalorder %s90, %s93
    %p99 = scmp.eq.s32.totalorder %s12, 0
    %p100 = por %p98, %p99
    %p101 = scmp.ne.s32.totalorder %s90, %s93
    %p102 = scmp.eq.s32.totalorder %s17, 1
    %p103 = por %p101, %p102
    %p104 = scmp.ne.s32.totalorder %s93, %s94
    %p105 = scmp.eq.s32.totalorder %s17, 0
    %p106 = por %p104, %p105
    %p107 = scmp.ne.s32.totalorder %s93, %s94
    %p108 = scmp.eq.s32.totalorder %s18, 1
    %p109 = por %p107, %p108
    %p111 = scmp.ne.s32.totalorder %s94, %s110
    %p112 = scmp.eq.s32.totalorder %s18, 0
    %p113 = por %p111, %p112
    %s115 = sadd.s32 %s114, 1
    %p118 = scmp.eq.s32.totalorder %s12, 1
    %p119 = scmp.ne.s32.totalorder %s114, %s116
    %p120 = scmp.eq.s32.totalorder %s12, 0
    %p121 = por %p119, %p120
    %p122 = scmp.ne.s32.totalorder %s114, %s116
    %p123 = scmp.eq.s32.totalorder %s17, 1
    %p124 = por %p122, %p123
    %p125 = scmp.ne.s32.totalorder %s116, %s117
    %p126 = scmp.eq.s32.totalorder %s17, 0
    %p127 = por %p125, %p126
    %p128 = scmp.ne.s32.totalorder %s116, %s117
    %p129 = scmp.eq.s32.totalorder %s18, 1
    %p130 = por %p128, %p129
    %p132 = scmp.ne.s32.totalorder %s117, %s131
    %p133 = scmp.eq.s32.totalorder %s18, 0
    %p134 = por %p132, %p133
    %s136 = sadd.s32 %s135, 1
    %p139 = scmp.eq.s32.totalorder %s12, 1
    %p140 = scmp.ne.s32.totalorder %s135, %s137
    %p141 = scmp.eq.s32.totalorder %s12, 0
    %p142 = por %p140, %p141
    %p143 = scmp.ne.s32.totalorder %s135, %s137
    %p144 = scmp.eq.s32.totalorder %s17, 1
    %p145 = por %p143, %p144
    %p146 = scmp.ne.s32.totalorder %s137, %s138
    %p147 = scmp.eq.s32.totalorder %s17, 0
    %p148 = por %p146, %p147
    %p149 = scmp.ne.s32.totalorder %s137, %s138
    %p150 = scmp.eq.s32.totalorder %s18, 1
    %p151 = por %p149, %p150
    %p153 = scmp.ne.s32.totalorder %s138, %s152
    %p154 = scmp.eq.s32.totalorder %s18, 0
    %p155 = por %p153, %p154
    %s156 = ssub.s32 %s12, %s19
    %p157 = scmp.eq.s32.totalorder %s156, 0
    %s159 = sadd.s32 %s158, 1
    %s160 = scalar_select %p157, %s158, %s159
    %p163 = pneg %p157
    %p164 = scmp.eq.s32.totalorder %s12, 1
    %p165 = por %p163, %p164
    %p166 = scmp.ne.s32.totalorder %s158, %s161
    %p167 = scmp.eq.s32.totalorder %s12, 0
    %p168 = por %p166, %p167
    %p169 = scmp.ne.s32.totalorder %s158, %s161
    %p170 = scmp.eq.s32.totalorder %s17, 1
    %p171 = por %p169, %p170
    %p172 = scmp.ne.s32.totalorder %s161, %s162
    %p173 = scmp.eq.s32.totalorder %s17, 0
    %p174 = por %p172, %p173
    %p175 = scmp.ne.s32.totalorder %s161, %s162
    %p176 = scmp.eq.s32.totalorder %s18, 1
    %p177 = por %p175, %p176
    %p179 = scmp.ne.s32.totalorder %s162, %s178
    %p180 = scmp.eq.s32.totalorder %s18, 0
    %p181 = por %p179, %p180
    %p182 = scmp.le.s32.totalorder 1, %s12
    %p183 = scmp.lt.s32.totalorder %s12, 3
    %p184 = pnand %p182, %p183
    %p185 = pneg %p184
    // Predicated region
    $region9: #{gene_classification_forward.15} parent=5 // pred_check
      _
    $region10: #{gene_classification_forward.15} parent=5 // pred_check_branch
      %187 = sbr.rel (%p184) target = $region12
    $region11: #{gene_classification_forward.15} parent=5 // pred_region
      %s188 = ssub.s32 %s12, 1
      // Predicated region
      $region13: #{gene_classification_forward.15} parent=11 // pred_check
        %p189 = pneg %p59
      $region14: #{gene_classification_forward.15} parent=11 // pred_check_branch
        %191 = sbr.rel (%p189) target = $region16
      $region15: #{gene_classification_forward.15} parent=11 // pred_region
        _
      $region16: #{gene_classification_forward.15} parent=11 // pred_fallthru
        _
      // Predicated region
      $region17: #{gene_classification_forward.15} parent=11 // pred_check
        %p192 = pneg %p80
      $region18: #{gene_classification_forward.15} parent=11 // pred_check_branch
        %194 = sbr.rel (%p192) target = $region20
      $region19: #{gene_classification_forward.15} parent=11 // pred_region
        _
      $region20: #{gene_classification_forward.15} parent=11 // pred_fallthru
        _
      // Predicated region
      $region21: #{gene_classification_forward.15} parent=11 // pred_check
        %p195 = pneg %p127
      $region22: #{gene_classification_forward.15} parent=11 // pred_check_branch
        %197 = sbr.rel (%p195) target = $region24
      $region23: #{gene_classification_forward.15} parent=11 // pred_region
        _
      $region24: #{gene_classification_forward.15} parent=11 // pred_fallthru
        _
      // Predicated region
      $region25: #{gene_classification_forward.15} parent=11 // pred_check
        %p198 = pneg %p148
      $region26: #{gene_classification_forward.15} parent=11 // pred_check_branch
        %200 = sbr.rel (%p198) target = $region28
      $region27: #{gene_classification_forward.15} parent=11 // pred_region
        _
      $region28: #{gene_classification_forward.15} parent=11 // pred_fallthru
        _
    $region12: #{gene_classification_forward.15} parent=5 // pred_fallthru
      _
    %p201 = scmp.lt.s32.totalorder %s12, 2
    // Predicated region
    $region29: #{gene_classification_forward.15} parent=5 // pred_check
      %p202 = pneg %p201
    $region30: #{gene_classification_forward.15} parent=5 // pred_check_branch
      %204 = sbr.rel (%p202) target = $region32
    $region31: #{gene_classification_forward.15} parent=5 // pred_region
      // Predicated region
      $region33: #{gene_classification_forward.15} parent=31 // pred_check
        %p205 = pneg %p32
      $region34: #{gene_classification_forward.15} parent=31 // pred_check_branch
        %207 = sbr.rel (%p205) target = $region36
      $region35: #{gene_classification_forward.15} parent=31 // pred_region
        %p208 = scmp.lt.s32.totalorder %s12, 1
        %s209 = scalar_select %p208, %s12, 1
        %s210 = smul.addr %s209, 8
        %s211 = scalar_lea.vmem %s0, %s210
      $region36: #{gene_classification_forward.15} parent=31 // pred_fallthru
        _
      // Predicated region
      $region37: #{gene_classification_forward.15} parent=31 // pred_check
        %p212 = pneg %p100
      $region38: #{gene_classification_forward.15} parent=31 // pred_check_branch
        %214 = sbr.rel (%p212) target = $region40
      $region39: #{gene_classification_forward.15} parent=31 // pred_region
        %p215 = scmp.lt.s32.totalorder %s12, 1
        %s216 = scalar_select %p215, %s12, 1
        %s217 = smul.addr %s216, 8
        %s218 = scalar_lea.vmem %s3, %s217
      $region40: #{gene_classification_forward.15} parent=31 // pred_fallthru
        _
    $region32: #{gene_classification_forward.15} parent=5 // pred_fallthru
      _
    %p219 = scmp.le.s32.totalorder 1, %s12
    %p220 = scmp.lt.s32.totalorder %s12, 3
    %p221 = pnand %p219, %p220
    %p222 = pneg %p221
    // Predicated region
    $region41: #{gene_classification_forward.15} parent=5 // pred_check
      _
    $region42: #{gene_classification_forward.15} parent=5 // pred_check_branch
      %224 = sbr.rel (%p221) target = $region44
    $region43: #{gene_classification_forward.15} parent=5 // pred_region
      %s225 = ssub.s32 %s12, 1
      %p226 = scmp.lt.s32.totalorder %s17, 1
      %s227 = scalar_select %p226, %s17, 1
      %s228 = smul.addr %s227, 8
      %s229 = scalar_lea.vmem %s0, %s228
      %p230 = pneg %p38
      %p231 = pneg %p35
      %p232 = pneg %p59
      %p233 = pneg %p56
      %p234 = pneg %p80
      %p235 = pneg %p77
      %p236 = scmp.lt.s32.totalorder %s17, 1
      %s237 = scalar_select %p236, %s17, 1
      %s238 = smul.addr %s237, 8
      %s239 = scalar_lea.vmem %s3, %s238
      %p240 = pneg %p106
      %p241 = pneg %p103
      %p242 = pneg %p127
      %p243 = pneg %p124
      %p244 = pneg %p148
      %p245 = pneg %p145
      %p246 = pneg %p174
      %p247 = pneg %p171
      %p248 = scmp.lt.s32.totalorder %s17, 1
      %s249 = scalar_select %p248, %s17, 1
      %s250 = smul.addr %s249, 8
      %s251 = scalar_lea.vmem %s6, %s250
      %p252 = scmp.lt.s32.totalorder %s17, 1
      %s253 = scalar_select %p252, %s17, 1
      %s254 = smul.addr %s253, 8
      %s255 = scalar_lea.vmem %s0, %s254
      %p256 = scmp.lt.s32.totalorder %s17, 1
      %s257 = scalar_select %p256, %s17, 1
      %s258 = smul.addr %s257, 8
      %s259 = scalar_lea.vmem %s3, %s258
      %p260 = scmp.lt.s32.totalorder %s17, 1
      %s261 = scalar_select %p260, %s17, 1
      %s262 = smul.addr %s261, 8
      %s263 = scalar_lea.vmem %s6, %s262
      %v265 = vld [vmem:[%s255] sm:$0xff]
      %v266 = vpack.c.bf16 %v265, %v265
      %v267 = vld [vmem:[%s1] sm:$0xf]
      %v268 = vld [vmem:[%s1 + $0x4] sm:$0xf]
      %v269 = vld [vmem:[%s1 + $0x8] sm:$0xf]
      %v270 = vld [vmem:[%s1 + $0xc] sm:$0xf]
      %v271 = vld [vmem:[%s2] sm:$0x1]
      %v273 = vlaneseq
      %v274 = vshrl.u32 %v273, 7
      %v275 = vsub.s32 0, %v274
      %v276 = vrot.slane %v271, %v275
      %v282 = vunpack.c.l.b16 %v267
      %v283 = vunpack.c.l.b16 %v268
      %v284 = vunpack.c.l.b16 %v269
      %v285 = vunpack.c.l.b16 %v270
      %v286 = vpack.c.b16 %v283, %v282
      %v287 = vpack.c.b16 %v285, %v284
      %vm290 = vcmask 261120
      %v292 = vsel %vm290, %v266, 0
      %294 = vmatprep.subr.bf16.mxu0 0
      %295 = vmatpush1.bf16.msra.mxu0 %v286
      %296 = vmatprep.subr.bf16.mxu0 0
      %297 = vmatpush1.bf16.msra.mxu0 %v287
      %298 = vmatprep.subr.bf16.mxu0 0
      %299 = vmatpush1.bf16.msra.mxu0 0
      %300 = vmatprep.subr.bf16.mxu0 0
      %301 = vmatpush1.bf16.msra.mxu0 0
      %302 = vmatprep.subr.bf16.mxu0 0
      %303 = vmatpush1.bf16.msra.mxu0 0
      %304 = vmatprep.subr.bf16.mxu0 0
      %305 = vmatpush1.bf16.msra.mxu0 0
      %306 = vmatprep.subr.bf16.mxu0 0
      %307 = vmatpush1.bf16.msra.mxu0 0
      %308 = vmatprep.subr.bf16.mxu0 0
      %309 = vmatpush1.bf16.msra.mxu0 0
      %310 = vmatprep.subr.bf16.mxu0 0
      %311 = vmatpush1.bf16.msra.mxu0 0
      %312 = vmatprep.subr.bf16.mxu0 0
      %313 = vmatpush1.bf16.msra.mxu0 0
      %314 = vmatprep.subr.bf16.mxu0 0
      %315 = vmatpush1.bf16.msra.mxu0 0
      %316 = vmatprep.subr.bf16.mxu0 0
      %317 = vmatpush1.bf16.msra.mxu0 0
      %318 = vmatprep.subr.bf16.mxu0 0
      %319 = vmatpush1.bf16.msra.mxu0 0
      %320 = vmatprep.subr.bf16.mxu0 0
      %321 = vmatpush1.bf16.msra.mxu0 0
      %322 = vmatprep.subr.bf16.mxu0 0
      %323 = vmatpush1.bf16.msra.mxu0 0
      %324 = vmatprep.subr.bf16.mxu0 0
      %325 = vmatpush1.bf16.msra.mxu0 0
      %326 = vmatprep.mubr.bf16.mxu0 0
      %327 = vmatmul.mubr.bf16.gmra.mrb[0].mxu0 %v292
      %v328 = vpop.f32.mrb[0].mxu0
      %v329 = vadd.f32 %v276, %v328
      %v330 = vpop.f32.mrb[0].mxu0
      %v331 = vpop.f32.mrb[0].mxu0
      %v332 = vpop.f32.mrb[0].mxu0
      %333 = vdwg.mxu0
      %v334 = vld [vmem:[%s259] sm:$0xff]
      %v335 = vadd.f32 %v329, %v334
      %v336 = vld [vmem:[%s4] sm:$0x1]
      %v337 = vld [vmem:[%s5] sm:$0x1]
      %v338 = vsel %vm290, %v335, 0.0
      %339 = vadd.xlane.f32.xlu0 %v338
      %v340 = vpop.xlane.xlu0 %339
      %v341 = vrcp.pop 32.0
      %v342 = vmul.f32 %v340, %v341
      %v343 = vsub.f32 %v335, %v342
      %v344 = vmul.f32 %v343, %v343
      %v345 = vsel %vm290, %v344, 0.0
      %346 = vadd.xlane.f32.xlu0 %v345
      %v347 = vpop.xlane.xlu0 %346
      %v348 = vmul.f32 %v347, %v341
      %v349 = vadd.f32 %v348, 1e-12
      %v350 = vrsqrt.pop %v349
      %v351 = vmul.f32 %v343, %v350
      %v353 = vlaneseq
      %v354 = vshrl.u32 %v353, 7
      %v355 = vsub.s32 0, %v354
      %v356 = vrot.slane %v336, %v355
      %v358 = vmul.f32 %v351, %v356
      %v360 = vlaneseq
      %v361 = vshrl.u32 %v360, 7
      %v362 = vsub.s32 0, %v361
      %v363 = vrot.slane %v337, %v362
      %v365 = vadd.f32 %v358, %v363
      %366 = vst.msk [vmem:[%s263] sm:$0xff] %vm290, %v365
      %p367 = scmp.lt.s32.totalorder %s17, 1
      %s368 = scalar_select %p367, %s17, 1
      %s369 = smul.addr %s368, 8
      %s370 = scalar_lea.vmem %s6, %s369
      // Predicated region
      $region45: #{gene_classification_forward.15} parent=43 // pred_check
        %p371 = pneg %p171
      $region46: #{gene_classification_forward.15} parent=43 // pred_check_branch
        %373 = sbr.rel (%p371) target = $region48
      $region47: #{gene_classification_forward.15} parent=43 // pred_region
        _
      $region48: #{gene_classification_forward.15} parent=43 // pred_fallthru
        _
    $region44: #{gene_classification_forward.15} parent=5 // pred_fallthru
      _
    %p374 = scmp.le.s32.totalorder 2, %s12
    // Predicated region
    $region49: #{gene_classification_forward.15} parent=5 // pred_check
      %p375 = pneg %p374
    $region50: #{gene_classification_forward.15} parent=5 // pred_check_branch
      %377 = sbr.rel (%p375) target = $region52
    $region51: #{gene_classification_forward.15} parent=5 // pred_region
      %s378 = ssub.s32 %s12, 2
      // Predicated region
      $region53: #{gene_classification_forward.15} parent=51 // pred_check
        %p379 = pneg %p177
      $region54: #{gene_classification_forward.15} parent=51 // pred_check_branch
        %381 = sbr.rel (%p379) target = $region56
      $region55: #{gene_classification_forward.15} parent=51 // pred_region
        %p382 = scmp.lt.s32.totalorder %s18, 1
        %s383 = scalar_select %p382, %s18, 1
        %s384 = smul.addr %s383, 8
        %s385 = scalar_lea.vmem %s6, %s384
      $region56: #{gene_classification_forward.15} parent=51 // pred_fallthru
        _
    $region52: #{gene_classification_forward.15} parent=5 // pred_fallthru
      _
  $region6: #{gene_classification_forward.15} parent=0 // loop_footer
    %s16 = sadd.s32 1, %s12
  $region7: #{gene_classification_forward.15} parent=0 // loop_footer_branch
    %11 = sbr.rel target = $region3
  $region8: #{gene_classification_forward.15} parent=0 // loop_exit
    _

// kernel: gene_classification_forward.14
$region0: #{gene_classification_forward.14}
  #allocation0 [shape = 'u32[]', space=smem, size = 0x4, offset = 0x4, fixed_abs, tag = 'smem constant byte address 0x4 - core index']
  #allocation1 [shape = 'u32[144,128]{1,0:T(1,128)}', space=vmem, size = 0x12000, scoped, tag = 'internal scratch']
  %s0 = inlined_call_operand.vmem [shape: f32[2,8,128], index: 0, kind: input, shape index: {}]
  %s1 = inlined_call_operand.vmem [shape: f32[2,8,32], index: 1, kind: output, shape index: {}]
  %s2 = sld [smem:[#allocation0]]
  $region37: #{gene_classification_forward.14} parent=0
    _
  %s4 = ssub.s32 1, %s2
  %s5 = scalar_select 0, %s4, %s2
  loop: start=0, step=1, limit=4
  $region2: #{gene_classification_forward.14} parent=0 // loop_pre_header
    _
  $region3: #{gene_classification_forward.14} parent=0 // loop_header
    %s7 = sphi 0, %s11
    %p8 = scmp.ge.s32.totalorder %s7, 4
    %s17 = sphi 0, %s19
    %s20 = sphi 0, %s17
    %s21 = sphi 0, %s20
    %s37 = sphi 0, %s21
    %s43 = sphi 0, %s45
    %s46 = sphi 0, %s43
    %s47 = sphi 0, %s46
    %s63 = sphi 0, %s47
  $region4: #{gene_classification_forward.14} parent=0 // loop_header_branch
    %10 = sbr.rel (%p8) target = $region8
  $region5: #{gene_classification_forward.14} parent=0 // loop_body
    %s12 = ssub.s32 %s7, 1
    %s13 = ssub.s32 %s7, 2
    %s14 = sadd.s32 %s7, 1
    %s15 = ssub.s32 %s7, %s14
    %p16 = scmp.eq.s32.totalorder %s15, 0
    %s18 = sadd.s32 %s17, 1
    %s19 = scalar_select %p16, %s17, %s18
    %p22 = pneg %p16
    %p23 = scmp.eq.s32.totalorder %s7, 1
    %p24 = por %p22, %p23
    %p25 = scmp.ne.s32.totalorder %s17, %s20
    %p26 = scmp.eq.s32.totalorder %s7, 0
    %p27 = por %p25, %p26
    %p28 = scmp.ne.s32.totalorder %s17, %s20
    %p29 = scmp.eq.s32.totalorder %s12, 1
    %p30 = por %p28, %p29
    %p31 = scmp.ne.s32.totalorder %s20, %s21
    %p32 = scmp.eq.s32.totalorder %s12, 0
    %p33 = por %p31, %p32
    %p34 = scmp.ne.s32.totalorder %s20, %s21
    %p35 = scmp.eq.s32.totalorder %s13, 1
    %p36 = por %p34, %p35
    %p38 = scmp.ne.s32.totalorder %s21, %s37
    %p39 = scmp.eq.s32.totalorder %s13, 0
    %p40 = por %p38, %p39
    %s41 = ssub.s32 %s7, %s14
    %p42 = scmp.eq.s32.totalorder %s41, 0
    %s44 = sadd.s32 %s43, 1
    %s45 = scalar_select %p42, %s43, %s44
    %p48 = pneg %p42
    %p49 = scmp.eq.s32.totalorder %s7, 1
    %p50 = por %p48, %p49
    %p51 = scmp.ne.s32.totalorder %s43, %s46
    %p52 = scmp.eq.s32.totalorder %s7, 0
    %p53 = por %p51, %p52
    %p54 = scmp.ne.s32.totalorder %s43, %s46
    %p55 = scmp.eq.s32.totalorder %s12, 1
    %p56 = por %p54, %p55
    %p57 = scmp.ne.s32.totalorder %s46, %s47
    %p58 = scmp.eq.s32.totalorder %s12, 0
    %p59 = por %p57, %p58
    %p60 = scmp.ne.s32.totalorder %s46, %s47
    %p61 = scmp.eq.s32.totalorder %s13, 1
    %p62 = por %p60, %p61
    %p64 = scmp.ne.s32.totalorder %s47, %s63
    %p65 = scmp.eq.s32.totalorder %s13, 0
    %p66 = por %p64, %p65
    %p67 = scmp.le.s32.totalorder 1, %s7
    %p68 = scmp.lt.s32.totalorder %s7, 3
    %p69 = pnand %p67, %p68
    %p70 = pneg %p69
    // Predicated region
    $region9: #{gene_classification_forward.14} parent=5 // pred_check
      _
    $region10: #{gene_classification_forward.14} parent=5 // pred_check_branch
      %72 = sbr.rel (%p69) target = $region12
    $region11: #{gene_classification_forward.14} parent=5 // pred_region
      %s73 = ssub.s32 %s7, 1
    $region12: #{gene_classification_forward.14} parent=5 // pred_fallthru
      _
    %p74 = scmp.lt.s32.totalorder %s7, 2
    // Predicated region
    $region13: #{gene_classification_forward.14} parent=5 // pred_check
      %p75 = pneg %p74
    $region14: #{gene_classification_forward.14} parent=5 // pred_check_branch
      %77 = sbr.rel (%p75) target = $region16
    $region15: #{gene_classification_forward.14} parent=5 // pred_region
      // Predicated region
      $region17: #{gene_classification_forward.14} parent=15 // pred_check
        %p78 = pneg %p27
      $region18: #{gene_classification_forward.14} parent=15 // pred_check_branch
        %80 = sbr.rel (%p78) target = $region20
      $region19: #{gene_classification_forward.14} parent=15 // pred_region
        %p81 = scmp.lt.s32.totalorder %s7, 1
        %s82 = scalar_select %p81, %s7, 1
        %s83 = smul.addr %s82, 8
        %s84 = scalar_lea.vmem %s0, %s83
      $region20: #{gene_classification_forward.14} parent=15 // pred_fallthru
        _
    $region16: #{gene_classification_forward.14} parent=5 // pred_fallthru
      _
    %p85 = scmp.le.s32.totalorder 1, %s7
    %p86 = scmp.lt.s32.totalorder %s7, 3
    %p87 = pnand %p85, %p86
    %p88 = pneg %p87
    // Predicated region
    $region21: #{gene_classification_forward.14} parent=5 // pred_check
      _
    $region22: #{gene_classification_forward.14} parent=5 // pred_check_branch
      %90 = sbr.rel (%p87) target = $region24
    $region23: #{gene_classification_forward.14} parent=5 // pred_region
      %s91 = ssub.s32 %s7, 1
      %p92 = scmp.lt.s32.totalorder %s12, 1
      %s93 = scalar_select %p92, %s12, 1
      %s94 = smul.addr %s93, 8
      %s95 = scalar_lea.vmem %s0, %s94
      %p96 = pneg %p33
      %p97 = pneg %p30
      %p98 = pneg %p59
      %p99 = pneg %p56
      %p100 = scmp.lt.s32.totalorder %s12, 1
      %s101 = scalar_select %p100, %s12, 1
      %s102 = smul.addr %s101, 8
      %s103 = scalar_lea.vmem %s1, %s102
      %p104 = scmp.lt.s32.totalorder %s12, 1
      %s105 = scalar_select %p104, %s12, 1
      %s106 = smul.addr %s105, 8
      %s107 = scalar_lea.vmem %s0, %s106
      %p108 = scmp.lt.s32.totalorder %s12, 1
      %s109 = scalar_select %p108, %s12, 1
      %s110 = smul.addr %s109, 8
      %s111 = scalar_lea.vmem %s1, %s110
      %v113 = vld [vmem:[%s107] sm:$0xff]
      %v114 = vmul.f32 %v113, 0.35355338
      %v115 = vpack.c.bf16 %v114, %v114
      %v116 = vpack.c.bf16 %v113, %v113
      %118 = vrot.lane.b32.xlu0 %v116, 96
      %v119 = vpop.permute.xlu0 %118
      %vm120 = vcmask 64512
      %v122 = vsel %vm120, %v115, 0
      %v125 = vsel %vm120, %v119, 0
      %127 = vmatprep.subr.bf16.mxu0 0
      %128 = vmatpush1.bf16.xpose.msra.mxu0 %v125
      %129 = vmatprep.subr.bf16.mxu0 0
      %130 = vmatpush1.bf16.xpose.msra.mxu0 0
      %131 = vmatprep.subr.bf16.mxu0 0
      %132 = vmatpush1.bf16.xpose.msra.mxu0 0
      %133 = vmatprep.subr.bf16.mxu0 0
      %134 = vmatpush1.bf16.xpose.msra.mxu0 0
      %135 = vmatprep.subr.bf16.mxu0 0
      %136 = vmatpush1.bf16.xpose.msra.mxu0 0
      %137 = vmatprep.subr.bf16.mxu0 0
      %138 = vmatpush1.bf16.xpose.msra.mxu0 0
      %139 = vmatprep.subr.bf16.mxu0 0
      %140 = vmatpush1.bf16.xpose.msra.mxu0 0
      %141 = vmatprep.subr.bf16.mxu0 0
      %142 = vmatpush1.bf16.xpose.msra.mxu0 0
      %143 = vmatprep.subr.bf16.mxu0 0
      %144 = vmatpush1.bf16.xpose.msra.mxu0 0
      %145 = vmatprep.subr.bf16.mxu0 0
      %146 = vmatpush1.bf16.xpose.msra.mxu0 0
      %147 = vmatprep.subr.bf16.mxu0 0
      %148 = vmatpush1.bf16.xpose.msra.mxu0 0
      %149 = vmatprep.subr.bf16.mxu0 0
      %150 = vmatpush1.bf16.xpose.msra.mxu0 0
      %151 = vmatprep.subr.bf16.mxu0 0
      %152 = vmatpush1.bf16.xpose.msra.mxu0 0
      %153 = vmatprep.subr.bf16.mxu0 0
      %154 = vmatpush1.bf16.xpose.msra.mxu0 0
      %155 = vmatprep.subr.bf16.mxu0 0
      %156 = vmatpush1.bf16.xpose.msra.mxu0 0
      %157 = vmatprep.subr.bf16.mxu0 0
      %158 = vmatpush1.bf16.xpose.msra.mxu0 0
      %159 = vmatprep.mubr.bf16.mxu0 0
      %160 = vmatmul.mubr.bf16.gmra.mrb[0].mxu0 %v122
      %v161 = vpop.f32.mrb[0].mxu0
      %v162 = vadd.f32 0.0, %v161
      %v163 = vpop.f32.mrb[0].mxu0
      %v164 = vpop.f32.mrb[0].mxu0
      %v165 = vpop.f32.mrb[0].mxu0
      %166 = vdwg.mxu0
      %v167 = vsel %vm120, %v162, -inf
      %168 = vmax.xlane.f32.xlu0 %v167
      %v169 = vpop.xlane.xlu0 %168
      %v170 = vsub.f32 %v162, %v169
      %v171 = vmul.f32 %v170, 1.442695
      %v172 = vpow.pop %v171
      %v173 = vsel %vm120, %v172, 0.0
      %174 = vadd.xlane.f32.xlu0 %v173
      %v175 = vpop.xlane.xlu0 %174
      %v176 = vrcp.pop %v175
      %v177 = vmul.f32 %v172, %v176
      %v178 = vpack.c.bf16 %v177, %v177
      %179 = vrot.lane.b32.xlu0 %v116, 64
      %v180 = vpop.permute.xlu0 %179
      %v182 = vsel %vm120, %v178, 0
      %vm184 = vcmask 1043456
      %v186 = vsel %vm184, %v180, 0
      %188 = vmatprep.subr.bf16.mxu0 0
      %189 = vmatpush1.bf16.msra.mxu0 %v186
      %190 = vmatprep.subr.bf16.mxu0 0
      %191 = vmatpush1.bf16.msra.mxu0 0
      %192 = vmatprep.subr.bf16.mxu0 0
      %193 = vmatpush1.bf16.msra.mxu0 0
      %194 = vmatprep.subr.bf16.mxu0 0
      %195 = vmatpush1.bf16.msra.mxu0 0
      %196 = vmatprep.subr.bf16.mxu0 0
      %197 = vmatpush1.bf16.msra.mxu0 0
      %198 = vmatprep.subr.bf16.mxu0 0
      %199 = vmatpush1.bf16.msra.mxu0 0
      %200 = vmatprep.subr.bf16.mxu0 0
      %201 = vmatpush1.bf16.msra.mxu0 0
      %202 = vmatprep.subr.bf16.mxu0 0
      %203 = vmatpush1.bf16.msra.mxu0 0
      %204 = vmatprep.subr.bf16.mxu0 0
      %205 = vmatpush1.bf16.msra.mxu0 0
      %206 = vmatprep.subr.bf16.mxu0 0
      %207 = vmatpush1.bf16.msra.mxu0 0
      %208 = vmatprep.subr.bf16.mxu0 0
      %209 = vmatpush1.bf16.msra.mxu0 0
      %210 = vmatprep.subr.bf16.mxu0 0
      %211 = vmatpush1.bf16.msra.mxu0 0
      %212 = vmatprep.subr.bf16.mxu0 0
      %213 = vmatpush1.bf16.msra.mxu0 0
      %214 = vmatprep.subr.bf16.mxu0 0
      %215 = vmatpush1.bf16.msra.mxu0 0
      %216 = vmatprep.subr.bf16.mxu0 0
      %217 = vmatpush1.bf16.msra.mxu0 0
      %218 = vmatprep.subr.bf16.mxu0 0
      %219 = vmatpush1.bf16.msra.mxu0 0
      %220 = vmatprep.mubr.bf16.mxu0 0
      %221 = vmatmul.mubr.bf16.gmra.mrb[0].mxu0 %v182
      %v222 = vpop.f32.mrb[0].mxu0
      %v223 = vadd.f32 0.0, %v222
      %v224 = vpop.f32.mrb[0].mxu0
      %v225 = vpop.f32.mrb[0].mxu0
      %v226 = vpop.f32.mrb[0].mxu0
      %227 = vdwg.mxu0
      %229 = vrot.lane.b32.xlu0 %v115, 120
      %v230 = vpop.permute.xlu0 %229
      %231 = vrot.lane.b32.xlu0 %v116, 88
      %v232 = vpop.permute.xlu0 %231
      %v234 = vsel %vm120, %v230, 0
      %v237 = vsel %vm120, %v232, 0
      %239 = vmatprep.subr.bf16.mxu0 0
      %240 = vmatpush1.bf16.xpose.msra.mxu0 %v237
      %241 = vmatprep.subr.bf16.mxu0 0
      %242 = vmatpush1.bf16.xpose.msra.mxu0 0
      %243 = vmatprep.subr.bf16.mxu0 0
      %244 = vmatpush1.bf16.xpose.msra.mxu0 0
      %245 = vmatprep.subr.bf16.mxu0 0
      %246 = vmatpush1.bf16.xpose.msra.mxu0 0
      %247 = vmatprep.subr.bf16.mxu0 0
      %248 = vmatpush1.bf16.xpose.msra.mxu0 0
      %249 = vmatprep.subr.bf16.mxu0 0
      %250 = vmatpush1.bf16.xpose.msra.mxu0 0
      %251 = vmatprep.subr.bf16.mxu0 0
      %252 = vmatpush1.bf16.xpose.msra.mxu0 0
      %253 = vmatprep.subr.bf16.mxu0 0
      %254 = vmatpush1.bf16.xpose.msra.mxu0 0
      %255 = vmatprep.subr.bf16.mxu0 0
      %256 = vmatpush1.bf16.xpose.msra.mxu0 0
      %257 = vmatprep.subr.bf16.mxu0 0
      %258 = vmatpush1.bf16.xpose.msra.mxu0 0
      %259 = vmatprep.subr.bf16.mxu0 0
      %260 = vmatpush1.bf16.xpose.msra.mxu0 0
      %261 = vmatprep.subr.bf16.mxu0 0
      %262 = vmatpush1.bf16.xpose.msra.mxu0 0
      %263 = vmatprep.subr.bf16.mxu0 0
      %264 = vmatpush1.bf16.xpose.msra.mxu0 0
      %265 = vmatprep.subr.bf16.mxu0 0
      %266 = vmatpush1.bf16.xpose.msra.mxu0 0
      %267 = vmatprep.subr.bf16.mxu0 0
      %268 = vmatpush1.bf16.xpose.msra.mxu0 0
      %269 = vmatprep.subr.bf16.mxu0 0
      %270 = vmatpush1.bf16.xpose.msra.mxu0 0
      %271 = vmatprep.mubr.bf16.mxu0 0
      %272 = vmatmul.mubr.bf16.gmra.mrb[0].mxu0 %v234
      %v273 = vpop.f32.mrb[0].mxu0
      %v274 = vadd.f32 0.0, %v273
      %v275 = vpop.f32.mrb[0].mxu0
      %v276 = vpop.f32.mrb[0].mxu0
      %v277 = vpop.f32.mrb[0].mxu0
      %278 = vdwg.mxu0
      %v279 = vsel %vm120, %v274, -inf
      %280 = vmax.xlane.f32.xlu0 %v279
      %v281 = vpop.xlane.xlu0 %280
      %v282 = vsub.f32 %v274, %v281
      %v283 = vmul.f32 %v282, 1.442695
      %v284 = vpow.pop %v283
      %v285 = vsel %vm120, %v284, 0.0
      %286 = vadd.xlane.f32.xlu0 %v285
      %v287 = vpop.xlane.xlu0 %286
      %v288 = vrcp.pop %v287
      %v289 = vmul.f32 %v284, %v288
      %v290 = vpack.c.bf16 %v289, %v289
      %291 = vrot.lane.b32.xlu0 %v116, 56
      %v292 = vpop.permute.xlu0 %291
      %v294 = vsel %vm120, %v290, 0
      %v297 = vsel %vm184, %v292, 0
      %299 = vmatprep.subr.bf16.mxu0 0
      %300 = vmatpush1.bf16.msra.mxu0 %v297
      %301 = vmatprep.subr.bf16.mxu0 0
      %302 = vmatpush1.bf16.msra.mxu0 0
      %303 = vmatprep.subr.bf16.mxu0 0
      %304 = vmatpush1.bf16.msra.mxu0 0
      %305 = vmatprep.subr.bf16.mxu0 0
      %306 = vmatpush1.bf16.msra.mxu0 0
      %307 = vmatprep.subr.bf16.mxu0 0
      %308 = vmatpush1.bf16.msra.mxu0 0
      %309 = vmatprep.subr.bf16.mxu0 0
      %310 = vmatpush1.bf16.msra.mxu0 0
      %311 = vmatprep.subr.bf16.mxu0 0
      %312 = vmatpush1.bf16.msra.mxu0 0
      %313 = vmatprep.subr.bf16.mxu0 0
      %314 = vmatpush1.bf16.msra.mxu0 0
      %315 = vmatprep.subr.bf16.mxu0 0
      %316 = vmatpush1.bf16.msra.mxu0 0
      %317 = vmatprep.subr.bf16.mxu0 0
      %318 = vmatpush1.bf16.msra.mxu0 0
      %319 = vmatprep.subr.bf16.mxu0 0
      %320 = vmatpush1.bf16.msra.mxu0 0
      %321 = vmatprep.subr.bf16.mxu0 0
      %322 = vmatpush1.bf16.msra.mxu0 0
      %323 = vmatprep.subr.bf16.mxu0 0
      %324 = vmatpush1.bf16.msra.mxu0 0
      %325 = vmatprep.subr.bf16.mxu0 0
      %326 = vmatpush1.bf16.msra.mxu0 0
      %327 = vmatprep.subr.bf16.mxu0 0
      %328 = vmatpush1.bf16.msra.mxu0 0
      %329 = vmatprep.subr.bf16.mxu0 0
      %330 = vmatpush1.bf16.msra.mxu0 0
      %331 = vmatprep.mubr.bf16.mxu0 0
      %332 = vmatmul.mubr.bf16.gmra.mrb[0].mxu0 %v294
      %v333 = vpop.f32.mrb[0].mxu0
      %v334 = vadd.f32 0.0, %v333
      %v335 = vpop.f32.mrb[0].mxu0
      %v336 = vpop.f32.mrb[0].mxu0
      %v337 = vpop.f32.mrb[0].mxu0
      %338 = vdwg.mxu0
      %339 = vrot.lane.b32.xlu0 %v115, 112
      %v340 = vpop.permute.xlu0 %339
      %341 = vrot.lane.b32.xlu0 %v116, 80
      %v342 = vpop.permute.xlu0 %341
      %v344 = vsel %vm120, %v340, 0
      %v347 = vsel %vm120, %v342, 0
      %349 = vmatprep.subr.bf16.mxu0 0
      %350 = vmatpush1.bf16.xpose.msra.mxu0 %v347
      %351 = vmatprep.subr.bf16.mxu0 0
      %352 = vmatpush1.bf16.xpose.msra.mxu0 0
      %353 = vmatprep.subr.bf16.mxu0 0
      %354 = vmatpush1.bf16.xpose.msra.mxu0 0
      %355 = vmatprep.subr.bf16.mxu0 0
      %356 = vmatpush1.bf16.xpose.msra.mxu0 0
      %357 = vmatprep.subr.bf16.mxu0 0
      %358 = vmatpush1.bf16.xpose.msra.mxu0 0
      %359 = vmatprep.subr.bf16.mxu0 0
      %360 = vmatpush1.bf16.xpose.msra.mxu0 0
      %361 = vmatprep.subr.bf16.mxu0 0
      %362 = vmatpush1.bf16.xpose.msra.mxu0 0
      %363 = vmatprep.subr.bf16.mxu0 0
      %364 = vmatpush1.bf16.xpose.msra.mxu0 0
      %365 = vmatprep.subr.bf16.mxu0 0
      %366 = vmatpush1.bf16.xpose.msra.mxu0 0
      %367 = vmatprep.subr.bf16.mxu0 0
      %368 = vmatpush1.bf16.xpose.msra.mxu0 0
      %369 = vmatprep.subr.bf16.mxu0 0
      %370 = vmatpush1.bf16.xpose.msra.mxu0 0
      %371 = vmatprep.subr.bf16.mxu0 0
      %372 = vmatpush1.bf16.xpose.msra.mxu0 0
      %373 = vmatprep.subr.bf16.mxu0 0
      %374 = vmatpush1.bf16.xpose.msra.mxu0 0
      %375 = vmatprep.subr.bf16.mxu0 0
      %376 = vmatpush1.bf16.xpose.msra.mxu0 0
      %377 = vmatprep.subr.bf16.mxu0 0
      %378 = vmatpush1.bf16.xpose.msra.mxu0 0
      %379 = vmatprep.subr.bf16.mxu0 0
      %380 = vmatpush1.bf16.xpose.msra.mxu0 0
      %381 = vmatprep.mubr.bf16.mxu0 0
      %382 = vmatmul.mubr.bf16.gmra.mrb[0].mxu0 %v344
      %v383 = vpop.f32.mrb[0].mxu0
      %v384 = vadd.f32 0.0, %v383
      %v385 = vpop.f32.mrb[0].mxu0
      %v386 = vpop.f32.mrb[0].mxu0
      %v387 = vpop.f32.mrb[0].mxu0
      %388 = vdwg.mxu0
      %v389 = vsel %vm120, %v384, -inf
      %390 = vmax.xlane.f32.xlu0 %v389
      %v391 = vpop.xlane.xlu0 %390
      %v392 = vsub.f32 %v384, %v391
      %v393 = vmul.f32 %v392, 1.442695
      %v394 = vpow.pop %v393
      %v395 = vsel %vm120, %v394, 0.0
      %396 = vadd.xlane.f32.xlu0 %v395
      %v397 = vpop.xlane.xlu0 %396
      %v398 = vrcp.pop %v397
      %v399 = vmul.f32 %v394, %v398
      %v400 = vpack.c.bf16 %v399, %v399
      %401 = vrot.lane.b32.xlu0 %v116, 48
      %v402 = vpop.permute.xlu0 %401
      %v404 = vsel %vm120, %v400, 0
      %v407 = vsel %vm184, %v402, 0
      %409 = vmatprep.subr.bf16.mxu0 0
      %410 = vmatpush1.bf16.msra.mxu0 %v407
      %411 = vmatprep.subr.bf16.mxu0 0
      %412 = vmatpush1.bf16.msra.mxu0 0
      %413 = vmatprep.subr.bf16.mxu0 0
      %414 = vmatpush1.bf16.msra.mxu0 0
      %415 = vmatprep.subr.bf16.mxu0 0
      %416 = vmatpush1.bf16.msra.mxu0 0
      %417 = vmatprep.subr.bf16.mxu0 0
      %418 = vmatpush1.bf16.msra.mxu0 0
      %419 = vmatprep.subr.bf16.mxu0 0
      %420 = vmatpush1.bf16.msra.mxu0 0
      %421 = vmatprep.subr.bf16.mxu0 0
      %422 = vmatpush1.bf16.msra.mxu0 0
      %423 = vmatprep.subr.bf16.mxu0 0
      %424 = vmatpush1.bf16.msra.mxu0 0
      %425 = vmatprep.subr.bf16.mxu0 0
      %426 = vmatpush1.bf16.msra.mxu0 0
      %427 = vmatprep.subr.bf16.mxu0 0
      %428 = vmatpush1.bf16.msra.mxu0 0
      %429 = vmatprep.subr.bf16.mxu0 0
      %430 = vmatpush1.bf16.msra.mxu0 0
      %431 = vmatprep.subr.bf16.mxu0 0
      %432 = vmatpush1.bf16.msra.mxu0 0
      %433 = vmatprep.subr.bf16.mxu0 0
      %434 = vmatpush1.bf16.msra.mxu0 0
      %435 = vmatprep.subr.bf16.mxu0 0
      %436 = vmatpush1.bf16.msra.mxu0 0
      %437 = vmatprep.subr.bf16.mxu0 0
      %438 = vmatpush1.bf16.msra.mxu0 0
      %439 = vmatprep.subr.bf16.mxu0 0
      %440 = vmatpush1.bf16.msra.mxu0 0
      %441 = vmatprep.mubr.bf16.mxu0 0
      %442 = vmatmul.mubr.bf16.gmra.mrb[0].mxu0 %v404
      %v443 = vpop.f32.mrb[0].mxu0
      %v444 = vadd.f32 0.0, %v443
      %v445 = vpop.f32.mrb[0].mxu0
      %v446 = vpop.f32.mrb[0].mxu0
      %v447 = vpop.f32.mrb[0].mxu0
      %448 = vdwg.mxu0
      %449 = vrot.lane.b32.xlu0 %v115, 104
      %v450 = vpop.permute.xlu0 %449
      %451 = vrot.lane.b32.xlu0 %v116, 72
      %v452 = vpop.permute.xlu0 %451
      %v454 = vsel %vm120, %v450, 0
      %v457 = vsel %vm120, %v452, 0
      %459 = vmatprep.subr.bf16.mxu0 0
      %460 = vmatpush1.bf16.xpose.msra.mxu0 %v457
      %461 = vmatprep.subr.bf16.mxu0 0
      %462 = vmatpush1.bf16.xpose.msra.mxu0 0
      %463 = vmatprep.subr.bf16.mxu0 0
      %464 = vmatpush1.bf16.xpose.msra.mxu0 0
      %465 = vmatprep.subr.bf16.mxu0 0
      %466 = vmatpush1.bf16.xpose.msra.mxu0 0
      %467 = vmatprep.subr.bf16.mxu0 0
      %468 = vmatpush1.bf16.xpose.msra.mxu0 0
      %469 = vmatprep.subr.bf16.mxu0 0
      %470 = vmatpush1.bf16.xpose.msra.mxu0 0
      %471 = vmatprep.subr.bf16.mxu0 0
      %472 = vmatpush1.bf16.xpose.msra.mxu0 0
      %473 = vmatprep.subr.bf16.mxu0 0
      %474 = vmatpush1.bf16.xpose.msra.mxu0 0
      %475 = vmatprep.subr.bf16.mxu0 0
      %476 = vmatpush1.bf16.xpose.msra.mxu0 0
      %477 = vmatprep.subr.bf16.mxu0 0
      %478 = vmatpush1.bf16.xpose.msra.mxu0 0
      %479 = vmatprep.subr.bf16.mxu0 0
      %480 = vmatpush1.bf16.xpose.msra.mxu0 0
      %481 = vmatprep.subr.bf16.mxu0 0
      %482 = vmatpush1.bf16.xpose.msra.mxu0 0
      %483 = vmatprep.subr.bf16.mxu0 0
      %484 = vmatpush1.bf16.xpose.msra.mxu0 0
      %485 = vmatprep.subr.bf16.mxu0 0
      %486 = vmatpush1.bf16.xpose.msra.mxu0 0
      %487 = vmatprep.subr.bf16.mxu0 0
      %488 = vmatpush1.bf16.xpose.msra.mxu0 0
      %489 = vmatprep.subr.bf16.mxu0 0
      %490 = vmatpush1.bf16.xpose.msra.mxu0 0
      %491 = vmatprep.mubr.bf16.mxu0 0
      %492 = vmatmul.mubr.bf16.gmra.mrb[0].mxu0 %v454
      %v493 = vpop.f32.mrb[0].mxu0
      %v494 = vadd.f32 0.0, %v493
      %v495 = vpop.f32.mrb[0].mxu0
      %v496 = vpop.f32.mrb[0].mxu0
      %v497 = vpop.f32.mrb[0].mxu0
      %498 = vdwg.mxu0
      %v499 = vsel %vm120, %v494, -inf
      %500 = vmax.xlane.f32.xlu0 %v499
      %v501 = vpop.xlane.xlu0 %500
      %v502 = vsub.f32 %v494, %v501
      %v503 = vmul.f32 %v502, 1.442695
      %v504 = vpow.pop %v503
      %v505 = vsel %vm120, %v504, 0.0
      %506 = vadd.xlane.f32.xlu0 %v505
      %v507 = vpop.xlane.xlu0 %506
      %v508 = vrcp.pop %v507
      %v509 = vmul.f32 %v504, %v508
      %v510 = vpack.c.bf16 %v509, %v509
      %511 = vrot.lane.b32.xlu0 %v116, 40
      %v512 = vpop.permute.xlu0 %511
      %v514 = vsel %vm120, %v510, 0
      %v517 = vsel %vm184, %v512, 0
      %519 = vmatprep.subr.bf16.mxu0 0
      %520 = vmatpush1.bf16.msra.mxu0 %v517
      %521 = vmatprep.subr.bf16.mxu0 0
      %522 = vmatpush1.bf16.msra.mxu0 0
      %523 = vmatprep.subr.bf16.mxu0 0
      %524 = vmatpush1.bf16.msra.mxu0 0
      %525 = vmatprep.subr.bf16.mxu0 0
      %526 = vmatpush1.bf16.msra.mxu0 0
      %527 = vmatprep.subr.bf16.mxu0 0
      %528 = vmatpush1.bf16.msra.mxu0 0
      %529 = vmatprep.subr.bf16.mxu0 0
      %530 = vmatpush1.bf16.msra.mxu0 0
      %531 = vmatprep.subr.bf16.mxu0 0
      %532 = vmatpush1.bf16.msra.mxu0 0
      %533 = vmatprep.subr.bf16.mxu0 0
      %534 = vmatpush1.bf16.msra.mxu0 0
      %535 = vmatprep.subr.bf16.mxu0 0
      %536 = vmatpush1.bf16.msra.mxu0 0
      %537 = vmatprep.subr.bf16.mxu0 0
      %538 = vmatpush1.bf16.msra.mxu0 0
      %539 = vmatprep.subr.bf16.mxu0 0
      %540 = vmatpush1.bf16.msra.mxu0 0
      %541 = vmatprep.subr.bf16.mxu0 0
      %542 = vmatpush1.bf16.msra.mxu0 0
      %543 = vmatprep.subr.bf16.mxu0 0
      %544 = vmatpush1.bf16.msra.mxu0 0
      %545 = vmatprep.subr.bf16.mxu0 0
      %546 = vmatpush1.bf16.msra.mxu0 0
      %547 = vmatprep.subr.bf16.mxu0 0
      %548 = vmatpush1.bf16.msra.mxu0 0
      %549 = vmatprep.subr.bf16.mxu0 0
      %550 = vmatpush1.bf16.msra.mxu0 0
      %551 = vmatprep.mubr.bf16.mxu0 0
      %552 = vmatmul.mubr.bf16.gmra.mrb[0].mxu0 %v514
      %v553 = vpop.f32.mrb[0].mxu0
      %v554 = vadd.f32 0.0, %v553
      %v555 = vpop.f32.mrb[0].mxu0
      %v556 = vpop.f32.mrb[0].mxu0
      %v557 = vpop.f32.mrb[0].mxu0
      %558 = vdwg.mxu0
      %560 = vrot.lane.b32.xlu0 %v334, 8
      %v561 = vpop.permute.xlu0 %560
      %564 = vrot.lane.b32.xlu0 %v444, 16
      %v565 = vpop.permute.xlu0 %564
      %568 = vrot.lane.b32.xlu0 %v554, 24
      %v569 = vpop.permute.xlu0 %568
      %v571 = vsel %vm120, %v223, %v561
      %vm572 = vcmask 130048
      %v573 = vsel %vm572, %v571, %v565
      %vm574 = vcmask 195584
      %v575 = vsel %vm574, %v573, %v569
      %vm576 = vcmask 261120
      %577 = vst.msk [vmem:[%s111] sm:$0xff] %vm576, %v575
      %p578 = scmp.lt.s32.totalorder %s12, 1
      %s579 = scalar_select %p578, %s12, 1
      %s580 = smul.addr %s579, 8
      %s581 = scalar_lea.vmem %s1, %s580
      // Predicated region
      $region25: #{gene_classification_forward.14} parent=23 // pred_check
        %p582 = pneg %p56
      $region26: #{gene_classification_forward.14} parent=23 // pred_check_branch
        %584 = sbr.rel (%p582) target = $region28
      $region27: #{gene_classification_forward.14} parent=23 // pred_region
        _
      $region28: #{gene_classification_forward.14} parent=23 // pred_fallthru
        _
    $region24: #{gene_classification_forward.14} parent=5 // pred_fallthru
      _
    %p585 = scmp.le.s32.totalorder 2, %s7
    // Predicated region
    $region29: #{gene_classification_forward.14} parent=5 // pred_check
      %p586 = pneg %p585
    $region30: #{gene_classification_forward.14} parent=5 // pred_check_branch
      %588 = sbr.rel (%p586) target = $region32
    $region31: #{gene_classification_forward.14} parent=5 // pred_region
      %s589 = ssub.s32 %s7, 2
      // Predicated region
      $region33: #{gene_classification_forward.14} parent=31 // pred_check
        %p590 = pneg %p62
      $region34: #{gene_classification_forward.14} parent=31 // pred_check_branch
        %592 = sbr.rel (%p590) target = $region36
      $region35: #{gene_classification_forward.14} parent=31 // pred_region
        %p593 = scmp.lt.s32.totalorder %s13, 1
        %s594 = scalar_select %p593, %s13, 1
        %s595 = smul.addr %s594, 8
        %s596 = scalar_lea.vmem %s1, %s595
      $region36: #{gene_classification_forward.14} parent=31 // pred_fallthru
        _
    $region32: #{gene_classification_forward.14} parent=5 // pred_fallthru
      _
  $region6: #{gene_classification_forward.14} parent=0 // loop_footer
    %s11 = sadd.s32 1, %s7
  $region7: #{gene_classification_forward.14} parent=0 // loop_footer_branch
    %6 = sbr.rel target = $region3
  $region8: #{gene_classification_forward.14} parent=0 // loop_exit
    _

// kernel: gene_classification_forward.13
$region0: #{gene_classification_forward.13}
  #allocation0 [shape = 'u32[]', space=smem, size = 0x4, offset = 0x4, fixed_abs, tag = 'smem constant byte address 0x4 - core index']
  #allocation1 [shape = 'u32[144,128]{1,0:T(1,128)}', space=vmem, size = 0x12000, scoped, tag = 'internal scratch']
  %s0 = inlined_call_operand.vmem [shape: f32[16,32], index: 0, kind: input, shape index: {}]
  %s1 = inlined_call_operand.vmem [shape: bf16[32,128], index: 1, kind: input, shape index: {}]
  %s2 = inlined_call_operand.vmem [shape: f32[1,128], index: 2, kind: input, shape index: {}]
  %s3 = inlined_call_operand.vmem [shape: f32[16,128], index: 3, kind: output, shape index: {}]
  %s4 = sld [smem:[#allocation0]]
  $region45: #{gene_classification_forward.13} parent=0
    _
  %s6 = ssub.s32 1, %s4
  %s7 = scalar_select 0, %s6, %s4
  loop: start=0, step=1, limit=4
  $region2: #{gene_classification_forward.13} parent=0 // loop_pre_header
    _
  $region3: #{gene_classification_forward.13} parent=0 // loop_header
    %s9 = sphi 0, %s13
    %p10 = scmp.ge.s32.totalorder %s9, 4
    %s16 = sphi 0, %s28
    %s17 = sphi 0, %s24
    %s18 = sphi 0, %s16
    %s19 = sphi 0, %s17
    %s20 = sphi 0, %s18
    %s21 = sphi 0, %s19
    %s31 = sphi 0, %s33
    %s34 = sphi 0, %s31
    %s35 = sphi 0, %s34
    %s51 = sphi 0, %s35
    %s57 = sphi 0, %s59
    %s60 = sphi 0, %s57
    %s61 = sphi 0, %s60
    %s77 = sphi 0, %s61
    %s83 = sphi 0, %s85
    %s86 = sphi 0, %s83
    %s87 = sphi 0, %s86
    %s103 = sphi 0, %s87
    %s111 = sphi 0, %s113
    %s114 = sphi 0, %s111
    %s115 = sphi 0, %s114
    %s131 = sphi 0, %s115
  $region4: #{gene_classification_forward.13} parent=0 // loop_header_branch
    %12 = sbr.rel (%p10) target = $region8
  $region5: #{gene_classification_forward.13} parent=0 // loop_body
    %s14 = ssub.s32 %s9, 1
    %s15 = ssub.s32 %s9, 2
    %s22 = sadd.s32 1, %s17
    %p23 = scmp.ge.s32.totalorder %s22, 1
    %s24 = scalar_select %p23, 0, %s22
    %s25 = sadd.s32 1, %s16
    %s26 = scalar_select %p23, %s25, %s16
    %p27 = scmp.ge.s32.totalorder %s26, 2
    %s28 = scalar_select %p27, 0, %s26
    %s29 = ssub.s32 %s16, %s28
    %p30 = scmp.eq.s32.totalorder %s29, 0
    %s32 = sadd.s32 %s31, 1
    %s33 = scalar_select %p30, %s31, %s32
    %p36 = pneg %p30
    %p37 = scmp.eq.s32.totalorder %s9, 1
    %p38 = por %p36, %p37
    %p39 = scmp.ne.s32.totalorder %s31, %s34
    %p40 = scmp.eq.s32.totalorder %s9, 0
    %p41 = por %p39, %p40
    %p42 = scmp.ne.s32.totalorder %s31, %s34
    %p43 = scmp.eq.s32.totalorder %s14, 1
    %p44 = por %p42, %p43
    %p45 = scmp.ne.s32.totalorder %s34, %s35
    %p46 = scmp.eq.s32.totalorder %s14, 0
    %p47 = por %p45, %p46
    %p48 = scmp.ne.s32.totalorder %s34, %s35
    %p49 = scmp.eq.s32.totalorder %s15, 1
    %p50 = por %p48, %p49
    %p52 = scmp.ne.s32.totalorder %s35, %s51
    %p53 = scmp.eq.s32.totalorder %s15, 0
    %p54 = por %p52, %p53
    %s55 = ssub.s32 %s17, %s24
    %p56 = scmp.eq.s32.totalorder %s55, 0
    %s58 = sadd.s32 %s57, 1
    %s59 = scalar_select %p56, %s57, %s58
    %p62 = pneg %p56
    %p63 = scmp.eq.s32.totalorder %s9, 1
    %p64 = por %p62, %p63
    %p65 = scmp.ne.s32.totalorder %s57, %s60
    %p66 = scmp.eq.s32.totalorder %s9, 0
    %p67 = por %p65, %p66
    %p68 = scmp.ne.s32.totalorder %s57, %s60
    %p69 = scmp.eq.s32.totalorder %s14, 1
    %p70 = por %p68, %p69
    %p71 = scmp.ne.s32.totalorder %s60, %s61
    %p72 = scmp.eq.s32.totalorder %s14, 0
    %p73 = por %p71, %p72
    %p74 = scmp.ne.s32.totalorder %s60, %s61
    %p75 = scmp.eq.s32.totalorder %s15, 1
    %p76 = por %p74, %p75
    %p78 = scmp.ne.s32.totalorder %s61, %s77
    %p79 = scmp.eq.s32.totalorder %s15, 0
    %p80 = por %p78, %p79
    %s81 = ssub.s32 %s17, %s24
    %p82 = scmp.eq.s32.totalorder %s81, 0
    %s84 = sadd.s32 %s83, 1
    %s85 = scalar_select %p82, %s83, %s84
    %p88 = pneg %p82
    %p89 = scmp.eq.s32.totalorder %s9, 1
    %p90 = por %p88, %p89
    %p91 = scmp.ne.s32.totalorder %s83, %s86
    %p92 = scmp.eq.s32.totalorder %s9, 0
    %p93 = por %p91, %p92
    %p94 = scmp.ne.s32.totalorder %s83, %s86
    %p95 = scmp.eq.s32.totalorder %s14, 1
    %p96 = por %p94, %p95
    %p97 = scmp.ne.s32.totalorder %s86, %s87
    %p98 = scmp.eq.s32.totalorder %s14, 0
    %p99 = por %p97, %p98
    %p100 = scmp.ne.s32.totalorder %s86, %s87
    %p101 = scmp.eq.s32.totalorder %s15, 1
    %p102 = por %p100, %p101
    %p104 = scmp.ne.s32.totalorder %s87, %s103
    %p105 = scmp.eq.s32.totalorder %s15, 0
    %p106 = por %p104, %p105
    %s107 = ssub.s32 %s16, %s28
    %s108 = ssub.s32 %s17, %s24
    %s109 = sor.u32 %s107, %s108
    %p110 = scmp.eq.s32.totalorder %s109, 0
    %s112 = sadd.s32 %s111, 1
    %s113 = scalar_select %p110, %s111, %s112
    %p116 = pneg %p110
    %p117 = scmp.eq.s32.totalorder %s9, 1
    %p118 = por %p116, %p117
    %p119 = scmp.ne.s32.totalorder %s111, %s114
    %p120 = scmp.eq.s32.totalorder %s9, 0
    %p121 = por %p119, %p120
    %p122 = scmp.ne.s32.totalorder %s111, %s114
    %p123 = scmp.eq.s32.totalorder %s14, 1
    %p124 = por %p122, %p123
    %p125 = scmp.ne.s32.totalorder %s114, %s115
    %p126 = scmp.eq.s32.totalorder %s14, 0
    %p127 = por %p125, %p126
    %p128 = scmp.ne.s32.totalorder %s114, %s115
    %p129 = scmp.eq.s32.totalorder %s15, 1
    %p130 = por %p128, %p129
    %p132 = scmp.ne.s32.totalorder %s115, %s131
    %p133 = scmp.eq.s32.totalorder %s15, 0
    %p134 = por %p132, %p133
    %p135 = scmp.le.s32.totalorder 1, %s9
    %p136 = scmp.lt.s32.totalorder %s9, 3
    %p137 = pnand %p135, %p136
    %p138 = pneg %p137
    // Predicated region
    $region9: #{gene_classification_forward.13} parent=5 // pred_check
      _
    $region10: #{gene_classification_forward.13} parent=5 // pred_check_branch
      %140 = sbr.rel (%p137) target = $region12
    $region11: #{gene_classification_forward.13} parent=5 // pred_region
      %s141 = ssub.s32 %s9, 1
      // Predicated region
      $region13: #{gene_classification_forward.13} parent=11 // pred_check
        %p142 = pneg %p73
      $region14: #{gene_classification_forward.13} parent=11 // pred_check_branch
        %144 = sbr.rel (%p142) target = $region16
      $region15: #{gene_classification_forward.13} parent=11 // pred_region
        %p145 = scmp.lt.s32.totalorder %s19, 0
        %s146 = scalar_select %p145, %s19, 0
        %s147 = smul.addr %s146, 4
        %s148 = scalar_lea.vmem %s1, %s147
      $region16: #{gene_classification_forward.13} parent=11 // pred_fallthru
        _
      // Predicated region
      $region17: #{gene_classification_forward.13} parent=11 // pred_check
        %p149 = pneg %p99
      $region18: #{gene_classification_forward.13} parent=11 // pred_check_branch
        %151 = sbr.rel (%p149) target = $region20
      $region19: #{gene_classification_forward.13} parent=11 // pred_region
        %p152 = scmp.lt.s32.totalorder %s19, 0
        %s153 = scalar_select %p152, %s19, 0
        %s154 = scalar_lea.vmem %s2, %s153
      $region20: #{gene_classification_forward.13} parent=11 // pred_fallthru
        _
    $region12: #{gene_classification_forward.13} parent=5 // pred_fallthru
      _
    %p155 = scmp.lt.s32.totalorder %s9, 2
    // Predicated region
    $region21: #{gene_classification_forward.13} parent=5 // pred_check
      %p156 = pneg %p155
    $region22: #{gene_classification_forward.13} parent=5 // pred_check_branch
      %158 = sbr.rel (%p156) target = $region24
    $region23: #{gene_classification_forward.13} parent=5 // pred_region
      // Predicated region
      $region25: #{gene_classification_forward.13} parent=23 // pred_check
        %p159 = pneg %p41
      $region26: #{gene_classification_forward.13} parent=23 // pred_check_branch
        %161 = sbr.rel (%p159) target = $region28
      $region27: #{gene_classification_forward.13} parent=23 // pred_region
        %p162 = scmp.lt.s32.totalorder %s16, 1
        %s163 = scalar_select %p162, %s16, 1
        %s164 = smul.addr %s163, 8
        %s165 = scalar_lea.vmem %s0, %s164
      $region28: #{gene_classification_forward.13} parent=23 // pred_fallthru
        _
    $region24: #{gene_classification_forward.13} parent=5 // pred_fallthru
      _
    %p166 = scmp.le.s32.totalorder 1, %s9
    %p167 = scmp.lt.s32.totalorder %s9, 3
    %p168 = pnand %p166, %p167
    %p169 = pneg %p168
    // Predicated region
    $region29: #{gene_classification_forward.13} parent=5 // pred_check
      _
    $region30: #{gene_classification_forward.13} parent=5 // pred_check_branch
      %171 = sbr.rel (%p168) target = $region32
    $region31: #{gene_classification_forward.13} parent=5 // pred_region
      %s172 = ssub.s32 %s9, 1
      %p173 = scmp.lt.s32.totalorder %s18, 1
      %s174 = scalar_select %p173, %s18, 1
      %s175 = smul.addr %s174, 8
      %s176 = scalar_lea.vmem %s0, %s175
      %p177 = pneg %p47
      %p178 = pneg %p44
      %p179 = scmp.lt.s32.totalorder %s19, 0
      %s180 = scalar_select %p179, %s19, 0
      %s181 = smul.addr %s180, 4
      %s182 = scalar_lea.vmem %s1, %s181
      %p183 = pneg %p73
      %p184 = pneg %p70
      %p185 = scmp.lt.s32.totalorder %s19, 0
      %s186 = scalar_select %p185, %s19, 0
      %s187 = scalar_lea.vmem %s2, %s186
      %p188 = pneg %p99
      %p189 = pneg %p96
      %p190 = pneg %p127
      %p191 = pneg %p124
      %p192 = scmp.lt.s32.totalorder %s18, 1
      %s193 = scalar_select %p192, %s18, 1
      %p194 = scmp.lt.s32.totalorder %s19, 0
      %s195 = scalar_select %p194, %s19, 0
      %s196 = sadd.s32 %s195, %s193
      %s197 = smul.addr %s196, 8
      %s198 = scalar_lea.vmem %s3, %s197
      %p199 = scmp.lt.s32.totalorder %s18, 1
      %s200 = scalar_select %p199, %s18, 1
      %s201 = smul.addr %s200, 8
      %s202 = scalar_lea.vmem %s0, %s201
      %p203 = scmp.lt.s32.totalorder %s19, 0
      %s204 = scalar_select %p203, %s19, 0
      %s205 = smul.addr %s204, 4
      %s206 = scalar_lea.vmem %s1, %s205
      %p207 = scmp.lt.s32.totalorder %s19, 0
      %s208 = scalar_select %p207, %s19, 0
      %s209 = scalar_lea.vmem %s2, %s208
      %p210 = scmp.lt.s32.totalorder %s18, 1
      %s211 = scalar_select %p210, %s18, 1
      %p212 = scmp.lt.s32.totalorder %s19, 0
      %s213 = scalar_select %p212, %s19, 0
      %s214 = sadd.s32 %s213, %s211
      %s215 = smul.addr %s214, 8
      %s216 = scalar_lea.vmem %s3, %s215
      %v218 = vld [vmem:[%s202] sm:$0xff]
      %v219 = vpack.c.bf16 %v218, %v218
      %v220 = vld [vmem:[%s206] sm:$0xf]
      %v221 = vld [vmem:[%s206 + $0x4] sm:$0xf]
      %v222 = vld [vmem:[%s206 + $0x8] sm:$0xf]
      %v223 = vld [vmem:[%s206 + $0xc] sm:$0xf]
      %v224 = vld [vmem:[%s209] sm:$0x1]
      %v226 = vlaneseq
      %v227 = vshrl.u32 %v226, 7
      %v228 = vsub.s32 0, %v227
      %v229 = vrot.slane %v224, %v228
      %v235 = vunpack.c.l.b16 %v220
      %v236 = vunpack.c.l.b16 %v221
      %v237 = vunpack.c.l.b16 %v222
      %v238 = vunpack.c.l.b16 %v223
      %v239 = vpack.c.b16 %v236, %v235
      %v240 = vpack.c.b16 %v238, %v237
      %vm243 = vcmask 261120
      %v245 = vsel %vm243, %v219, 0
      %247 = vmatprep.subr.bf16.mxu0 0
      %248 = vmatpush1.bf16.msra.mxu0 %v239
      %249 = vmatprep.subr.bf16.mxu0 0
      %250 = vmatpush1.bf16.msra.mxu0 %v240
      %251 = vmatprep.subr.bf16.mxu0 0
      %252 = vmatpush1.bf16.msra.mxu0 0
      %253 = vmatprep.subr.bf16.mxu0 0
      %254 = vmatpush1.bf16.msra.mxu0 0
      %255 = vmatprep.subr.bf16.mxu0 0
      %256 = vmatpush1.bf16.msra.mxu0 0
      %257 = vmatprep.subr.bf16.mxu0 0
      %258 = vmatpush1.bf16.msra.mxu0 0
      %259 = vmatprep.subr.bf16.mxu0 0
      %260 = vmatpush1.bf16.msra.mxu0 0
      %261 = vmatprep.subr.bf16.mxu0 0
      %262 = vmatpush1.bf16.msra.mxu0 0
      %263 = vmatprep.subr.bf16.mxu0 0
      %264 = vmatpush1.bf16.msra.mxu0 0
      %265 = vmatprep.subr.bf16.mxu0 0
      %266 = vmatpush1.bf16.msra.mxu0 0
      %267 = vmatprep.subr.bf16.mxu0 0
      %268 = vmatpush1.bf16.msra.mxu0 0
      %269 = vmatprep.subr.bf16.mxu0 0
      %270 = vmatpush1.bf16.msra.mxu0 0
      %271 = vmatprep.subr.bf16.mxu0 0
      %272 = vmatpush1.bf16.msra.mxu0 0
      %273 = vmatprep.subr.bf16.mxu0 0
      %274 = vmatpush1.bf16.msra.mxu0 0
      %275 = vmatprep.subr.bf16.mxu0 0
      %276 = vmatpush1.bf16.msra.mxu0 0
      %277 = vmatprep.subr.bf16.mxu0 0
      %278 = vmatpush1.bf16.msra.mxu0 0
      %279 = vmatprep.mubr.bf16.mxu0 0
      %280 = vmatmul.mubr.bf16.gmra.mrb[0].mxu0 %v245
      %v281 = vpop.f32.mrb[0].mxu0
      %v282 = vadd.f32 %v229, %v281
      %v283 = vpop.f32.mrb[0].mxu0
      %v284 = vpop.f32.mrb[0].mxu0
      %v285 = vpop.f32.mrb[0].mxu0
      %286 = vdwg.mxu0
      %287 = vst [vmem:[%s216] sm:$0xff] %v282
      %p288 = scmp.lt.s32.totalorder %s18, 1
      %s289 = scalar_select %p288, %s18, 1
      %p290 = scmp.lt.s32.totalorder %s19, 0
      %s291 = scalar_select %p290, %s19, 0
      %s292 = sadd.s32 %s291, %s289
      %s293 = smul.addr %s292, 8
      %s294 = scalar_lea.vmem %s3, %s293
      // Predicated region
      $region33: #{gene_classification_forward.13} parent=31 // pred_check
        %p295 = pneg %p124
      $region34: #{gene_classification_forward.13} parent=31 // pred_check_branch
        %297 = sbr.rel (%p295) target = $region36
      $region35: #{gene_classification_forward.13} parent=31 // pred_region
        _
      $region36: #{gene_classification_forward.13} parent=31 // pred_fallthru
        _
    $region32: #{gene_classification_forward.13} parent=5 // pred_fallthru
      _
    %p298 = scmp.le.s32.totalorder 2, %s9
    // Predicated region
    $region37: #{gene_classification_forward.13} parent=5 // pred_check
      %p299 = pneg %p298
    $region38: #{gene_classification_forward.13} parent=5 // pred_check_branch
      %301 = sbr.rel (%p299) target = $region40
    $region39: #{gene_classification_forward.13} parent=5 // pred_region
      %s302 = ssub.s32 %s9, 2
      // Predicated region
      $region41: #{gene_classification_forward.13} parent=39 // pred_check
        %p303 = pneg %p130
      $region42: #{gene_classification_forward.13} parent=39 // pred_check_branch
        %305 = sbr.rel (%p303) target = $region44
      $region43: #{gene_classification_forward.13} parent=39 // pred_region
        %p306 = scmp.lt.s32.totalorder %s20, 1
        %s307 = scalar_select %p306, %s20, 1
        %p308 = scmp.lt.s32.totalorder %s21, 0
        %s309 = scalar_select %p308, %s21, 0
        %s310 = sadd.s32 %s309, %s307
        %s311 = smul.addr %s310, 8
        %s312 = scalar_lea.vmem %s3, %s311
      $region44: #{gene_classification_forward.13} parent=39 // pred_fallthru
        _
    $region40: #{gene_classification_forward.13} parent=5 // pred_fallthru
      _
  $region6: #{gene_classification_forward.13} parent=0 // loop_footer
    %s13 = sadd.s32 1, %s9
  $region7: #{gene_classification_forward.13} parent=0 // loop_footer_branch
    %8 = sbr.rel target = $region3
  $region8: #{gene_classification_forward.13} parent=0 // loop_exit
    _

// kernel: gene_classification_forward.17
$region0: #{gene_classification_forward.17}
  #allocation0 [shape = 'u32[]', space=smem, size = 0x4, offset = 0x4, fixed_abs, tag = 'smem constant byte address 0x4 - core index']
  #allocation1 [shape = 'u32[144,128]{1,0:T(1,128)}', space=vmem, size = 0x12000, scoped, tag = 'internal scratch']
  %s0 = inlined_call_operand.vmem [shape: f32[16,128], index: 0, kind: input, shape index: {}]
  %s1 = inlined_call_operand.vmem [shape: bf16[128,32], index: 1, kind: input, shape index: {}]
  %s2 = inlined_call_operand.vmem [shape: f32[1,32], index: 2, kind: input, shape index: {}]
  %s3 = inlined_call_operand.vmem [shape: f32[16,32], index: 3, kind: input, shape index: {}]
  %s4 = inlined_call_operand.vmem [shape: f32[1,32], index: 4, kind: input, shape index: {}]
  %s5 = inlined_call_operand.vmem [shape: f32[1,32], index: 5, kind: input, shape index: {}]
  %s6 = inlined_call_operand.vmem [shape: f32[16,32], index: 6, kind: output, shape index: {}]
  %s7 = sld [smem:[#allocation0]]
  $region57: #{gene_classification_forward.17} parent=0
    _
  %s9 = ssub.s32 1, %s7
  %s10 = scalar_select 0, %s9, %s7
  loop: start=0, step=1, limit=4
  $region2: #{gene_classification_forward.17} parent=0 // loop_pre_header
    _
  $region3: #{gene_classification_forward.17} parent=0 // loop_header
    %s12 = sphi 0, %s16
    %p13 = scmp.ge.s32.totalorder %s12, 4
    %s22 = sphi 0, %s24
    %s25 = sphi 0, %s22
    %s26 = sphi 0, %s25
    %s42 = sphi 0, %s26
    %s46 = sphi 0, %s46
    %s48 = sphi 0, %s46
    %s49 = sphi 0, %s48
    %s63 = sphi 0, %s49
    %s67 = sphi 0, %s67
    %s69 = sphi 0, %s67
    %s70 = sphi 0, %s69
    %s84 = sphi 0, %s70
    %s90 = sphi 0, %s92
    %s93 = sphi 0, %s90
    %s94 = sphi 0, %s93
    %s110 = sphi 0, %s94
    %s114 = sphi 0, %s114
    %s116 = sphi 0, %s114
    %s117 = sphi 0, %s116
    %s131 = sphi 0, %s117
    %s135 = sphi 0, %s135
    %s137 = sphi 0, %s135
    %s138 = sphi 0, %s137
    %s152 = sphi 0, %s138
    %s158 = sphi 0, %s160
    %s161 = sphi 0, %s158
    %s162 = sphi 0, %s161
    %s178 = sphi 0, %s162
  $region4: #{gene_classification_forward.17} parent=0 // loop_header_branch
    %15 = sbr.rel (%p13) target = $region8
  $region5: #{gene_classification_forward.17} parent=0 // loop_body
    %s17 = ssub.s32 %s12, 1
    %s18 = ssub.s32 %s12, 2
    %s19 = sadd.s32 %s12, 1
    %s20 = ssub.s32 %s12, %s19
    %p21 = scmp.eq.s32.totalorder %s20, 0
    %s23 = sadd.s32 %s22, 1
    %s24 = scalar_select %p21, %s22, %s23
    %p27 = pneg %p21
    %p28 = scmp.eq.s32.totalorder %s12, 1
    %p29 = por %p27, %p28
    %p30 = scmp.ne.s32.totalorder %s22, %s25
    %p31 = scmp.eq.s32.totalorder %s12, 0
    %p32 = por %p30, %p31
    %p33 = scmp.ne.s32.totalorder %s22, %s25
    %p34 = scmp.eq.s32.totalorder %s17, 1
    %p35 = por %p33, %p34
    %p36 = scmp.ne.s32.totalorder %s25, %s26
    %p37 = scmp.eq.s32.totalorder %s17, 0
    %p38 = por %p36, %p37
    %p39 = scmp.ne.s32.totalorder %s25, %s26
    %p40 = scmp.eq.s32.totalorder %s18, 1
    %p41 = por %p39, %p40
    %p43 = scmp.ne.s32.totalorder %s26, %s42
    %p44 = scmp.eq.s32.totalorder %s18, 0
    %p45 = por %p43, %p44
    %s47 = sadd.s32 %s46, 1
    %p50 = scmp.eq.s32.totalorder %s12, 1
    %p51 = scmp.ne.s32.totalorder %s46, %s48
    %p52 = scmp.eq.s32.totalorder %s12, 0
    %p53 = por %p51, %p52
    %p54 = scmp.ne.s32.totalorder %s46, %s48
    %p55 = scmp.eq.s32.totalorder %s17, 1
    %p56 = por %p54, %p55
    %p57 = scmp.ne.s32.totalorder %s48, %s49
    %p58 = scmp.eq.s32.totalorder %s17, 0
    %p59 = por %p57, %p58
    %p60 = scmp.ne.s32.totalorder %s48, %s49
    %p61 = scmp.eq.s32.totalorder %s18, 1
    %p62 = por %p60, %p61
    %p64 = scmp.ne.s32.totalorder %s49, %s63
    %p65 = scmp.eq.s32.totalorder %s18, 0
    %p66 = por %p64, %p65
    %s68 = sadd.s32 %s67, 1
    %p71 = scmp.eq.s32.totalorder %s12, 1
    %p72 = scmp.ne.s32.totalorder %s67, %s69
    %p73 = scmp.eq.s32.totalorder %s12, 0
    %p74 = por %p72, %p73
    %p75 = scmp.ne.s32.totalorder %s67, %s69
    %p76 = scmp.eq.s32.totalorder %s17, 1
    %p77 = por %p75, %p76
    %p78 = scmp.ne.s32.totalorder %s69, %s70
    %p79 = scmp.eq.s32.totalorder %s17, 0
    %p80 = por %p78, %p79
    %p81 = scmp.ne.s32.totalorder %s69, %s70
    %p82 = scmp.eq.s32.totalorder %s18, 1
    %p83 = por %p81, %p82
    %p85 = scmp.ne.s32.totalorder %s70, %s84
    %p86 = scmp.eq.s32.totalorder %s18, 0
    %p87 = por %p85, %p86
    %s88 = ssub.s32 %s12, %s19
    %p89 = scmp.eq.s32.totalorder %s88, 0
    %s91 = sadd.s32 %s90, 1
    %s92 = scalar_select %p89, %s90, %s91
    %p95 = pneg %p89
    %p96 = scmp.eq.s32.totalorder %s12, 1
    %p97 = por %p95, %p96
    %p98 = scmp.ne.s32.totalorder %s90, %s93
    %p99 = scmp.eq.s32.totalorder %s12, 0
    %p100 = por %p98, %p99
    %p101 = scmp.ne.s32.totalorder %s90, %s93
    %p102 = scmp.eq.s32.totalorder %s17, 1
    %p103 = por %p101, %p102
    %p104 = scmp.ne.s32.totalorder %s93, %s94
    %p105 = scmp.eq.s32.totalorder %s17, 0
    %p106 = por %p104, %p105
    %p107 = scmp.ne.s32.totalorder %s93, %s94
    %p108 = scmp.eq.s32.totalorder %s18, 1
    %p109 = por %p107, %p108
    %p111 = scmp.ne.s32.totalorder %s94, %s110
    %p112 = scmp.eq.s32.totalorder %s18, 0
    %p113 = por %p111, %p112
    %s115 = sadd.s32 %s114, 1
    %p118 = scmp.eq.s32.totalorder %s12, 1
    %p119 = scmp.ne.s32.totalorder %s114, %s116
    %p120 = scmp.eq.s32.totalorder %s12, 0
    %p121 = por %p119, %p120
    %p122 = scmp.ne.s32.totalorder %s114, %s116
    %p123 = scmp.eq.s32.totalorder %s17, 1
    %p124 = por %p122, %p123
    %p125 = scmp.ne.s32.totalorder %s116, %s117
    %p126 = scmp.eq.s32.totalorder %s17, 0
    %p127 = por %p125, %p126
    %p128 = scmp.ne.s32.totalorder %s116, %s117
    %p129 = scmp.eq.s32.totalorder %s18, 1
    %p130 = por %p128, %p129
    %p132 = scmp.ne.s32.totalorder %s117, %s131
    %p133 = scmp.eq.s32.totalorder %s18, 0
    %p134 = por %p132, %p133
    %s136 = sadd.s32 %s135, 1
    %p139 = scmp.eq.s32.totalorder %s12, 1
    %p140 = scmp.ne.s32.totalorder %s135, %s137
    %p141 = scmp.eq.s32.totalorder %s12, 0
    %p142 = por %p140, %p141
    %p143 = scmp.ne.s32.totalorder %s135, %s137
    %p144 = scmp.eq.s32.totalorder %s17, 1
    %p145 = por %p143, %p144
    %p146 = scmp.ne.s32.totalorder %s137, %s138
    %p147 = scmp.eq.s32.totalorder %s17, 0
    %p148 = por %p146, %p147
    %p149 = scmp.ne.s32.totalorder %s137, %s138
    %p150 = scmp.eq.s32.totalorder %s18, 1
    %p151 = por %p149, %p150
    %p153 = scmp.ne.s32.totalorder %s138, %s152
    %p154 = scmp.eq.s32.totalorder %s18, 0
    %p155 = por %p153, %p154
    %s156 = ssub.s32 %s12, %s19
    %p157 = scmp.eq.s32.totalorder %s156, 0
    %s159 = sadd.s32 %s158, 1
    %s160 = scalar_select %p157, %s158, %s159
    %p163 = pneg %p157
    %p164 = scmp.eq.s32.totalorder %s12, 1
    %p165 = por %p163, %p164
    %p166 = scmp.ne.s32.totalorder %s158, %s161
    %p167 = scmp.eq.s32.totalorder %s12, 0
    %p168 = por %p166, %p167
    %p169 = scmp.ne.s32.totalorder %s158, %s161
    %p170 = scmp.eq.s32.totalorder %s17, 1
    %p171 = por %p169, %p170
    %p172 = scmp.ne.s32.totalorder %s161, %s162
    %p173 = scmp.eq.s32.totalorder %s17, 0
    %p174 = por %p172, %p173
    %p175 = scmp.ne.s32.totalorder %s161, %s162
    %p176 = scmp.eq.s32.totalorder %s18, 1
    %p177 = por %p175, %p176
    %p179 = scmp.ne.s32.totalorder %s162, %s178
    %p180 = scmp.eq.s32.totalorder %s18, 0
    %p181 = por %p179, %p180
    %p182 = scmp.le.s32.totalorder 1, %s12
    %p183 = scmp.lt.s32.totalorder %s12, 3
    %p184 = pnand %p182, %p183
    %p185 = pneg %p184
    // Predicated region
    $region9: #{gene_classification_forward.17} parent=5 // pred_check
      _
    $region10: #{gene_classification_forward.17} parent=5 // pred_check_branch
      %187 = sbr.rel (%p184) target = $region12
    $region11: #{gene_classification_forward.17} parent=5 // pred_region
      %s188 = ssub.s32 %s12, 1
      // Predicated region
      $region13: #{gene_classification_forward.17} parent=11 // pred_check
        %p189 = pneg %p59
      $region14: #{gene_classification_forward.17} parent=11 // pred_check_branch
        %191 = sbr.rel (%p189) target = $region16
      $region15: #{gene_classification_forward.17} parent=11 // pred_region
        _
      $region16: #{gene_classification_forward.17} parent=11 // pred_fallthru
        _
      // Predicated region
      $region17: #{gene_classification_forward.17} parent=11 // pred_check
        %p192 = pneg %p80
      $region18: #{gene_classification_forward.17} parent=11 // pred_check_branch
        %194 = sbr.rel (%p192) target = $region20
      $region19: #{gene_classification_forward.17} parent=11 // pred_region
        _
      $region20: #{gene_classification_forward.17} parent=11 // pred_fallthru
        _
      // Predicated region
      $region21: #{gene_classification_forward.17} parent=11 // pred_check
        %p195 = pneg %p127
      $region22: #{gene_classification_forward.17} parent=11 // pred_check_branch
        %197 = sbr.rel (%p195) target = $region24
      $region23: #{gene_classification_forward.17} parent=11 // pred_region
        _
      $region24: #{gene_classification_forward.17} parent=11 // pred_fallthru
        _
      // Predicated region
      $region25: #{gene_classification_forward.17} parent=11 // pred_check
        %p198 = pneg %p148
      $region26: #{gene_classification_forward.17} parent=11 // pred_check_branch
        %200 = sbr.rel (%p198) target = $region28
      $region27: #{gene_classification_forward.17} parent=11 // pred_region
        _
      $region28: #{gene_classification_forward.17} parent=11 // pred_fallthru
        _
    $region12: #{gene_classification_forward.17} parent=5 // pred_fallthru
      _
    %p201 = scmp.lt.s32.totalorder %s12, 2
    // Predicated region
    $region29: #{gene_classification_forward.17} parent=5 // pred_check
      %p202 = pneg %p201
    $region30: #{gene_classification_forward.17} parent=5 // pred_check_branch
      %204 = sbr.rel (%p202) target = $region32
    $region31: #{gene_classification_forward.17} parent=5 // pred_region
      // Predicated region
      $region33: #{gene_classification_forward.17} parent=31 // pred_check
        %p205 = pneg %p32
      $region34: #{gene_classification_forward.17} parent=31 // pred_check_branch
        %207 = sbr.rel (%p205) target = $region36
      $region35: #{gene_classification_forward.17} parent=31 // pred_region
        %p208 = scmp.lt.s32.totalorder %s12, 1
        %s209 = scalar_select %p208, %s12, 1
        %s210 = smul.addr %s209, 8
        %s211 = scalar_lea.vmem %s0, %s210
      $region36: #{gene_classification_forward.17} parent=31 // pred_fallthru
        _
      // Predicated region
      $region37: #{gene_classification_forward.17} parent=31 // pred_check
        %p212 = pneg %p100
      $region38: #{gene_classification_forward.17} parent=31 // pred_check_branch
        %214 = sbr.rel (%p212) target = $region40
      $region39: #{gene_classification_forward.17} parent=31 // pred_region
        %p215 = scmp.lt.s32.totalorder %s12, 1
        %s216 = scalar_select %p215, %s12, 1
        %s217 = smul.addr %s216, 8
        %s218 = scalar_lea.vmem %s3, %s217
      $region40: #{gene_classification_forward.17} parent=31 // pred_fallthru
        _
    $region32: #{gene_classification_forward.17} parent=5 // pred_fallthru
      _
    %p219 = scmp.le.s32.totalorder 1, %s12
    %p220 = scmp.lt.s32.totalorder %s12, 3
    %p221 = pnand %p219, %p220
    %p222 = pneg %p221
    // Predicated region
    $region41: #{gene_classification_forward.17} parent=5 // pred_check
      _
    $region42: #{gene_classification_forward.17} parent=5 // pred_check_branch
      %224 = sbr.rel (%p221) target = $region44
    $region43: #{gene_classification_forward.17} parent=5 // pred_region
      %s225 = ssub.s32 %s12, 1
      %p226 = scmp.lt.s32.totalorder %s17, 1
      %s227 = scalar_select %p226, %s17, 1
      %s228 = smul.addr %s227, 8
      %s229 = scalar_lea.vmem %s0, %s228
      %p230 = pneg %p38
      %p231 = pneg %p35
      %p232 = pneg %p59
      %p233 = pneg %p56
      %p234 = pneg %p80
      %p235 = pneg %p77
      %p236 = scmp.lt.s32.totalorder %s17, 1
      %s237 = scalar_select %p236, %s17, 1
      %s238 = smul.addr %s237, 8
      %s239 = scalar_lea.vmem %s3, %s238
      %p240 = pneg %p106
      %p241 = pneg %p103
      %p242 = pneg %p127
      %p243 = pneg %p124
      %p244 = pneg %p148
      %p245 = pneg %p145
      %p246 = pneg %p174
      %p247 = pneg %p171
      %p248 = scmp.lt.s32.totalorder %s17, 1
      %s249 = scalar_select %p248, %s17, 1
      %s250 = smul.addr %s249, 8
      %s251 = scalar_lea.vmem %s6, %s250
      %p252 = scmp.lt.s32.totalorder %s17, 1
      %s253 = scalar_select %p252, %s17, 1
      %s254 = smul.addr %s253, 8
      %s255 = scalar_lea.vmem %s0, %s254
      %p256 = scmp.lt.s32.totalorder %s17, 1
      %s257 = scalar_select %p256, %s17, 1
      %s258 = smul.addr %s257, 8
      %s259 = scalar_lea.vmem %s3, %s258
      %p260 = scmp.lt.s32.totalorder %s17, 1
      %s261 = scalar_select %p260, %s17, 1
      %s262 = smul.addr %s261, 8
      %s263 = scalar_lea.vmem %s6, %s262
      %v265 = vld [vmem:[%s255] sm:$0xff]
      %v266 = vpack.c.bf16 %v265, %v265
      %v267 = vld [vmem:[%s1] sm:$0xf]
      %v268 = vld [vmem:[%s1 + $0x4] sm:$0xf]
      %v269 = vld [vmem:[%s1 + $0x8] sm:$0xf]
      %v270 = vld [vmem:[%s1 + $0xc] sm:$0xf]
      %v271 = vld [vmem:[%s1 + $0x10] sm:$0xf]
      %v272 = vld [vmem:[%s1 + $0x14] sm:$0xf]
      %v273 = vld [vmem:[%s1 + $0x18] sm:$0xf]
      %v274 = vld [vmem:[%s1 + $0x1c] sm:$0xf]
      %v275 = vld [vmem:[%s1 + $0x20] sm:$0xf]
      %v276 = vld [vmem:[%s1 + $0x24] sm:$0xf]
      %v277 = vld [vmem:[%s1 + $0x28] sm:$0xf]
      %v278 = vld [vmem:[%s1 + $0x2c] sm:$0xf]
      %v279 = vld [vmem:[%s1 + $0x30] sm:$0xf]
      %v280 = vld [vmem:[%s1 + $0x34] sm:$0xf]
      %v281 = vld [vmem:[%s1 + $0x38] sm:$0xf]
      %v282 = vld [vmem:[%s1 + $0x3c] sm:$0xf]
      %v283 = vld [vmem:[%s2] sm:$0x1]
      %v285 = vlaneseq
      %v286 = vshrl.u32 %v285, 7
      %v287 = vsub.s32 0, %v286
      %v288 = vrot.slane %v283, %v287
      %v306 = vunpack.c.l.b16 %v267
      %v307 = vunpack.c.l.b16 %v268
      %v308 = vunpack.c.l.b16 %v269
      %v309 = vunpack.c.l.b16 %v270
      %v310 = vunpack.c.l.b16 %v271
      %v311 = vunpack.c.l.b16 %v272
      %v312 = vunpack.c.l.b16 %v273
      %v313 = vunpack.c.l.b16 %v274
      %v314 = vunpack.c.l.b16 %v275
      %v315 = vunpack.c.l.b16 %v276
      %v316 = vunpack.c.l.b16 %v277
      %v317 = vunpack.c.l.b16 %v278
      %v318 = vunpack.c.l.b16 %v279
      %v319 = vunpack.c.l.b16 %v280
      %v320 = vunpack.c.l.b16 %v281
      %v321 = vunpack.c.l.b16 %v282
      %v322 = vpack.c.b16 %v307, %v306
      %v323 = vpack.c.b16 %v309, %v308
      %v324 = vpack.c.b16 %v311, %v310
      %v325 = vpack.c.b16 %v313, %v312
      %v326 = vpack.c.b16 %v315, %v314
      %v327 = vpack.c.b16 %v317, %v316
      %v328 = vpack.c.b16 %v319, %v318
      %v329 = vpack.c.b16 %v321, %v320
      %338 = vmatprep.subr.bf16.mxu0 0
      %339 = vmatpush1.bf16.msra.mxu0 %v322
      %340 = vmatprep.subr.bf16.mxu0 0
      %341 = vmatpush1.bf16.msra.mxu0 %v323
      %342 = vmatprep.subr.bf16.mxu0 0
      %343 = vmatpush1.bf16.msra.mxu0 %v324
      %344 = vmatprep.subr.bf16.mxu0 0
      %345 = vmatpush1.bf16.msra.mxu0 %v325
      %346 = vmatprep.subr.bf16.mxu0 0
      %347 = vmatpush1.bf16.msra.mxu0 %v326
      %348 = vmatprep.subr.bf16.mxu0 0
      %349 = vmatpush1.bf16.msra.mxu0 %v327
      %350 = vmatprep.subr.bf16.mxu0 0
      %351 = vmatpush1.bf16.msra.mxu0 %v328
      %352 = vmatprep.subr.bf16.mxu0 0
      %353 = vmatpush1.bf16.msra.mxu0 %v329
      %354 = vmatprep.subr.bf16.mxu0 0
      %355 = vmatpush1.bf16.msra.mxu0 0
      %356 = vmatprep.subr.bf16.mxu0 0
      %357 = vmatpush1.bf16.msra.mxu0 0
      %358 = vmatprep.subr.bf16.mxu0 0
      %359 = vmatpush1.bf16.msra.mxu0 0
      %360 = vmatprep.subr.bf16.mxu0 0
      %361 = vmatpush1.bf16.msra.mxu0 0
      %362 = vmatprep.subr.bf16.mxu0 0
      %363 = vmatpush1.bf16.msra.mxu0 0
      %364 = vmatprep.subr.bf16.mxu0 0
      %365 = vmatpush1.bf16.msra.mxu0 0
      %366 = vmatprep.subr.bf16.mxu0 0
      %367 = vmatpush1.bf16.msra.mxu0 0
      %368 = vmatprep.subr.bf16.mxu0 0
      %369 = vmatpush1.bf16.msra.mxu0 0
      %370 = vmatprep.mubr.bf16.mxu0 0
      %371 = vmatmul.mubr.bf16.gmra.mrb[0].mxu0 %v266
      %v372 = vpop.f32.mrb[0].mxu0
      %v373 = vadd.f32 %v288, %v372
      %v374 = vpop.f32.mrb[0].mxu0
      %v375 = vpop.f32.mrb[0].mxu0
      %v376 = vpop.f32.mrb[0].mxu0
      %377 = vdwg.mxu0
      %v378 = vld [vmem:[%s259] sm:$0xff]
      %v379 = vadd.f32 %v373, %v378
      %v380 = vld [vmem:[%s4] sm:$0x1]
      %v381 = vld [vmem:[%s5] sm:$0x1]
      %vm382 = vcmask 261120
      %v383 = vsel %vm382, %v379, 0.0
      %384 = vadd.xlane.f32.xlu0 %v383
      %v385 = vpop.xlane.xlu0 %384
      %v386 = vrcp.pop 32.0
      %v387 = vmul.f32 %v385, %v386
      %v388 = vsub.f32 %v379, %v387
      %v389 = vmul.f32 %v388, %v388
      %v390 = vsel %vm382, %v389, 0.0
      %391 = vadd.xlane.f32.xlu0 %v390
      %v392 = vpop.xlane.xlu0 %391
      %v393 = vmul.f32 %v392, %v386
      %v394 = vadd.f32 %v393, 1e-12
      %v395 = vrsqrt.pop %v394
      %v396 = vmul.f32 %v388, %v395
      %v398 = vlaneseq
      %v399 = vshrl.u32 %v398, 7
      %v400 = vsub.s32 0, %v399
      %v401 = vrot.slane %v380, %v400
      %v403 = vmul.f32 %v396, %v401
      %v405 = vlaneseq
      %v406 = vshrl.u32 %v405, 7
      %v407 = vsub.s32 0, %v406
      %v408 = vrot.slane %v381, %v407
      %v410 = vadd.f32 %v403, %v408
      %411 = vst.msk [vmem:[%s263] sm:$0xff] %vm382, %v410
      %p412 = scmp.lt.s32.totalorder %s17, 1
      %s413 = scalar_select %p412, %s17, 1
      %s414 = smul.addr %s413, 8
      %s415 = scalar_lea.vmem %s6, %s414
      // Predicated region
      $region45: #{gene_classification_forward.17} parent=43 // pred_check
        %p416 = pneg %p171
      $region46: #{gene_classification_forward.17} parent=43 // pred_check_branch
        %418 = sbr.rel (%p416) target = $region48
      $region47: #{gene_classification_forward.17} parent=43 // pred_region
        _
      $region48: #{gene_classification_forward.17} parent=43 // pred_fallthru
        _
    $region44: #{gene_classification_forward.17} parent=5 // pred_fallthru
      _
    %p419 = scmp.le.s32.totalorder 2, %s12
    // Predicated region
    $region49: #{gene_classification_forward.17} parent=5 // pred_check
      %p420 = pneg %p419
    $region50: #{gene_classification_forward.17} parent=5 // pred_check_branch
      %422 = sbr.rel (%p420) target = $region52
    $region51: #{gene_classification_forward.17} parent=5 // pred_region
      %s423 = ssub.s32 %s12, 2
      // Predicated region
      $region53: #{gene_classification_forward.17} parent=51 // pred_check
        %p424 = pneg %p177
      $region54: #{gene_classification_forward.17} parent=51 // pred_check_branch
        %426 = sbr.rel (%p424) target = $region56
      $region55: #{gene_classification_forward.17} parent=51 // pred_region
        %p427 = scmp.lt.s32.totalorder %s18, 1
        %s428 = scalar_select %p427, %s18, 1
        %s429 = smul.addr %s428, 8
        %s430 = scalar_lea.vmem %s6, %s429
      $region56: #{gene_classification_forward.17} parent=51 // pred_fallthru
        _
    $region52: #{gene_classification_forward.17} parent=5 // pred_fallthru
      _
  $region6: #{gene_classification_forward.17} parent=0 // loop_footer
    %s16 = sadd.s32 1, %s12
  $region7: #{gene_classification_forward.17} parent=0 // loop_footer_branch
    %11 = sbr.rel target = $region3
  $region8: #{gene_classification_forward.17} parent=0 // loop_exit
    _

// kernel: gene_classification_forward.16
$region0: #{gene_classification_forward.16}
  #allocation0 [shape = 'u32[]', space=smem, size = 0x4, offset = 0x4, fixed_abs, tag = 'smem constant byte address 0x4 - core index']
  #allocation1 [shape = 'u32[144,128]{1,0:T(1,128)}', space=vmem, size = 0x12000, scoped, tag = 'internal scratch']
  %s0 = inlined_call_operand.vmem [shape: f32[16,32], index: 0, kind: input, shape index: {}]
  %s1 = inlined_call_operand.vmem [shape: bf16[32,128], index: 1, kind: input, shape index: {}]
  %s2 = inlined_call_operand.vmem [shape: f32[1,128], index: 2, kind: input, shape index: {}]
  %s3 = inlined_call_operand.vmem [shape: f32[16,128], index: 3, kind: output, shape index: {}]
  %s4 = sld [smem:[#allocation0]]
  $region45: #{gene_classification_forward.16} parent=0
    _
  %s6 = ssub.s32 1, %s4
  %s7 = scalar_select 0, %s6, %s4
  loop: start=0, step=1, limit=4
  $region2: #{gene_classification_forward.16} parent=0 // loop_pre_header
    _
  $region3: #{gene_classification_forward.16} parent=0 // loop_header
    %s9 = sphi 0, %s13
    %p10 = scmp.ge.s32.totalorder %s9, 4
    %s16 = sphi 0, %s28
    %s17 = sphi 0, %s24
    %s18 = sphi 0, %s16
    %s19 = sphi 0, %s17
    %s20 = sphi 0, %s18
    %s21 = sphi 0, %s19
    %s31 = sphi 0, %s33
    %s34 = sphi 0, %s31
    %s35 = sphi 0, %s34
    %s51 = sphi 0, %s35
    %s57 = sphi 0, %s59
    %s60 = sphi 0, %s57
    %s61 = sphi 0, %s60
    %s77 = sphi 0, %s61
    %s83 = sphi 0, %s85
    %s86 = sphi 0, %s83
    %s87 = sphi 0, %s86
    %s103 = sphi 0, %s87
    %s111 = sphi 0, %s113
    %s114 = sphi 0, %s111
    %s115 = sphi 0, %s114
    %s131 = sphi 0, %s115
  $region4: #{gene_classification_forward.16} parent=0 // loop_header_branch
    %12 = sbr.rel (%p10) target = $region8
  $region5: #{gene_classification_forward.16} parent=0 // loop_body
    %s14 = ssub.s32 %s9, 1
    %s15 = ssub.s32 %s9, 2
    %s22 = sadd.s32 1, %s17
    %p23 = scmp.ge.s32.totalorder %s22, 1
    %s24 = scalar_select %p23, 0, %s22
    %s25 = sadd.s32 1, %s16
    %s26 = scalar_select %p23, %s25, %s16
    %p27 = scmp.ge.s32.totalorder %s26, 2
    %s28 = scalar_select %p27, 0, %s26
    %s29 = ssub.s32 %s16, %s28
    %p30 = scmp.eq.s32.totalorder %s29, 0
    %s32 = sadd.s32 %s31, 1
    %s33 = scalar_select %p30, %s31, %s32
    %p36 = pneg %p30
    %p37 = scmp.eq.s32.totalorder %s9, 1
    %p38 = por %p36, %p37
    %p39 = scmp.ne.s32.totalorder %s31, %s34
    %p40 = scmp.eq.s32.totalorder %s9, 0
    %p41 = por %p39, %p40
    %p42 = scmp.ne.s32.totalorder %s31, %s34
    %p43 = scmp.eq.s32.totalorder %s14, 1
    %p44 = por %p42, %p43
    %p45 = scmp.ne.s32.totalorder %s34, %s35
    %p46 = scmp.eq.s32.totalorder %s14, 0
    %p47 = por %p45, %p46
    %p48 = scmp.ne.s32.totalorder %s34, %s35
    %p49 = scmp.eq.s32.totalorder %s15, 1
    %p50 = por %p48, %p49
    %p52 = scmp.ne.s32.totalorder %s35, %s51
    %p53 = scmp.eq.s32.totalorder %s15, 0
    %p54 = por %p52, %p53
    %s55 = ssub.s32 %s17, %s24
    %p56 = scmp.eq.s32.totalorder %s55, 0
    %s58 = sadd.s32 %s57, 1
    %s59 = scalar_select %p56, %s57, %s58
    %p62 = pneg %p56
    %p63 = scmp.eq.s32.totalorder %s9, 1
    %p64 = por %p62, %p63
    %p65 = scmp.ne.s32.totalorder %s57, %s60
    %p66 = scmp.eq.s32.totalorder %s9, 0
    %p67 = por %p65, %p66
    %p68 = scmp.ne.s32.totalorder %s57, %s60
    %p69 = scmp.eq.s32.totalorder %s14, 1
    %p70 = por %p68, %p69
    %p71 = scmp.ne.s32.totalorder %s60, %s61
    %p72 = scmp.eq.s32.totalorder %s14, 0
    %p73 = por %p71, %p72
    %p74 = scmp.ne.s32.totalorder %s60, %s61
    %p75 = scmp.eq.s32.totalorder %s15, 1
    %p76 = por %p74, %p75
    %p78 = scmp.ne.s32.totalorder %s61, %s77
    %p79 = scmp.eq.s32.totalorder %s15, 0
    %p80 = por %p78, %p79
    %s81 = ssub.s32 %s17, %s24
    %p82 = scmp.eq.s32.totalorder %s81, 0
    %s84 = sadd.s32 %s83, 1
    %s85 = scalar_select %p82, %s83, %s84
    %p88 = pneg %p82
    %p89 = scmp.eq.s32.totalorder %s9, 1
    %p90 = por %p88, %p89
    %p91 = scmp.ne.s32.totalorder %s83, %s86
    %p92 = scmp.eq.s32.totalorder %s9, 0
    %p93 = por %p91, %p92
    %p94 = scmp.ne.s32.totalorder %s83, %s86
    %p95 = scmp.eq.s32.totalorder %s14, 1
    %p96 = por %p94, %p95
    %p97 = scmp.ne.s32.totalorder %s86, %s87
    %p98 = scmp.eq.s32.totalorder %s14, 0
    %p99 = por %p97, %p98
    %p100 = scmp.ne.s32.totalorder %s86, %s87
    %p101 = scmp.eq.s32.totalorder %s15, 1
    %p102 = por %p100, %p101
    %p104 = scmp.ne.s32.totalorder %s87, %s103
    %p105 = scmp.eq.s32.totalorder %s15, 0
    %p106 = por %p104, %p105
    %s107 = ssub.s32 %s16, %s28
    %s108 = ssub.s32 %s17, %s24
    %s109 = sor.u32 %s107, %s108
    %p110 = scmp.eq.s32.totalorder %s109, 0
    %s112 = sadd.s32 %s111, 1
    %s113 = scalar_select %p110, %s111, %s112
    %p116 = pneg %p110
    %p117 = scmp.eq.s32.totalorder %s9, 1
    %p118 = por %p116, %p117
    %p119 = scmp.ne.s32.totalorder %s111, %s114
    %p120 = scmp.eq.s32.totalorder %s9, 0
    %p121 = por %p119, %p120
    %p122 = scmp.ne.s32.totalorder %s111, %s114
    %p123 = scmp.eq.s32.totalorder %s14, 1
    %p124 = por %p122, %p123
    %p125 = scmp.ne.s32.totalorder %s114, %s115
    %p126 = scmp.eq.s32.totalorder %s14, 0
    %p127 = por %p125, %p126
    %p128 = scmp.ne.s32.totalorder %s114, %s115
    %p129 = scmp.eq.s32.totalorder %s15, 1
    %p130 = por %p128, %p129
    %p132 = scmp.ne.s32.totalorder %s115, %s131
    %p133 = scmp.eq.s32.totalorder %s15, 0
    %p134 = por %p132, %p133
    %p135 = scmp.le.s32.totalorder 1, %s9
    %p136 = scmp.lt.s32.totalorder %s9, 3
    %p137 = pnand %p135, %p136
    %p138 = pneg %p137
    // Predicated region
    $region9: #{gene_classification_forward.16} parent=5 // pred_check
      _
    $region10: #{gene_classification_forward.16} parent=5 // pred_check_branch
      %140 = sbr.rel (%p137) target = $region12
    $region11: #{gene_classification_forward.16} parent=5 // pred_region
      %s141 = ssub.s32 %s9, 1
      // Predicated region
      $region13: #{gene_classification_forward.16} parent=11 // pred_check
        %p142 = pneg %p73
      $region14: #{gene_classification_forward.16} parent=11 // pred_check_branch
        %144 = sbr.rel (%p142) target = $region16
      $region15: #{gene_classification_forward.16} parent=11 // pred_region
        %p145 = scmp.lt.s32.totalorder %s19, 0
        %s146 = scalar_select %p145, %s19, 0
        %s147 = smul.addr %s146, 4
        %s148 = scalar_lea.vmem %s1, %s147
      $region16: #{gene_classification_forward.16} parent=11 // pred_fallthru
        _
      // Predicated region
      $region17: #{gene_classification_forward.16} parent=11 // pred_check
        %p149 = pneg %p99
      $region18: #{gene_classification_forward.16} parent=11 // pred_check_branch
        %151 = sbr.rel (%p149) target = $region20
      $region19: #{gene_classification_forward.16} parent=11 // pred_region
        %p152 = scmp.lt.s32.totalorder %s19, 0
        %s153 = scalar_select %p152, %s19, 0
        %s154 = scalar_lea.vmem %s2, %s153
      $region20: #{gene_classification_forward.16} parent=11 // pred_fallthru
        _
    $region12: #{gene_classification_forward.16} parent=5 // pred_fallthru
      _
    %p155 = scmp.lt.s32.totalorder %s9, 2
    // Predicated region
    $region21: #{gene_classification_forward.16} parent=5 // pred_check
      %p156 = pneg %p155
    $region22: #{gene_classification_forward.16} parent=5 // pred_check_branch
      %158 = sbr.rel (%p156) target = $region24
    $region23: #{gene_classification_forward.16} parent=5 // pred_region
      // Predicated region
      $region25: #{gene_classification_forward.16} parent=23 // pred_check
        %p159 = pneg %p41
      $region26: #{gene_classification_forward.16} parent=23 // pred_check_branch
        %161 = sbr.rel (%p159) target = $region28
      $region27: #{gene_classification_forward.16} parent=23 // pred_region
        %p162 = scmp.lt.s32.totalorder %s16, 1
        %s163 = scalar_select %p162, %s16, 1
        %s164 = smul.addr %s163, 8
        %s165 = scalar_lea.vmem %s0, %s164
      $region28: #{gene_classification_forward.16} parent=23 // pred_fallthru
        _
    $region24: #{gene_classification_forward.16} parent=5 // pred_fallthru
      _
    %p166 = scmp.le.s32.totalorder 1, %s9
    %p167 = scmp.lt.s32.totalorder %s9, 3
    %p168 = pnand %p166, %p167
    %p169 = pneg %p168
    // Predicated region
    $region29: #{gene_classification_forward.16} parent=5 // pred_check
      _
    $region30: #{gene_classification_forward.16} parent=5 // pred_check_branch
      %171 = sbr.rel (%p168) target = $region32
    $region31: #{gene_classification_forward.16} parent=5 // pred_region
      %s172 = ssub.s32 %s9, 1
      %p173 = scmp.lt.s32.totalorder %s18, 1
      %s174 = scalar_select %p173, %s18, 1
      %s175 = smul.addr %s174, 8
      %s176 = scalar_lea.vmem %s0, %s175
      %p177 = pneg %p47
      %p178 = pneg %p44
      %p179 = scmp.lt.s32.totalorder %s19, 0
      %s180 = scalar_select %p179, %s19, 0
      %s181 = smul.addr %s180, 4
      %s182 = scalar_lea.vmem %s1, %s181
      %p183 = pneg %p73
      %p184 = pneg %p70
      %p185 = scmp.lt.s32.totalorder %s19, 0
      %s186 = scalar_select %p185, %s19, 0
      %s187 = scalar_lea.vmem %s2, %s186
      %p188 = pneg %p99
      %p189 = pneg %p96
      %p190 = pneg %p127
      %p191 = pneg %p124
      %p192 = scmp.lt.s32.totalorder %s18, 1
      %s193 = scalar_select %p192, %s18, 1
      %p194 = scmp.lt.s32.totalorder %s19, 0
      %s195 = scalar_select %p194, %s19, 0
      %s196 = sadd.s32 %s195, %s193
      %s197 = smul.addr %s196, 8
      %s198 = scalar_lea.vmem %s3, %s197
      %p199 = scmp.lt.s32.totalorder %s18, 1
      %s200 = scalar_select %p199, %s18, 1
      %s201 = smul.addr %s200, 8
      %s202 = scalar_lea.vmem %s0, %s201
      %p203 = scmp.lt.s32.totalorder %s19, 0
      %s204 = scalar_select %p203, %s19, 0
      %s205 = smul.addr %s204, 4
      %s206 = scalar_lea.vmem %s1, %s205
      %p207 = scmp.lt.s32.totalorder %s19, 0
      %s208 = scalar_select %p207, %s19, 0
      %s209 = scalar_lea.vmem %s2, %s208
      %p210 = scmp.lt.s32.totalorder %s18, 1
      %s211 = scalar_select %p210, %s18, 1
      %p212 = scmp.lt.s32.totalorder %s19, 0
      %s213 = scalar_select %p212, %s19, 0
      %s214 = sadd.s32 %s213, %s211
      %s215 = smul.addr %s214, 8
      %s216 = scalar_lea.vmem %s3, %s215
      %v218 = vld [vmem:[%s202] sm:$0xff]
      %v219 = vpack.c.bf16 %v218, %v218
      %v220 = vld [vmem:[%s206] sm:$0xf]
      %v221 = vld [vmem:[%s206 + $0x4] sm:$0xf]
      %v222 = vld [vmem:[%s206 + $0x8] sm:$0xf]
      %v223 = vld [vmem:[%s206 + $0xc] sm:$0xf]
      %v224 = vld [vmem:[%s209] sm:$0x1]
      %v226 = vlaneseq
      %v227 = vshrl.u32 %v226, 7
      %v228 = vsub.s32 0, %v227
      %v229 = vrot.slane %v224, %v228
      %v235 = vunpack.c.l.b16 %v220
      %v236 = vunpack.c.l.b16 %v221
      %v237 = vunpack.c.l.b16 %v222
      %v238 = vunpack.c.l.b16 %v223
      %v239 = vpack.c.b16 %v236, %v235
      %v240 = vpack.c.b16 %v238, %v237
      %vm243 = vcmask 261120
      %v245 = vsel %vm243, %v219, 0
      %247 = vmatprep.subr.bf16.mxu0 0
      %248 = vmatpush1.bf16.msra.mxu0 %v239
      %249 = vmatprep.subr.bf16.mxu0 0
      %250 = vmatpush1.bf16.msra.mxu0 %v240
      %251 = vmatprep.subr.bf16.mxu0 0
      %252 = vmatpush1.bf16.msra.mxu0 0
      %253 = vmatprep.subr.bf16.mxu0 0
      %254 = vmatpush1.bf16.msra.mxu0 0
      %255 = vmatprep.subr.bf16.mxu0 0
      %256 = vmatpush1.bf16.msra.mxu0 0
      %257 = vmatprep.subr.bf16.mxu0 0
      %258 = vmatpush1.bf16.msra.mxu0 0
      %259 = vmatprep.subr.bf16.mxu0 0
      %260 = vmatpush1.bf16.msra.mxu0 0
      %261 = vmatprep.subr.bf16.mxu0 0
      %262 = vmatpush1.bf16.msra.mxu0 0
      %263 = vmatprep.subr.bf16.mxu0 0
      %264 = vmatpush1.bf16.msra.mxu0 0
      %265 = vmatprep.subr.bf16.mxu0 0
      %266 = vmatpush1.bf16.msra.mxu0 0
      %267 = vmatprep.subr.bf16.mxu0 0
      %268 = vmatpush1.bf16.msra.mxu0 0
      %269 = vmatprep.subr.bf16.mxu0 0
      %270 = vmatpush1.bf16.msra.mxu0 0
      %271 = vmatprep.subr.bf16.mxu0 0
      %272 = vmatpush1.bf16.msra.mxu0 0
      %273 = vmatprep.subr.bf16.mxu0 0
      %274 = vmatpush1.bf16.msra.mxu0 0
      %275 = vmatprep.subr.bf16.mxu0 0
      %276 = vmatpush1.bf16.msra.mxu0 0
      %277 = vmatprep.subr.bf16.mxu0 0
      %278 = vmatpush1.bf16.msra.mxu0 0
      %279 = vmatprep.mubr.bf16.mxu0 0
      %280 = vmatmul.mubr.bf16.gmra.mrb[0].mxu0 %v245
      %v281 = vpop.f32.mrb[0].mxu0
      %v282 = vadd.f32 %v229, %v281
      %v283 = vpop.f32.mrb[0].mxu0
      %v284 = vpop.f32.mrb[0].mxu0
      %v285 = vpop.f32.mrb[0].mxu0
      %286 = vdwg.mxu0
      %v287 = vmul.f32 %v282, 0.5
      %v288 = vmul.f32 %v282, 0.044715
      %v289 = vmul.f32 %v288, %v282
      %v290 = vmul.f32 %v289, %v282
      %v291 = vadd.f32 %v282, %v290
      %v292 = vmul.f32 %v291, 0.7978846
      %v293 = vtanh.pop %v292
      %v294 = vadd.f32 %v293, 1.0
      %v295 = vmul.f32 %v287, %v294
      %296 = vst [vmem:[%s216] sm:$0xff] %v295
      %p297 = scmp.lt.s32.totalorder %s18, 1
      %s298 = scalar_select %p297, %s18, 1
      %p299 = scmp.lt.s32.totalorder %s19, 0
      %s300 = scalar_select %p299, %s19, 0
      %s301 = sadd.s32 %s300, %s298
      %s302 = smul.addr %s301, 8
      %s303 = scalar_lea.vmem %s3, %s302
      // Predicated region
      $region33: #{gene_classification_forward.16} parent=31 // pred_check
        %p304 = pneg %p124
      $region34: #{gene_classification_forward.16} parent=31 // pred_check_branch
        %306 = sbr.rel (%p304) target = $region36
      $region35: #{gene_classification_forward.16} parent=31 // pred_region
        _
      $region36: #{gene_classification_forward.16} parent=31 // pred_fallthru
        _
    $region32: #{gene_classification_forward.16} parent=5 // pred_fallthru
      _
    %p307 = scmp.le.s32.totalorder 2, %s9
    // Predicated region
    $region37: #{gene_classification_forward.16} parent=5 // pred_check
      %p308 = pneg %p307
    $region38: #{gene_classification_forward.16} parent=5 // pred_check_branch
      %310 = sbr.rel (%p308) target = $region40
    $region39: #{gene_classification_forward.16} parent=5 // pred_region
      %s311 = ssub.s32 %s9, 2
      // Predicated region
      $region41: #{gene_classification_forward.16} parent=39 // pred_check
        %p312 = pneg %p130
      $region42: #{gene_classification_forward.16} parent=39 // pred_check_branch
        %314 = sbr.rel (%p312) target = $region44
      $region43: #{gene_classification_forward.16} parent=39 // pred_region
        %p315 = scmp.lt.s32.totalorder %s20, 1
        %s316 = scalar_select %p315, %s20, 1
        %p317 = scmp.lt.s32.totalorder %s21, 0
        %s318 = scalar_select %p317, %s21, 0
        %s319 = sadd.s32 %s318, %s316
        %s320 = smul.addr %s319, 8
        %s321 = scalar_lea.vmem %s3, %s320
      $region44: #{gene_classification_forward.16} parent=39 // pred_fallthru
        _
    $region40: #{gene_classification_forward.16} parent=5 // pred_fallthru
      _
  $region6: #{gene_classification_forward.16} parent=0 // loop_footer
    %s13 = sadd.s32 1, %s9
  $region7: #{gene_classification_forward.16} parent=0 // loop_footer_branch
    %8 = sbr.rel target = $region3
  $region8: #{gene_classification_forward.16} parent=0 // loop_exit
    _

// kernel: gene_classification_forward.23
$region0: #{gene_classification_forward.23}
  #allocation0 [shape = 'u32[]', space=smem, size = 0x4, offset = 0x4, fixed_abs, tag = 'smem constant byte address 0x4 - core index']
  #allocation1 [shape = 'u32[144,128]{1,0:T(1,128)}', space=vmem, size = 0x12000, scoped, tag = 'internal scratch']
  %s0 = inlined_call_operand.vmem [shape: f32[16,32], index: 0, kind: input, shape index: {}]
  %s1 = inlined_call_operand.vmem [shape: f32[1,32], index: 1, kind: input, shape index: {}]
  %s2 = inlined_call_operand.vmem [shape: f32[1,32], index: 2, kind: input, shape index: {}]
  %s3 = inlined_call_operand.vmem [shape: bf16[32,128], index: 3, kind: input, shape index: {}]
  %s4 = inlined_call_operand.vmem [shape: f32[1,128], index: 4, kind: input, shape index: {}]
  %s5 = inlined_call_operand.vmem [shape: f32[16,128], index: 5, kind: output, shape index: {}]
  %s6 = sld [smem:[#allocation0]]
  $region53: #{gene_classification_forward.23} parent=0
    _
  %s8 = ssub.s32 1, %s6
  %s9 = scalar_select 0, %s8, %s6
  loop: start=0, step=1, limit=4
  $region2: #{gene_classification_forward.23} parent=0 // loop_pre_header
    _
  $region3: #{gene_classification_forward.23} parent=0 // loop_header
    %s11 = sphi 0, %s15
    %p12 = scmp.ge.s32.totalorder %s11, 4
    %s21 = sphi 0, %s23
    %s24 = sphi 0, %s21
    %s25 = sphi 0, %s24
    %s41 = sphi 0, %s25
    %s45 = sphi 0, %s45
    %s47 = sphi 0, %s45
    %s48 = sphi 0, %s47
    %s62 = sphi 0, %s48
    %s66 = sphi 0, %s66
    %s68 = sphi 0, %s66
    %s69 = sphi 0, %s68
    %s83 = sphi 0, %s69
    %s87 = sphi 0, %s87
    %s89 = sphi 0, %s87
    %s90 = sphi 0, %s89
    %s104 = sphi 0, %s90
    %s108 = sphi 0, %s108
    %s110 = sphi 0, %s108
    %s111 = sphi 0, %s110
    %s125 = sphi 0, %s111
    %s131 = sphi 0, %s133
    %s134 = sphi 0, %s131
    %s135 = sphi 0, %s134
    %s151 = sphi 0, %s135
  $region4: #{gene_classification_forward.23} parent=0 // loop_header_branch
    %14 = sbr.rel (%p12) target = $region8
  $region5: #{gene_classification_forward.23} parent=0 // loop_body
    %s16 = ssub.s32 %s11, 1
    %s17 = ssub.s32 %s11, 2
    %s18 = sadd.s32 %s11, 1
    %s19 = ssub.s32 %s11, %s18
    %p20 = scmp.eq.s32.totalorder %s19, 0
    %s22 = sadd.s32 %s21, 1
    %s23 = scalar_select %p20, %s21, %s22
    %p26 = pneg %p20
    %p27 = scmp.eq.s32.totalorder %s11, 1
    %p28 = por %p26, %p27
    %p29 = scmp.ne.s32.totalorder %s21, %s24
    %p30 = scmp.eq.s32.totalorder %s11, 0
    %p31 = por %p29, %p30
    %p32 = scmp.ne.s32.totalorder %s21, %s24
    %p33 = scmp.eq.s32.totalorder %s16, 1
    %p34 = por %p32, %p33
    %p35 = scmp.ne.s32.totalorder %s24, %s25
    %p36 = scmp.eq.s32.totalorder %s16, 0
    %p37 = por %p35, %p36
    %p38 = scmp.ne.s32.totalorder %s24, %s25
    %p39 = scmp.eq.s32.totalorder %s17, 1
    %p40 = por %p38, %p39
    %p42 = scmp.ne.s32.totalorder %s25, %s41
    %p43 = scmp.eq.s32.totalorder %s17, 0
    %p44 = por %p42, %p43
    %s46 = sadd.s32 %s45, 1
    %p49 = scmp.eq.s32.totalorder %s11, 1
    %p50 = scmp.ne.s32.totalorder %s45, %s47
    %p51 = scmp.eq.s32.totalorder %s11, 0
    %p52 = por %p50, %p51
    %p53 = scmp.ne.s32.totalorder %s45, %s47
    %p54 = scmp.eq.s32.totalorder %s16, 1
    %p55 = por %p53, %p54
    %p56 = scmp.ne.s32.totalorder %s47, %s48
    %p57 = scmp.eq.s32.totalorder %s16, 0
    %p58 = por %p56, %p57
    %p59 = scmp.ne.s32.totalorder %s47, %s48
    %p60 = scmp.eq.s32.totalorder %s17, 1
    %p61 = por %p59, %p60
    %p63 = scmp.ne.s32.totalorder %s48, %s62
    %p64 = scmp.eq.s32.totalorder %s17, 0
    %p65 = por %p63, %p64
    %s67 = sadd.s32 %s66, 1
    %p70 = scmp.eq.s32.totalorder %s11, 1
    %p71 = scmp.ne.s32.totalorder %s66, %s68
    %p72 = scmp.eq.s32.totalorder %s11, 0
    %p73 = por %p71, %p72
    %p74 = scmp.ne.s32.totalorder %s66, %s68
    %p75 = scmp.eq.s32.totalorder %s16, 1
    %p76 = por %p74, %p75
    %p77 = scmp.ne.s32.totalorder %s68, %s69
    %p78 = scmp.eq.s32.totalorder %s16, 0
    %p79 = por %p77, %p78
    %p80 = scmp.ne.s32.totalorder %s68, %s69
    %p81 = scmp.eq.s32.totalorder %s17, 1
    %p82 = por %p80, %p81
    %p84 = scmp.ne.s32.totalorder %s69, %s83
    %p85 = scmp.eq.s32.totalorder %s17, 0
    %p86 = por %p84, %p85
    %s88 = sadd.s32 %s87, 1
    %p91 = scmp.eq.s32.totalorder %s11, 1
    %p92 = scmp.ne.s32.totalorder %s87, %s89
    %p93 = scmp.eq.s32.totalorder %s11, 0
    %p94 = por %p92, %p93
    %p95 = scmp.ne.s32.totalorder %s87, %s89
    %p96 = scmp.eq.s32.totalorder %s16, 1
    %p97 = por %p95, %p96
    %p98 = scmp.ne.s32.totalorder %s89, %s90
    %p99 = scmp.eq.s32.totalorder %s16, 0
    %p100 = por %p98, %p99
    %p101 = scmp.ne.s32.totalorder %s89, %s90
    %p102 = scmp.eq.s32.totalorder %s17, 1
    %p103 = por %p101, %p102
    %p105 = scmp.ne.s32.totalorder %s90, %s104
    %p106 = scmp.eq.s32.totalorder %s17, 0
    %p107 = por %p105, %p106
    %s109 = sadd.s32 %s108, 1
    %p112 = scmp.eq.s32.totalorder %s11, 1
    %p113 = scmp.ne.s32.totalorder %s108, %s110
    %p114 = scmp.eq.s32.totalorder %s11, 0
    %p115 = por %p113, %p114
    %p116 = scmp.ne.s32.totalorder %s108, %s110
    %p117 = scmp.eq.s32.totalorder %s16, 1
    %p118 = por %p116, %p117
    %p119 = scmp.ne.s32.totalorder %s110, %s111
    %p120 = scmp.eq.s32.totalorder %s16, 0
    %p121 = por %p119, %p120
    %p122 = scmp.ne.s32.totalorder %s110, %s111
    %p123 = scmp.eq.s32.totalorder %s17, 1
    %p124 = por %p122, %p123
    %p126 = scmp.ne.s32.totalorder %s111, %s125
    %p127 = scmp.eq.s32.totalorder %s17, 0
    %p128 = por %p126, %p127
    %s129 = ssub.s32 %s11, %s18
    %p130 = scmp.eq.s32.totalorder %s129, 0
    %s132 = sadd.s32 %s131, 1
    %s133 = scalar_select %p130, %s131, %s132
    %p136 = pneg %p130
    %p137 = scmp.eq.s32.totalorder %s11, 1
    %p138 = por %p136, %p137
    %p139 = scmp.ne.s32.totalorder %s131, %s134
    %p140 = scmp.eq.s32.totalorder %s11, 0
    %p141 = por %p139, %p140
    %p142 = scmp.ne.s32.totalorder %s131, %s134
    %p143 = scmp.eq.s32.totalorder %s16, 1
    %p144 = por %p142, %p143
    %p145 = scmp.ne.s32.totalorder %s134, %s135
    %p146 = scmp.eq.s32.totalorder %s16, 0
    %p147 = por %p145, %p146
    %p148 = scmp.ne.s32.totalorder %s134, %s135
    %p149 = scmp.eq.s32.totalorder %s17, 1
    %p150 = por %p148, %p149
    %p152 = scmp.ne.s32.totalorder %s135, %s151
    %p153 = scmp.eq.s32.totalorder %s17, 0
    %p154 = por %p152, %p153
    %p155 = scmp.le.s32.totalorder 1, %s11
    %p156 = scmp.lt.s32.totalorder %s11, 3
    %p157 = pnand %p155, %p156
    %p158 = pneg %p157
    // Predicated region
    $region9: #{gene_classification_forward.23} parent=5 // pred_check
      _
    $region10: #{gene_classification_forward.23} parent=5 // pred_check_branch
      %160 = sbr.rel (%p157) target = $region12
    $region11: #{gene_classification_forward.23} parent=5 // pred_region
      %s161 = ssub.s32 %s11, 1
      // Predicated region
      $region13: #{gene_classification_forward.23} parent=11 // pred_check
        %p162 = pneg %p58
      $region14: #{gene_classification_forward.23} parent=11 // pred_check_branch
        %164 = sbr.rel (%p162) target = $region16
      $region15: #{gene_classification_forward.23} parent=11 // pred_region
        _
      $region16: #{gene_classification_forward.23} parent=11 // pred_fallthru
        _
      // Predicated region
      $region17: #{gene_classification_forward.23} parent=11 // pred_check
        %p165 = pneg %p79
      $region18: #{gene_classification_forward.23} parent=11 // pred_check_branch
        %167 = sbr.rel (%p165) target = $region20
      $region19: #{gene_classification_forward.23} parent=11 // pred_region
        _
      $region20: #{gene_classification_forward.23} parent=11 // pred_fallthru
        _
      // Predicated region
      $region21: #{gene_classification_forward.23} parent=11 // pred_check
        %p168 = pneg %p100
      $region22: #{gene_classification_forward.23} parent=11 // pred_check_branch
        %170 = sbr.rel (%p168) target = $region24
      $region23: #{gene_classification_forward.23} parent=11 // pred_region
        _
      $region24: #{gene_classification_forward.23} parent=11 // pred_fallthru
        _
      // Predicated region
      $region25: #{gene_classification_forward.23} parent=11 // pred_check
        %p171 = pneg %p121
      $region26: #{gene_classification_forward.23} parent=11 // pred_check_branch
        %173 = sbr.rel (%p171) target = $region28
      $region27: #{gene_classification_forward.23} parent=11 // pred_region
        _
      $region28: #{gene_classification_forward.23} parent=11 // pred_fallthru
        _
    $region12: #{gene_classification_forward.23} parent=5 // pred_fallthru
      _
    %p174 = scmp.lt.s32.totalorder %s11, 2
    // Predicated region
    $region29: #{gene_classification_forward.23} parent=5 // pred_check
      %p175 = pneg %p174
    $region30: #{gene_classification_forward.23} parent=5 // pred_check_branch
      %177 = sbr.rel (%p175) target = $region32
    $region31: #{gene_classification_forward.23} parent=5 // pred_region
      // Predicated region
      $region33: #{gene_classification_forward.23} parent=31 // pred_check
        %p178 = pneg %p31
      $region34: #{gene_classification_forward.23} parent=31 // pred_check_branch
        %180 = sbr.rel (%p178) target = $region36
      $region35: #{gene_classification_forward.23} parent=31 // pred_region
        %p181 = scmp.lt.s32.totalorder %s11, 1
        %s182 = scalar_select %p181, %s11, 1
        %s183 = smul.addr %s182, 8
        %s184 = scalar_lea.vmem %s0, %s183
      $region36: #{gene_classification_forward.23} parent=31 // pred_fallthru
        _
    $region32: #{gene_classification_forward.23} parent=5 // pred_fallthru
      _
    %p185 = scmp.le.s32.totalorder 1, %s11
    %p186 = scmp.lt.s32.totalorder %s11, 3
    %p187 = pnand %p185, %p186
    %p188 = pneg %p187
    // Predicated region
    $region37: #{gene_classification_forward.23} parent=5 // pred_check
      _
    $region38: #{gene_classification_forward.23} parent=5 // pred_check_branch
      %190 = sbr.rel (%p187) target = $region40
    $region39: #{gene_classification_forward.23} parent=5 // pred_region
      %s191 = ssub.s32 %s11, 1
      %p192 = scmp.lt.s32.totalorder %s16, 1
      %s193 = scalar_select %p192, %s16, 1
      %s194 = smul.addr %s193, 8
      %s195 = scalar_lea.vmem %s0, %s194
      %p196 = pneg %p37
      %p197 = pneg %p34
      %p198 = pneg %p58
      %p199 = pneg %p55
      %p200 = pneg %p79
      %p201 = pneg %p76
      %p202 = pneg %p100
      %p203 = pneg %p97
      %p204 = pneg %p121
      %p205 = pneg %p118
      %p206 = pneg %p147
      %p207 = pneg %p144
      %p208 = scmp.lt.s32.totalorder %s16, 1
      %s209 = scalar_select %p208, %s16, 1
      %s210 = smul.addr %s209, 8
      %s211 = scalar_lea.vmem %s5, %s210
      %p212 = scmp.lt.s32.totalorder %s16, 1
      %s213 = scalar_select %p212, %s16, 1
      %s214 = smul.addr %s213, 8
      %s215 = scalar_lea.vmem %s0, %s214
      %p216 = scmp.lt.s32.totalorder %s16, 1
      %s217 = scalar_select %p216, %s16, 1
      %s218 = smul.addr %s217, 8
      %s219 = scalar_lea.vmem %s5, %s218
      %v221 = vld [vmem:[%s215] sm:$0xff]
      %v222 = vmul.f32 %v221, 0.5
      %v223 = vmul.f32 %v221, 0.044715
      %v224 = vmul.f32 %v223, %v221
      %v225 = vmul.f32 %v224, %v221
      %v226 = vadd.f32 %v221, %v225
      %v227 = vmul.f32 %v226, 0.7978846
      %v228 = vtanh.pop %v227
      %v229 = vadd.f32 %v228, 1.0
      %v230 = vmul.f32 %v222, %v229
      %v231 = vld [vmem:[%s1] sm:$0x1]
      %v232 = vld [vmem:[%s2] sm:$0x1]
      %vm233 = vcmask 261120
      %v234 = vsel %vm233, %v230, 0.0
      %235 = vadd.xlane.f32.xlu0 %v234
      %v236 = vpop.xlane.xlu0 %235
      %v237 = vrcp.pop 32.0
      %v238 = vmul.f32 %v236, %v237
      %v239 = vsub.f32 %v230, %v238
      %v240 = vmul.f32 %v239, %v239
      %v241 = vsel %vm233, %v240, 0.0
      %242 = vadd.xlane.f32.xlu0 %v241
      %v243 = vpop.xlane.xlu0 %242
      %v244 = vmul.f32 %v243, %v237
      %v245 = vadd.f32 %v244, 1e-12
      %v246 = vrsqrt.pop %v245
      %v247 = vmul.f32 %v239, %v246
      %v249 = vlaneseq
      %v250 = vshrl.u32 %v249, 7
      %v251 = vsub.s32 0, %v250
      %v252 = vrot.slane %v231, %v251
      %v254 = vmul.f32 %v247, %v252
      %v256 = vlaneseq
      %v257 = vshrl.u32 %v256, 7
      %v258 = vsub.s32 0, %v257
      %v259 = vrot.slane %v232, %v258
      %v261 = vadd.f32 %v254, %v259
      %v262 = vpack.c.bf16 %v261, %v261
      %v263 = vld [vmem:[%s3] sm:$0xf]
      %v264 = vld [vmem:[%s3 + $0x4] sm:$0xf]
      %v265 = vld [vmem:[%s3 + $0x8] sm:$0xf]
      %v266 = vld [vmem:[%s3 + $0xc] sm:$0xf]
      %v267 = vld [vmem:[%s4] sm:$0x1]
      %v269 = vlaneseq
      %v270 = vshrl.u32 %v269, 7
      %v271 = vsub.s32 0, %v270
      %v272 = vrot.slane %v267, %v271
      %v278 = vunpack.c.l.b16 %v263
      %v279 = vunpack.c.l.b16 %v264
      %v280 = vunpack.c.l.b16 %v265
      %v281 = vunpack.c.l.b16 %v266
      %v282 = vpack.c.b16 %v279, %v278
      %v283 = vpack.c.b16 %v281, %v280
      %v287 = vsel %vm233, %v262, 0
      %289 = vmatprep.subr.bf16.mxu0 0
      %290 = vmatpush1.bf16.msra.mxu0 %v282
      %291 = vmatprep.subr.bf16.mxu0 0
      %292 = vmatpush1.bf16.msra.mxu0 %v283
      %293 = vmatprep.subr.bf16.mxu0 0
      %294 = vmatpush1.bf16.msra.mxu0 0
      %295 = vmatprep.subr.bf16.mxu0 0
      %296 = vmatpush1.bf16.msra.mxu0 0
      %297 = vmatprep.subr.bf16.mxu0 0
      %298 = vmatpush1.bf16.msra.mxu0 0
      %299 = vmatprep.subr.bf16.mxu0 0
      %300 = vmatpush1.bf16.msra.mxu0 0
      %301 = vmatprep.subr.bf16.mxu0 0
      %302 = vmatpush1.bf16.msra.mxu0 0
      %303 = vmatprep.subr.bf16.mxu0 0
      %304 = vmatpush1.bf16.msra.mxu0 0
      %305 = vmatprep.subr.bf16.mxu0 0
      %306 = vmatpush1.bf16.msra.mxu0 0
      %307 = vmatprep.subr.bf16.mxu0 0
      %308 = vmatpush1.bf16.msra.mxu0 0
      %309 = vmatprep.subr.bf16.mxu0 0
      %310 = vmatpush1.bf16.msra.mxu0 0
      %311 = vmatprep.subr.bf16.mxu0 0
      %312 = vmatpush1.bf16.msra.mxu0 0
      %313 = vmatprep.subr.bf16.mxu0 0
      %314 = vmatpush1.bf16.msra.mxu0 0
      %315 = vmatprep.subr.bf16.mxu0 0
      %316 = vmatpush1.bf16.msra.mxu0 0
      %317 = vmatprep.subr.bf16.mxu0 0
      %318 = vmatpush1.bf16.msra.mxu0 0
      %319 = vmatprep.subr.bf16.mxu0 0
      %320 = vmatpush1.bf16.msra.mxu0 0
      %321 = vmatprep.mubr.bf16.mxu0 0
      %322 = vmatmul.mubr.bf16.gmra.mrb[0].mxu0 %v287
      %v323 = vpop.f32.mrb[0].mxu0
      %v324 = vadd.f32 %v272, %v323
      %v325 = vpop.f32.mrb[0].mxu0
      %v326 = vpop.f32.mrb[0].mxu0
      %v327 = vpop.f32.mrb[0].mxu0
      %328 = vdwg.mxu0
      %329 = vst [vmem:[%s219] sm:$0xff] %v324
      %p330 = scmp.lt.s32.totalorder %s16, 1
      %s331 = scalar_select %p330, %s16, 1
      %s332 = smul.addr %s331, 8
      %s333 = scalar_lea.vmem %s5, %s332
      // Predicated region
      $region41: #{gene_classification_forward.23} parent=39 // pred_check
        %p334 = pneg %p144
      $region42: #{gene_classification_forward.23} parent=39 // pred_check_branch
        %336 = sbr.rel (%p334) target = $region44
      $region43: #{gene_classification_forward.23} parent=39 // pred_region
        _
      $region44: #{gene_classification_forward.23} parent=39 // pred_fallthru
        _
    $region40: #{gene_classification_forward.23} parent=5 // pred_fallthru
      _
    %p337 = scmp.le.s32.totalorder 2, %s11
    // Predicated region
    $region45: #{gene_classification_forward.23} parent=5 // pred_check
      %p338 = pneg %p337
    $region46: #{gene_classification_forward.23} parent=5 // pred_check_branch
      %340 = sbr.rel (%p338) target = $region48
    $region47: #{gene_classification_forward.23} parent=5 // pred_region
      %s341 = ssub.s32 %s11, 2
      // Predicated region
      $region49: #{gene_classification_forward.23} parent=47 // pred_check
        %p342 = pneg %p150
      $region50: #{gene_classification_forward.23} parent=47 // pred_check_branch
        %344 = sbr.rel (%p342) target = $region52
      $region51: #{gene_classification_forward.23} parent=47 // pred_region
        %p345 = scmp.lt.s32.totalorder %s17, 1
        %s346 = scalar_select %p345, %s17, 1
        %s347 = smul.addr %s346, 8
        %s348 = scalar_lea.vmem %s5, %s347
      $region52: #{gene_classification_forward.23} parent=47 // pred_fallthru
        _
    $region48: #{gene_classification_forward.23} parent=5 // pred_fallthru
      _
  $region6: #{gene_classification_forward.23} parent=0 // loop_footer
    %s15 = sadd.s32 1, %s11
  $region7: #{gene_classification_forward.23} parent=0 // loop_footer_branch
    %10 = sbr.rel target = $region3
  $region8: #{gene_classification_forward.23} parent=0 // loop_exit
    _

</llo_original>
